<compile_context>
chip_gen: v5e
topology: v5e:2x2
jax: 0.10.0
libtpu: 0.0.40
codegen_flags: <defaults>
</compile_context>

<pallas_src>
import functools

import jax
import jax.numpy as jnp
from jax.experimental import pallas as pl
from jax.experimental.pallas import tpu as pltpu

C_IN = 40          # real input channels
C_IN_PAD = 48      # zero-padded so the conv1 contraction dim is tile-aligned
C_HID = 128
K1 = 15
PAD1 = 7
K2 = 5
DIL2 = 2
PAD2 = 4
N_OUT = 3
LANE = 128         # lane-dense width of the final output block
HALO2 = 16         # bf16 sublane-tile aligned halo for the conv2 scratch (>= PAD2)
B_TILE = 8         # samples per grid step (output sublane tile)
LP_ALIGN = 16      # time axis rounded to the bf16 sublane tile


def _round_up(x, m):
    return ((x + m - 1) // m) * m


def _tree_sum(terms):
    terms = list(terms)
    while len(terms) > 1:
        nxt = [terms[i] + terms[i + 1] for i in range(0, len(terms) - 1, 2)]
        if len(terms) % 2:
            nxt.append(terms[-1])
        terms = nxt
    return terms[0]


def net_kernel(x_ref, w1_ref, w2_ref, wf_ref, bf_ref, out_ref, h1p_ref,
               *, l_valid, lp, l_ext, b_tile):
    # x_ref:   (B_TILE, Lp+16, 48)    time/channel zero-padded input, bf16
    # w1_ref:  (48, 15*128)           conv1 weight, taps folded along N, bf16
    # w2_ref:  (128, 5*128)           conv2 weight, taps folded along N, bf16
    # wf_ref:  (128, 128)             folded fc2(fc1(.)) weight, lane padded, f32
    # bf_ref:  (1, 128)               folded bias, lane padded, f32
    # out_ref: (B_TILE, 128)          lane-dense output block, f32
    # h1p_ref: (B_TILE, Lp+32, 128)   bf16 zero-halo scratch for conv2
    need_mask = l_valid < lp
    if need_mask:
        rows = jax.lax.broadcasted_iota(jnp.int32, (b_tile, lp, 1), 1)
        valid = rows < l_valid

    # ---- Conv1d(40->128, k=15, pad=7): one MXU matmul with the taps folded
    # into the output dim, then 15 lane-aligned shift-adds.
    #   z1[b, s, k*128 + o] = sum_c x_pad[b, s, c] * w1[o, c, k]
    #   h1[b, t, o]         = sum_k z1[b, t + k, k*128 + o]
    x_flat = x_ref[...].reshape(b_tile * l_ext, C_IN_PAD)
    z1 = jnp.dot(x_flat, w1_ref[...], preferred_element_type=jnp.float32)
    z1 = z1.reshape(b_tile, l_ext, K1 * C_HID)
    h1 = _tree_sum(z1[:, k:k + lp, k * C_HID:(k + 1) * C_HID]
                   for k in range(K1))
    h1 = jnp.maximum(h1, 0.0)
    if need_mask:
        # Rows past the true length exist only for sublane alignment; zero
        # them so conv2 / max-pool see PyTorch-style zero padding.
        h1 = jnp.where(valid, h1, 0.0)

    # ---- Conv1d(128->128, k=5, dilation=2, pad=4): zero-halo scratch + the
    # same output-dim tap folding (no lane concatenation).
    zero_halo = jnp.zeros((b_tile, HALO2, C_HID), h1p_ref.dtype)
    h1p_ref[:, :HALO2, :] = zero_halo
    h1p_ref[:, HALO2 + lp:, :] = zero_halo
    h1p_ref[:, HALO2:HALO2 + lp, :] = h1.astype(h1p_ref.dtype)

    lh = lp + 2 * HALO2
    hp_flat = h1p_ref[...].reshape(b_tile * lh, C_HID)
    z2 = jnp.dot(hp_flat, w2_ref[...], preferred_element_type=jnp.float32)
    z2 = z2.reshape(b_tile, lh, K2 * C_HID)
    base = HALO2 - PAD2
    h2 = _tree_sum(
        z2[:, base + DIL2 * k: base + DIL2 * k + lp, k * C_HID:(k + 1) * C_HID]
        for k in range(K2))
    h2 = jnp.maximum(h2, 0.0)
    if need_mask:
        h2 = jnp.where(valid, h2, 0.0)   # safe: post-ReLU values are >= 0

    # ---- AdaptiveMaxPool1d(1); Dropout(p=0.2) is identity in eval ----
    pooled = jnp.max(h2, axis=1)                          # (B_TILE, 128) f32

    # ---- Linear(128,128) o Linear(128,3) folded into one affine map ----
    out = jnp.dot(pooled, wf_ref[...],
                  preferred_element_type=jnp.float32) + bf_ref[...]
    out_ref[...] = out.astype(out_ref.dtype)


def net_forward(x_ncl, params):
    """x_ncl: (N, 40, L) float32, PyTorch NCL layout."""
    w1, w2, lw1, lb1, lw2, lb2 = params
    n, c_in, length = x_ncl.shape
    assert c_in == C_IN
    lp = _round_up(length, LP_ALIGN)          # aligned time extent of conv outputs
    l_ext = lp + 16                           # 7 left zeros + right zeros/halo
    n_pad = _round_up(n, B_TILE)
    n_blocks = n_pad // B_TILE

    # -------- wrapper-side layout glue (cheap: no im2col, ~1x input bytes) ----
    x_ntc = jnp.transpose(x_ncl, (0, 2, 1)).astype(jnp.bfloat16)     # (N, L, 40)
    x_p = jnp.pad(
        x_ntc,
        ((0, n_pad - n),
         (PAD1, l_ext - PAD1 - length),
         (0, C_IN_PAD - C_IN)))                                      # (Np, Lp+16, 48)

    # Conv weights with the taps folded along the output dim:
    #   w_cat[c, k*128 + o] = w[o, c, k]
    w1_fold = jnp.transpose(w1, (1, 2, 0)).reshape(C_IN, K1 * C_HID)
    w1_cat = jnp.zeros((C_IN_PAD, K1 * C_HID), jnp.float32)
    w1_cat = w1_cat.at[:C_IN].set(w1_fold).astype(jnp.bfloat16)      # (48, 1920)
    w2_cat = jnp.transpose(w2, (1, 2, 0)).reshape(C_HID, K2 * C_HID)
    w2_cat = w2_cat.astype(jnp.bfloat16)                             # (128, 640)

    # fc2(fc1(x)) = x @ (lw1.T @ lw2.T) + (lb1 @ lw2.T + lb2) — exact fold.
    wf = lw1.T @ lw2.T                                               # (128, 3)
    wf_pad = jnp.zeros((C_HID, LANE), jnp.float32).at[:, :N_OUT].set(wf)
    bf = lb1 @ lw2.T + lb2                                           # (3,)
    bf_pad = jnp.zeros((1, LANE), jnp.float32).at[0, :N_OUT].set(bf)

    kernel = functools.partial(net_kernel, l_valid=length, lp=lp,
                               l_ext=l_ext, b_tile=B_TILE)

    lh = lp + 2 * HALO2
    flops = 2 * n_pad * (l_ext * C_IN_PAD * K1 * C_HID
                         + lh * C_HID * K2 * C_HID
                         + C_HID * LANE)
    bytes_accessed = int(x_p.size * 2 + w1_cat.size * 2 + w2_cat.size * 2
                         + wf_pad.size * 4 + bf_pad.size * 4
                         + n_pad * LANE * 4)

    grid_spec = pltpu.PrefetchScalarGridSpec(
        num_scalar_prefetch=0,
        grid=(n_blocks,),
        in_specs=[
            pl.BlockSpec((B_TILE, l_ext, C_IN_PAD), lambda b: (b, 0, 0)),
            pl.BlockSpec((C_IN_PAD, K1 * C_HID), lambda b: (0, 0)),
            pl.BlockSpec((C_HID, K2 * C_HID), lambda b: (0, 0)),
            pl.BlockSpec((C_HID, LANE), lambda b: (0, 0)),
            pl.BlockSpec((1, LANE), lambda b: (0, 0)),
        ],
        out_specs=pl.BlockSpec((B_TILE, LANE), lambda b: (b, 0)),
        scratch_shapes=[pltpu.VMEM((B_TILE, lh, C_HID), jnp.bfloat16)],
    )

    out_padded = pl.pallas_call(
        kernel,
        out_shape=jax.ShapeDtypeStruct((n_pad, LANE), jnp.float32),
        grid_spec=grid_spec,
        compiler_params=pltpu.CompilerParams(
            # NOTE(v7x): with >=2 batch blocks this axis splits across both
            # TensorCores; each step is self-contained (halos re-zeroed).
            dimension_semantics=("parallel",),
            vmem_limit_bytes=48 * 1024 * 1024),
        cost_estimate=pl.CostEstimate(
            flops=flops, transcendentals=0, bytes_accessed=bytes_accessed),
    )(x_p, w1_cat, w2_cat, wf_pad, bf_pad)

    return out_padded[:n, :N_OUT]


def reference(x_ncl, params):
    w1, w2, lw1, lb1, lw2, lb2 = params
    h = jax.lax.conv_general_dilated(
        x_ncl, w1, window_strides=(1,), padding=[(PAD1, PAD1)],
        dimension_numbers=('NCH', 'OIH', 'NCH'))
    h = jnp.maximum(h, 0.0)
    h = jax.lax.conv_general_dilated(
        h, w2, window_strides=(1,), padding=[(PAD2, PAD2)],
        rhs_dilation=(DIL2,), dimension_numbers=('NCH', 'OIH', 'NCH'))
    h = jnp.maximum(h, 0.0)
    h = jnp.max(h, axis=-1)                 # (N, 128)
    h = h @ lw1.T + lb1
    h = h @ lw2.T + lb2
    return h


def make_params(key):
    ks = jax.random.split(key, 6)
    w1 = jax.random.normal(ks[0], (C_HID, C_IN, K1), jnp.float32) * 0.05
    w2 = jax.random.normal(ks[1], (C_HID, C_HID, K2), jnp.float32) * 0.05
    lw1 = jax.random.normal(ks[2], (C_HID, C_HID), jnp.float32) * 0.05
    lb1 = jax.random.normal(ks[3], (C_HID,), jnp.float32) * 0.05
    lw2 = jax.random.normal(ks[4], (N_OUT, C_HID), jnp.float32) * 0.05
    lb2 = jax.random.normal(ks[5], (N_OUT,), jnp.float32) * 0.05
    return (w1, w2, lw1, lb1, lw2, lb2)


if __name__ == "__main__":
    key = jax.random.PRNGKey(0)
    pkey, xkey = jax.random.split(key)
    params = make_params(pkey)

    batch, seq = 2, 16
    x = jax.random.normal(xkey, (batch, C_IN, seq), jnp.float32)  # NCL

    out = jax.jit(net_forward)(x, params)
    jax.block_until_ready(out)

    ref = reference(x, params)
    assert out.shape == (batch, N_OUT)
    # bf16 matmul operands with f32 accumulation: tolerance loosened vs f32.
    assert jnp.allclose(out, ref, atol=5e-2, rtol=5e-2), (out, ref)
    print("KERNEL_OK")
</pallas_src>

<mosaic_0001>
module attributes {stable_mosaic.version = 11 : i64} {
  func.func @net_kernel(%arg0: i32, %arg1: memref<8x32x48xbf16, #tpu.memory_space<vmem>>, %arg2: memref<48x1920xbf16, #tpu.memory_space<vmem>>, %arg3: memref<128x640xbf16, #tpu.memory_space<vmem>>, %arg4: memref<128x128xf32, #tpu.memory_space<vmem>>, %arg5: memref<1x128xf32, #tpu.memory_space<vmem>>, %arg6: memref<8x128xf32, #tpu.memory_space<vmem>>, %arg7: memref<8x48x128xbf16, #tpu.memory_space<vmem>>) attributes {dimension_semantics = [#tpu.dimension_semantics<parallel>], iteration_bounds = array<i64: 1>, scalar_prefetch = 0 : i64, scratch_operands = 1 : i64, tpu.core_type = #tpu.core_type<tc>, window_params = [{transform_indices = @transform_0, window_bounds = array<i64: 8, 32, 48>}, {pipeline_mode = #tpu.pipeline_mode<synchronous>, transform_indices = @transform_1, window_bounds = array<i64: 48, 1920>}, {pipeline_mode = #tpu.pipeline_mode<synchronous>, transform_indices = @transform_2, window_bounds = array<i64: 128, 640>}, {pipeline_mode = #tpu.pipeline_mode<synchronous>, transform_indices = @transform_3, window_bounds = array<i64: 128, 128>}, {pipeline_mode = #tpu.pipeline_mode<synchronous>, transform_indices = @transform_4, window_bounds = array<i64: 1, 128>}, {transform_indices = @transform_5, window_bounds = array<i64: 8, 128>}]} {
    %c0 = arith.constant 0 : index
    %c0_0 = arith.constant 0 : index
    %c0_1 = arith.constant 0 : index
    %0 = vector.load %arg1[%c0, %c0_0, %c0_1] : memref<8x32x48xbf16, #tpu.memory_space<vmem>>, vector<8x32x48xbf16>
    %1 = vector.shape_cast %0 : vector<8x32x48xbf16> to vector<256x48xbf16>
    %c0_2 = arith.constant 0 : index
    %c0_3 = arith.constant 0 : index
    %2 = vector.load %arg2[%c0_2, %c0_3] : memref<48x1920xbf16, #tpu.memory_space<vmem>>, vector<48x1920xbf16>
    %cst = arith.constant dense<0.000000e+00> : vector<256x1920xf32>
    %3 = tpu.matmul %1, %2, %cst {dimension_numbers = #tpu.dot_dimension_numbers<[1], [0], [0], [1], [0, 0, 1, 1], [], []>} : vector<256x48xbf16>, vector<48x1920xbf16>, vector<256x1920xf32> -> vector<256x1920xf32>
    %4 = vector.shape_cast %3 : vector<256x1920xf32> to vector<8x32x1920xf32>
    %5 = vector.extract_strided_slice %4 {offsets = [0, 0, 0], sizes = [8, 16, 128], strides = [1, 1, 1]} : vector<8x32x1920xf32> to vector<8x16x128xf32>
    %6 = vector.extract_strided_slice %4 {offsets = [0, 1, 128], sizes = [8, 16, 128], strides = [1, 1, 1]} : vector<8x32x1920xf32> to vector<8x16x128xf32>
    %7 = vector.extract_strided_slice %4 {offsets = [0, 2, 256], sizes = [8, 16, 128], strides = [1, 1, 1]} : vector<8x32x1920xf32> to vector<8x16x128xf32>
    %8 = vector.extract_strided_slice %4 {offsets = [0, 3, 384], sizes = [8, 16, 128], strides = [1, 1, 1]} : vector<8x32x1920xf32> to vector<8x16x128xf32>
    %9 = vector.extract_strided_slice %4 {offsets = [0, 4, 512], sizes = [8, 16, 128], strides = [1, 1, 1]} : vector<8x32x1920xf32> to vector<8x16x128xf32>
    %10 = vector.extract_strided_slice %4 {offsets = [0, 5, 640], sizes = [8, 16, 128], strides = [1, 1, 1]} : vector<8x32x1920xf32> to vector<8x16x128xf32>
    %11 = vector.extract_strided_slice %4 {offsets = [0, 6, 768], sizes = [8, 16, 128], strides = [1, 1, 1]} : vector<8x32x1920xf32> to vector<8x16x128xf32>
    %12 = vector.extract_strided_slice %4 {offsets = [0, 7, 896], sizes = [8, 16, 128], strides = [1, 1, 1]} : vector<8x32x1920xf32> to vector<8x16x128xf32>
    %13 = vector.extract_strided_slice %4 {offsets = [0, 8, 1024], sizes = [8, 16, 128], strides = [1, 1, 1]} : vector<8x32x1920xf32> to vector<8x16x128xf32>
    %14 = vector.extract_strided_slice %4 {offsets = [0, 9, 1152], sizes = [8, 16, 128], strides = [1, 1, 1]} : vector<8x32x1920xf32> to vector<8x16x128xf32>
    %15 = vector.extract_strided_slice %4 {offsets = [0, 10, 1280], sizes = [8, 16, 128], strides = [1, 1, 1]} : vector<8x32x1920xf32> to vector<8x16x128xf32>
    %16 = vector.extract_strided_slice %4 {offsets = [0, 11, 1408], sizes = [8, 16, 128], strides = [1, 1, 1]} : vector<8x32x1920xf32> to vector<8x16x128xf32>
    %17 = vector.extract_strided_slice %4 {offsets = [0, 12, 1536], sizes = [8, 16, 128], strides = [1, 1, 1]} : vector<8x32x1920xf32> to vector<8x16x128xf32>
    %18 = vector.extract_strided_slice %4 {offsets = [0, 13, 1664], sizes = [8, 16, 128], strides = [1, 1, 1]} : vector<8x32x1920xf32> to vector<8x16x128xf32>
    %19 = vector.extract_strided_slice %4 {offsets = [0, 14, 1792], sizes = [8, 16, 128], strides = [1, 1, 1]} : vector<8x32x1920xf32> to vector<8x16x128xf32>
    %20 = arith.addf %5, %6 : vector<8x16x128xf32>
    %21 = arith.addf %7, %8 : vector<8x16x128xf32>
    %22 = arith.addf %9, %10 : vector<8x16x128xf32>
    %23 = arith.addf %11, %12 : vector<8x16x128xf32>
    %24 = arith.addf %13, %14 : vector<8x16x128xf32>
    %25 = arith.addf %15, %16 : vector<8x16x128xf32>
    %26 = arith.addf %17, %18 : vector<8x16x128xf32>
    %27 = arith.addf %20, %21 : vector<8x16x128xf32>
    %28 = arith.addf %22, %23 : vector<8x16x128xf32>
    %29 = arith.addf %24, %25 : vector<8x16x128xf32>
    %30 = arith.addf %26, %19 : vector<8x16x128xf32>
    %31 = arith.addf %27, %28 : vector<8x16x128xf32>
    %32 = arith.addf %29, %30 : vector<8x16x128xf32>
    %33 = arith.addf %31, %32 : vector<8x16x128xf32>
    %cst_4 = arith.constant 0.000000e+00 : f32
    %34 = vector.broadcast %cst_4 : f32 to vector<8x16x128xf32>
    %35 = arith.maximumf %33, %34 : vector<8x16x128xf32>
    %cst_5 = arith.constant 0.000000e+00 : bf16
    %36 = vector.broadcast %cst_5 : bf16 to vector<8x16x128xbf16>
    %c0_6 = arith.constant 0 : index
    %c0_7 = arith.constant 0 : index
    %c0_8 = arith.constant 0 : index
    %37 = vector.load %arg7[%c0_6, %c0_7, %c0_8] : memref<8x48x128xbf16, #tpu.memory_space<vmem>>, vector<8x16x128xbf16>
    tpu.vector_store %arg7[%c0_6, %c0_7, %c0_8], %36 {strides = array<i32>} : memref<8x48x128xbf16, #tpu.memory_space<vmem>>, vector<8x16x128xbf16>,
    %c0_9 = arith.constant 0 : index
    %c32 = arith.constant 32 : index
    %c0_10 = arith.constant 0 : index
    %38 = vector.load %arg7[%c0_9, %c32, %c0_10] : memref<8x48x128xbf16, #tpu.memory_space<vmem>>, vector<8x16x128xbf16>
    tpu.vector_store %arg7[%c0_9, %c32, %c0_10], %36 {strides = array<i32>} : memref<8x48x128xbf16, #tpu.memory_space<vmem>>, vector<8x16x128xbf16>,
    %39 = arith.truncf %35 : vector<8x16x128xf32> to vector<8x16x128xbf16>
    %c0_11 = arith.constant 0 : index
    %c16 = arith.constant 16 : index
    %c0_12 = arith.constant 0 : index
    %40 = vector.load %arg7[%c0_11, %c16, %c0_12] : memref<8x48x128xbf16, #tpu.memory_space<vmem>>, vector<8x16x128xbf16>
    tpu.vector_store %arg7[%c0_11, %c16, %c0_12], %39 {strides = array<i32>} : memref<8x48x128xbf16, #tpu.memory_space<vmem>>, vector<8x16x128xbf16>,
    %c0_13 = arith.constant 0 : index
    %c0_14 = arith.constant 0 : index
    %c0_15 = arith.constant 0 : index
    %41 = vector.load %arg7[%c0_13, %c0_14, %c0_15] : memref<8x48x128xbf16, #tpu.memory_space<vmem>>, vector<8x48x128xbf16>
    %42 = vector.shape_cast %41 : vector<8x48x128xbf16> to vector<384x128xbf16>
    %c0_16 = arith.constant 0 : index
    %c0_17 = arith.constant 0 : index
    %43 = vector.load %arg3[%c0_16, %c0_17] : memref<128x640xbf16, #tpu.memory_space<vmem>>, vector<128x640xbf16>
    %cst_18 = arith.constant dense<0.000000e+00> : vector<384x640xf32>
    %44 = tpu.matmul %42, %43, %cst_18 {dimension_numbers = #tpu.dot_dimension_numbers<[1], [0], [0], [1], [0, 0, 1, 1], [], []>} : vector<384x128xbf16>, vector<128x640xbf16>, vector<384x640xf32> -> vector<384x640xf32>
    %45 = vector.shape_cast %44 : vector<384x640xf32> to vector<8x48x640xf32>
    %46 = vector.extract_strided_slice %45 {offsets = [0, 12, 0], sizes = [8, 16, 128], strides = [1, 1, 1]} : vector<8x48x640xf32> to vector<8x16x128xf32>
    %47 = vector.extract_strided_slice %45 {offsets = [0, 14, 128], sizes = [8, 16, 128], strides = [1, 1, 1]} : vector<8x48x640xf32> to vector<8x16x128xf32>
    %48 = vector.extract_strided_slice %45 {offsets = [0, 16, 256], sizes = [8, 16, 128], strides = [1, 1, 1]} : vector<8x48x640xf32> to vector<8x16x128xf32>
    %49 = vector.extract_strided_slice %45 {offsets = [0, 18, 384], sizes = [8, 16, 128], strides = [1, 1, 1]} : vector<8x48x640xf32> to vector<8x16x128xf32>
    %50 = vector.extract_strided_slice %45 {offsets = [0, 20, 512], sizes = [8, 16, 128], strides = [1, 1, 1]} : vector<8x48x640xf32> to vector<8x16x128xf32>
    %51 = arith.addf %46, %47 : vector<8x16x128xf32>
    %52 = arith.addf %48, %49 : vector<8x16x128xf32>
    %53 = arith.addf %51, %52 : vector<8x16x128xf32>
    %54 = arith.addf %53, %50 : vector<8x16x128xf32>
    %cst_19 = arith.constant 0.000000e+00 : f32
    %55 = vector.broadcast %cst_19 : f32 to vector<8x16x128xf32>
    %56 = arith.maximumf %54, %55 : vector<8x16x128xf32>
    %cst_20 = arith.constant dense<0xFF800000> : vector<8x128xf32>
    %57 = vector.multi_reduction <maximumf>, %56, %cst_20 [1] : vector<8x16x128xf32> to vector<8x128xf32>
    %c0_21 = arith.constant 0 : index
    %c0_22 = arith.constant 0 : index
    %58 = vector.load %arg4[%c0_21, %c0_22] : memref<128x128xf32, #tpu.memory_space<vmem>>, vector<128x128xf32>
    %cst_23 = arith.constant dense<0.000000e+00> : vector<8x128xf32>
    %59 = tpu.matmul %57, %58, %cst_23 {dimension_numbers = #tpu.dot_dimension_numbers<[1], [0], [0], [1], [0, 0, 1, 1], [], []>} : vector<8x128xf32>, vector<128x128xf32>, vector<8x128xf32> -> vector<8x128xf32>
    %c0_24 = arith.constant 0 : index
    %c0_25 = arith.constant 0 : index
    %60 = vector.load %arg5[%c0_24, %c0_25] : memref<1x128xf32, #tpu.memory_space<vmem>>, vector<1x128xf32>
    %61 = vector.broadcast %60 : vector<1x128xf32> to vector<8x128xf32>
    %62 = arith.addf %59, %61 : vector<8x128xf32>
    %c0_26 = arith.constant 0 : index
    %c0_27 = arith.constant 0 : index
    %63 = vector.load %arg6[%c0_26, %c0_27] : memref<8x128xf32, #tpu.memory_space<vmem>>, vector<8x128xf32>
    tpu.vector_store %arg6[%c0_26, %c0_27], %62 {strides = array<i32>} : memref<8x128xf32, #tpu.memory_space<vmem>>, vector<8x128xf32>,
    return
  }
  func.func @transform_0(%arg0: i32) -> (i32, i32, i32) {
    %c0_i32 = arith.constant 0 : i32
    %c0_i32_0 = arith.constant 0 : i32
    %c0_i32_1 = arith.constant 0 : i32
    return %arg0, %c0_i32, %c0_i32_0 : i32, i32, i32
  }
  func.func @transform_1(%arg0: i32) -> (i32, i32) {
    %c0_i32 = arith.constant 0 : i32
    %c0_i32_0 = arith.constant 0 : i32
    %c0_i32_1 = arith.constant 0 : i32
    return %c0_i32, %c0_i32_0 : i32, i32
  }
  func.func @transform_2(%arg0: i32) -> (i32, i32) {
    %c0_i32 = arith.constant 0 : i32
    %c0_i32_0 = arith.constant 0 : i32
    %c0_i32_1 = arith.constant 0 : i32
    return %c0_i32, %c0_i32_0 : i32, i32
  }
  func.func @transform_3(%arg0: i32) -> (i32, i32) {
    %c0_i32 = arith.constant 0 : i32
    %c0_i32_0 = arith.constant 0 : i32
    %c0_i32_1 = arith.constant 0 : i32
    return %c0_i32, %c0_i32_0 : i32, i32
  }
  func.func @transform_4(%arg0: i32) -> (i32, i32) {
    %c0_i32 = arith.constant 0 : i32
    %c0_i32_0 = arith.constant 0 : i32
    %c0_i32_1 = arith.constant 0 : i32
    return %c0_i32, %c0_i32_0 : i32, i32
  }
  func.func @transform_5(%arg0: i32) -> (i32, i32) {
    %c0_i32 = arith.constant 0 : i32
    %c0_i32_0 = arith.constant 0 : i32
    return %arg0, %c0_i32 : i32, i32
  }
}

</mosaic_0001>

<llo_original>
// kernel: net_forward.1
$region0: #{net_forward.1}
  #allocation0 [shape = 'u32[]', space=smem, size = 0x4, offset = 0x4, fixed_abs, tag = 'smem constant byte address 0x4 - core index']
  #allocation1 [shape = 'u32[72,128]{1,0:T(1,128)}', space=vmem, size = 0x9000, scoped, tag = 'internal scratch']
  #allocation2 [shape = 'bf16[8,48,128]{2,1,0:T(8,128)(2,1)}', space=vmem, size = 0x18000, scoped, tag = 'scratch operand']
  %s0 = inlined_call_operand.vmem [shape: bf16[8,32,48], index: 0, kind: input, shape index: {}]
  %s1 = inlined_call_operand.vmem [shape: bf16[48,1920], index: 1, kind: input, shape index: {}]
  %s2 = inlined_call_operand.vmem [shape: bf16[128,640], index: 2, kind: input, shape index: {}]
  %s3 = inlined_call_operand.vmem [shape: f32[128,128], index: 3, kind: input, shape index: {}]
  %s4 = inlined_call_operand.vmem [shape: f32[1,128], index: 4, kind: input, shape index: {}]
  %s5 = inlined_call_operand.vmem [shape: f32[8,128], index: 5, kind: output, shape index: {}]
  %s6 = sld [smem:[#allocation0]]
  $region30: #{net_forward.1} parent=0
    _
  %s8 = ssub.s32 1, %s6
  %s9 = scalar_select 0, %s8, %s6
  // Predicated region
  $region2: #{net_forward.1} parent=0 // pred_check
    _
  $region3: #{net_forward.1} parent=0 // pred_check_branch
    %11 = sbr.rel (0) target = $region5
  $region4: #{net_forward.1} parent=0 // pred_region
    _
  $region5: #{net_forward.1} parent=0 // pred_fallthru
    _
  // Predicated region
  $region6: #{net_forward.1} parent=0 // pred_check
    _
  $region7: #{net_forward.1} parent=0 // pred_check_branch
    %13 = sbr.rel (0) target = $region9
  $region8: #{net_forward.1} parent=0 // pred_region
    _
  $region9: #{net_forward.1} parent=0 // pred_fallthru
    _
  // Predicated region
  $region10: #{net_forward.1} parent=0 // pred_check
    _
  $region11: #{net_forward.1} parent=0 // pred_check_branch
    %15 = sbr.rel (0) target = $region13
  $region12: #{net_forward.1} parent=0 // pred_region
    _
  $region13: #{net_forward.1} parent=0 // pred_fallthru
    _
  // Predicated region
  $region14: #{net_forward.1} parent=0 // pred_check
    _
  $region15: #{net_forward.1} parent=0 // pred_check_branch
    %17 = sbr.rel (0) target = $region17
  $region16: #{net_forward.1} parent=0 // pred_region
    _
  $region17: #{net_forward.1} parent=0 // pred_fallthru
    _
  // Predicated region
  $region18: #{net_forward.1} parent=0 // pred_check
    _
  $region19: #{net_forward.1} parent=0 // pred_check_branch
    %19 = sbr.rel (0) target = $region21
  $region20: #{net_forward.1} parent=0 // pred_region
    _
  $region21: #{net_forward.1} parent=0 // pred_fallthru
    _
  %v21 = vld [vmem:[%s0] sm:$0xf]
  %v22 = vld [vmem:[%s0 + $0x4] sm:$0xf]
  %v23 = vld [vmem:[%s0 + $0x8] sm:$0xf]
  %v24 = vld [vmem:[%s0 + $0xc] sm:$0xf]
  %v25 = vld [vmem:[%s0 + $0x10] sm:$0xf]
  %v26 = vld [vmem:[%s0 + $0x14] sm:$0xf]
  %v27 = vld [vmem:[%s0 + $0x18] sm:$0xf]
  %v28 = vld [vmem:[%s0 + $0x1c] sm:$0xf]
  %v29 = vld [vmem:[%s0 + $0x20] sm:$0xf]
  %v30 = vld [vmem:[%s0 + $0x24] sm:$0xf]
  %v31 = vld [vmem:[%s0 + $0x28] sm:$0xf]
  %v32 = vld [vmem:[%s0 + $0x2c] sm:$0xf]
  %v33 = vld [vmem:[%s0 + $0x30] sm:$0xf]
  %v34 = vld [vmem:[%s0 + $0x34] sm:$0xf]
  %v35 = vld [vmem:[%s0 + $0x38] sm:$0xf]
  %v36 = vld [vmem:[%s0 + $0x3c] sm:$0xf]
  %v37 = vld [vmem:[%s0 + $0x40] sm:$0xf]
  %v38 = vld [vmem:[%s0 + $0x44] sm:$0xf]
  %v39 = vld [vmem:[%s0 + $0x48] sm:$0xf]
  %v40 = vld [vmem:[%s0 + $0x4c] sm:$0xf]
  %v41 = vld [vmem:[%s0 + $0x50] sm:$0xf]
  %v42 = vld [vmem:[%s0 + $0x54] sm:$0xf]
  %v43 = vld [vmem:[%s0 + $0x58] sm:$0xf]
  %v44 = vld [vmem:[%s0 + $0x5c] sm:$0xf]
  %v45 = vld [vmem:[%s0 + $0x60] sm:$0xf]
  %v46 = vld [vmem:[%s0 + $0x64] sm:$0xf]
  %v47 = vld [vmem:[%s0 + $0x68] sm:$0xf]
  %v48 = vld [vmem:[%s0 + $0x6c] sm:$0xf]
  %v49 = vld [vmem:[%s0 + $0x70] sm:$0xf]
  %v50 = vld [vmem:[%s0 + $0x74] sm:$0xf]
  %v51 = vld [vmem:[%s0 + $0x78] sm:$0xf]
  %v52 = vld [vmem:[%s0 + $0x7c] sm:$0xf]
  %v53 = vld [vmem:[%s1] sm:$0xff]
  %v54 = vld [vmem:[%s1 + $0x8] sm:$0xff]
  %v55 = vld [vmem:[%s1 + $0x10] sm:$0xff]
  %v56 = vld [vmem:[%s1 + $0x18] sm:$0xff]
  %v57 = vld [vmem:[%s1 + $0x20] sm:$0xff]
  %v58 = vld [vmem:[%s1 + $0x28] sm:$0xff]
  %v59 = vld [vmem:[%s1 + $0x30] sm:$0xff]
  %v60 = vld [vmem:[%s1 + $0x38] sm:$0xf]
  %v61 = vld [vmem:[%s1 + $0x3c] sm:$0xff]
  %v62 = vld [vmem:[%s1 + $0x44] sm:$0xff]
  %v63 = vld [vmem:[%s1 + $0x4c] sm:$0xff]
  %v64 = vld [vmem:[%s1 + $0x54] sm:$0xff]
  %v65 = vld [vmem:[%s1 + $0x5c] sm:$0xff]
  %v66 = vld [vmem:[%s1 + $0x64] sm:$0xff]
  %v67 = vld [vmem:[%s1 + $0x6c] sm:$0xff]
  %v68 = vld [vmem:[%s1 + $0x74] sm:$0xf]
  %v69 = vld [vmem:[%s1 + $0x78] sm:$0xff]
  %v70 = vld [vmem:[%s1 + $0x80] sm:$0xff]
  %v71 = vld [vmem:[%s1 + $0x88] sm:$0xff]
  %v72 = vld [vmem:[%s1 + $0x90] sm:$0xff]
  %v73 = vld [vmem:[%s1 + $0x98] sm:$0xff]
  %v74 = vld [vmem:[%s1 + $0xa0] sm:$0xff]
  %v75 = vld [vmem:[%s1 + $0xa8] sm:$0xff]
  %v76 = vld [vmem:[%s1 + $0xb0] sm:$0xf]
  %v77 = vld [vmem:[%s1 + $0xb4] sm:$0xff]
  %v78 = vld [vmem:[%s1 + $0xbc] sm:$0xff]
  %v79 = vld [vmem:[%s1 + $0xc4] sm:$0xff]
  %v80 = vld [vmem:[%s1 + $0xcc] sm:$0xff]
  %v81 = vld [vmem:[%s1 + $0xd4] sm:$0xff]
  %v82 = vld [vmem:[%s1 + $0xdc] sm:$0xff]
  %v83 = vld [vmem:[%s1 + $0xe4] sm:$0xff]
  %v84 = vld [vmem:[%s1 + $0xec] sm:$0xf]
  %v85 = vld [vmem:[%s1 + $0xf0] sm:$0xff]
  %v86 = vld [vmem:[%s1 + $0xf8] sm:$0xff]
  %v87 = vld [vmem:[%s1 + $0x100] sm:$0xff]
  %v88 = vld [vmem:[%s1 + $0x108] sm:$0xff]
  %v89 = vld [vmem:[%s1 + $0x110] sm:$0xff]
  %v90 = vld [vmem:[%s1 + $0x118] sm:$0xff]
  %v91 = vld [vmem:[%s1 + $0x120] sm:$0xff]
  %v92 = vld [vmem:[%s1 + $0x128] sm:$0xf]
  %v93 = vld [vmem:[%s1 + $0x12c] sm:$0xff]
  %v94 = vld [vmem:[%s1 + $0x134] sm:$0xff]
  %v95 = vld [vmem:[%s1 + $0x13c] sm:$0xff]
  %v96 = vld [vmem:[%s1 + $0x144] sm:$0xff]
  %v97 = vld [vmem:[%s1 + $0x14c] sm:$0xff]
  %v98 = vld [vmem:[%s1 + $0x154] sm:$0xff]
  %v99 = vld [vmem:[%s1 + $0x15c] sm:$0xff]
  %v100 = vld [vmem:[%s1 + $0x164] sm:$0xf]
  %v133 = vunpack.c.l.b16 %v21
  %v134 = vunpack.c.l.b16 %v22
  %v135 = vunpack.c.l.b16 %v23
  %v136 = vunpack.c.l.b16 %v24
  %v137 = vunpack.c.l.b16 %v25
  %v138 = vunpack.c.l.b16 %v26
  %v139 = vunpack.c.l.b16 %v27
  %v140 = vunpack.c.l.b16 %v28
  %v141 = vunpack.c.l.b16 %v29
  %v142 = vunpack.c.l.b16 %v30
  %v143 = vunpack.c.l.b16 %v31
  %v144 = vunpack.c.l.b16 %v32
  %v145 = vunpack.c.l.b16 %v33
  %v146 = vunpack.c.l.b16 %v34
  %v147 = vunpack.c.l.b16 %v35
  %v148 = vunpack.c.l.b16 %v36
  %v149 = vunpack.c.l.b16 %v37
  %v150 = vunpack.c.l.b16 %v38
  %v151 = vunpack.c.l.b16 %v39
  %v152 = vunpack.c.l.b16 %v40
  %v153 = vunpack.c.l.b16 %v41
  %v154 = vunpack.c.l.b16 %v42
  %v155 = vunpack.c.l.b16 %v43
  %v156 = vunpack.c.l.b16 %v44
  %v157 = vunpack.c.l.b16 %v45
  %v158 = vunpack.c.l.b16 %v46
  %v159 = vunpack.c.l.b16 %v47
  %v160 = vunpack.c.l.b16 %v48
  %v161 = vunpack.c.l.b16 %v49
  %v162 = vunpack.c.l.b16 %v50
  %v163 = vunpack.c.l.b16 %v51
  %v164 = vunpack.c.l.b16 %v52
  %v165 = vpack.c.b16 %v134, %v133
  %v166 = vpack.c.b16 %v136, %v135
  %v167 = vpack.c.b16 %v138, %v137
  %v168 = vpack.c.b16 %v140, %v139
  %v169 = vpack.c.b16 %v142, %v141
  %v170 = vpack.c.b16 %v144, %v143
  %v171 = vpack.c.b16 %v146, %v145
  %v172 = vpack.c.b16 %v148, %v147
  %v173 = vpack.c.b16 %v150, %v149
  %v174 = vpack.c.b16 %v152, %v151
  %v175 = vpack.c.b16 %v154, %v153
  %v176 = vpack.c.b16 %v156, %v155
  %v177 = vpack.c.b16 %v158, %v157
  %v178 = vpack.c.b16 %v160, %v159
  %v179 = vpack.c.b16 %v162, %v161
  %v180 = vpack.c.b16 %v164, %v163
  %v229 = vunpack.c.l.b16 %v53
  %v230 = vunpack.c.h.b16 %v53
  %v231 = vunpack.c.l.b16 %v54
  %v232 = vunpack.c.h.b16 %v54
  %v233 = vunpack.c.l.b16 %v55
  %v234 = vunpack.c.h.b16 %v55
  %v235 = vunpack.c.l.b16 %v56
  %v236 = vunpack.c.h.b16 %v56
  %v237 = vunpack.c.l.b16 %v57
  %v238 = vunpack.c.h.b16 %v57
  %v239 = vunpack.c.l.b16 %v58
  %v240 = vunpack.c.h.b16 %v58
  %v241 = vunpack.c.l.b16 %v59
  %v242 = vunpack.c.h.b16 %v59
  %v243 = vunpack.c.l.b16 %v60
  %v244 = vunpack.c.l.b16 %v61
  %v245 = vunpack.c.h.b16 %v61
  %v246 = vunpack.c.l.b16 %v62
  %v247 = vunpack.c.h.b16 %v62
  %v248 = vunpack.c.l.b16 %v63
  %v249 = vunpack.c.h.b16 %v63
  %v250 = vunpack.c.l.b16 %v64
  %v251 = vunpack.c.h.b16 %v64
  %v252 = vunpack.c.l.b16 %v65
  %v253 = vunpack.c.h.b16 %v65
  %v254 = vunpack.c.l.b16 %v66
  %v255 = vunpack.c.h.b16 %v66
  %v256 = vunpack.c.l.b16 %v67
  %v257 = vunpack.c.h.b16 %v67
  %v258 = vunpack.c.l.b16 %v68
  %v259 = vunpack.c.l.b16 %v69
  %v260 = vunpack.c.h.b16 %v69
  %v261 = vunpack.c.l.b16 %v70
  %v262 = vunpack.c.h.b16 %v70
  %v263 = vunpack.c.l.b16 %v71
  %v264 = vunpack.c.h.b16 %v71
  %v265 = vunpack.c.l.b16 %v72
  %v266 = vunpack.c.h.b16 %v72
  %v267 = vunpack.c.l.b16 %v73
  %v268 = vunpack.c.h.b16 %v73
  %v269 = vunpack.c.l.b16 %v74
  %v270 = vunpack.c.h.b16 %v74
  %v271 = vunpack.c.l.b16 %v75
  %v272 = vunpack.c.h.b16 %v75
  %v273 = vunpack.c.l.b16 %v76
  %v274 = vunpack.c.l.b16 %v77
  %v275 = vunpack.c.h.b16 %v77
  %v276 = vunpack.c.l.b16 %v78
  %v277 = vunpack.c.h.b16 %v78
  %v278 = vunpack.c.l.b16 %v79
  %v279 = vunpack.c.h.b16 %v79
  %v280 = vunpack.c.l.b16 %v80
  %v281 = vunpack.c.h.b16 %v80
  %v282 = vunpack.c.l.b16 %v81
  %v283 = vunpack.c.h.b16 %v81
  %v284 = vunpack.c.l.b16 %v82
  %v285 = vunpack.c.h.b16 %v82
  %v286 = vunpack.c.l.b16 %v83
  %v287 = vunpack.c.h.b16 %v83
  %v288 = vunpack.c.l.b16 %v84
  %v289 = vunpack.c.l.b16 %v85
  %v290 = vunpack.c.h.b16 %v85
  %v291 = vunpack.c.l.b16 %v86
  %v292 = vunpack.c.h.b16 %v86
  %v293 = vunpack.c.l.b16 %v87
  %v294 = vunpack.c.h.b16 %v87
  %v295 = vunpack.c.l.b16 %v88
  %v296 = vunpack.c.h.b16 %v88
  %v297 = vunpack.c.l.b16 %v89
  %v298 = vunpack.c.h.b16 %v89
  %v299 = vunpack.c.l.b16 %v90
  %v300 = vunpack.c.h.b16 %v90
  %v301 = vunpack.c.l.b16 %v91
  %v302 = vunpack.c.h.b16 %v91
  %v303 = vunpack.c.l.b16 %v92
  %v304 = vunpack.c.l.b16 %v93
  %v305 = vunpack.c.h.b16 %v93
  %v306 = vunpack.c.l.b16 %v94
  %v307 = vunpack.c.h.b16 %v94
  %v308 = vunpack.c.l.b16 %v95
  %v309 = vunpack.c.h.b16 %v95
  %v310 = vunpack.c.l.b16 %v96
  %v311 = vunpack.c.h.b16 %v96
  %v312 = vunpack.c.l.b16 %v97
  %v313 = vunpack.c.h.b16 %v97
  %v314 = vunpack.c.l.b16 %v98
  %v315 = vunpack.c.h.b16 %v98
  %v316 = vunpack.c.l.b16 %v99
  %v317 = vunpack.c.h.b16 %v99
  %v318 = vunpack.c.l.b16 %v100
  %v319 = vpack.c.b16 %v244, %v229
  %v320 = vpack.c.b16 %v245, %v230
  %v321 = vpack.c.b16 %v246, %v231
  %v322 = vpack.c.b16 %v247, %v232
  %v323 = vpack.c.b16 %v248, %v233
  %v324 = vpack.c.b16 %v249, %v234
  %v325 = vpack.c.b16 %v250, %v235
  %v326 = vpack.c.b16 %v251, %v236
  %v327 = vpack.c.b16 %v252, %v237
  %v328 = vpack.c.b16 %v253, %v238
  %v329 = vpack.c.b16 %v254, %v239
  %v330 = vpack.c.b16 %v255, %v240
  %v331 = vpack.c.b16 %v256, %v241
  %v332 = vpack.c.b16 %v257, %v242
  %v333 = vpack.c.b16 %v258, %v243
  %v334 = vpack.c.b16 %v274, %v259
  %v335 = vpack.c.b16 %v275, %v260
  %v336 = vpack.c.b16 %v276, %v261
  %v337 = vpack.c.b16 %v277, %v262
  %v338 = vpack.c.b16 %v278, %v263
  %v339 = vpack.c.b16 %v279, %v264
  %v340 = vpack.c.b16 %v280, %v265
  %v341 = vpack.c.b16 %v281, %v266
  %v342 = vpack.c.b16 %v282, %v267
  %v343 = vpack.c.b16 %v283, %v268
  %v344 = vpack.c.b16 %v284, %v269
  %v345 = vpack.c.b16 %v285, %v270
  %v346 = vpack.c.b16 %v286, %v271
  %v347 = vpack.c.b16 %v287, %v272
  %v348 = vpack.c.b16 %v288, %v273
  %v349 = vpack.c.b16 %v304, %v289
  %v350 = vpack.c.b16 %v305, %v290
  %v351 = vpack.c.b16 %v306, %v291
  %v352 = vpack.c.b16 %v307, %v292
  %v353 = vpack.c.b16 %v308, %v293
  %v354 = vpack.c.b16 %v309, %v294
  %v355 = vpack.c.b16 %v310, %v295
  %v356 = vpack.c.b16 %v311, %v296
  %v357 = vpack.c.b16 %v312, %v297
  %v358 = vpack.c.b16 %v313, %v298
  %v359 = vpack.c.b16 %v314, %v299
  %v360 = vpack.c.b16 %v315, %v300
  %v361 = vpack.c.b16 %v316, %v301
  %v362 = vpack.c.b16 %v317, %v302
  %v363 = vpack.c.b16 %v318, %v303
  %vm409 = vcmask 392192
  %v411 = vsel %vm409, %v165, 0
  %v414 = vsel %vm409, %v166, 0
  %v417 = vsel %vm409, %v167, 0
  %v420 = vsel %vm409, %v168, 0
  %v423 = vsel %vm409, %v169, 0
  %v426 = vsel %vm409, %v170, 0
  %v429 = vsel %vm409, %v171, 0
  %v432 = vsel %vm409, %v172, 0
  %v435 = vsel %vm409, %v173, 0
  %v438 = vsel %vm409, %v174, 0
  %v441 = vsel %vm409, %v175, 0
  %v444 = vsel %vm409, %v176, 0
  %v447 = vsel %vm409, %v177, 0
  %v450 = vsel %vm409, %v178, 0
  %v453 = vsel %vm409, %v179, 0
  %v456 = vsel %vm409, %v180, 0
  %458 = vmatpush.bf16.msra.mxu0 0
  %459 = vmatpush.bf16.msra.mxu0 0
  %460 = vmatpush.bf16.msra.mxu0 0
  %461 = vmatpush.bf16.msra.mxu0 0
  %462 = vmatpush.bf16.msra.mxu0 0
  %463 = vmatpush.bf16.msra.mxu0 %v349
  %464 = vmatpush.bf16.msra.mxu0 %v334
  %465 = vmatpush.bf16.msra.mxu0 %v319
  %466 = vmatmul.bf16.gmra.mxu0 %v411
  %v467 = vpop.f32.mrf.mxu0
  %v468 = vadd.f32 0.0, %v467
  %v469 = vpop.f32.mrf.mxu0
  %v470 = vadd.f32 0.0, %v469
  %471 = vmatmul.bf16.gmra.mxu0 %v414
  %v472 = vpop.f32.mrf.mxu0
  %v473 = vpop.f32.mrf.mxu0
  %474 = vmatmul.bf16.gmra.mxu0 %v417
  %v475 = vpop.f32.mrf.mxu0
  %v476 = vadd.f32 0.0, %v475
  %v477 = vpop.f32.mrf.mxu0
  %v478 = vadd.f32 0.0, %v477
  %479 = vmatmul.bf16.gmra.mxu0 %v420
  %v480 = vpop.f32.mrf.mxu0
  %v481 = vpop.f32.mrf.mxu0
  %482 = vmatmul.bf16.gmra.mxu0 %v423
  %v483 = vpop.f32.mrf.mxu0
  %v484 = vadd.f32 0.0, %v483
  %v485 = vpop.f32.mrf.mxu0
  %v486 = vadd.f32 0.0, %v485
  %487 = vmatmul.bf16.gmra.mxu0 %v426
  %v488 = vpop.f32.mrf.mxu0
  %v489 = vpop.f32.mrf.mxu0
  %490 = vmatmul.bf16.gmra.mxu0 %v429
  %v491 = vpop.f32.mrf.mxu0
  %v492 = vadd.f32 0.0, %v491
  %v493 = vpop.f32.mrf.mxu0
  %v494 = vadd.f32 0.0, %v493
  %495 = vmatmul.bf16.gmra.mxu0 %v432
  %v496 = vpop.f32.mrf.mxu0
  %v497 = vpop.f32.mrf.mxu0
  %498 = vmatmul.bf16.gmra.mxu0 %v435
  %v499 = vpop.f32.mrf.mxu0
  %v500 = vadd.f32 0.0, %v499
  %v501 = vpop.f32.mrf.mxu0
  %v502 = vadd.f32 0.0, %v501
  %503 = vmatmul.bf16.gmra.mxu0 %v438
  %v504 = vpop.f32.mrf.mxu0
  %v505 = vpop.f32.mrf.mxu0
  %506 = vmatmul.bf16.gmra.mxu0 %v441
  %v507 = vpop.f32.mrf.mxu0
  %v508 = vadd.f32 0.0, %v507
  %v509 = vpop.f32.mrf.mxu0
  %v510 = vadd.f32 0.0, %v509
  %511 = vmatmul.bf16.gmra.mxu0 %v444
  %v512 = vpop.f32.mrf.mxu0
  %v513 = vpop.f32.mrf.mxu0
  %514 = vmatmul.bf16.gmra.mxu0 %v447
  %v515 = vpop.f32.mrf.mxu0
  %v516 = vadd.f32 0.0, %v515
  %v517 = vpop.f32.mrf.mxu0
  %v518 = vadd.f32 0.0, %v517
  %519 = vmatmul.bf16.gmra.mxu0 %v450
  %v520 = vpop.f32.mrf.mxu0
  %v521 = vpop.f32.mrf.mxu0
  %522 = vmatmul.bf16.gmra.mxu0 %v453
  %v523 = vpop.f32.mrf.mxu0
  %v524 = vadd.f32 0.0, %v523
  %v525 = vpop.f32.mrf.mxu0
  %v526 = vadd.f32 0.0, %v525
  %527 = vmatmul.bf16.gmra.mxu0 %v456
  %v528 = vpop.f32.mrf.mxu0
  %v529 = vpop.f32.mrf.mxu0
  %530 = vdwg.mxu0
  %531 = vmatpush.bf16.msra.mxu0 0
  %532 = vmatpush.bf16.msra.mxu0 0
  %533 = vmatpush.bf16.msra.mxu0 0
  %534 = vmatpush.bf16.msra.mxu0 0
  %535 = vmatpush.bf16.msra.mxu0 0
  %536 = vmatpush.bf16.msra.mxu0 %v350
  %537 = vmatpush.bf16.msra.mxu0 %v335
  %538 = vmatpush.bf16.msra.mxu0 %v320
  %539 = vmatmul.bf16.gmra.mxu0 %v411
  %v540 = vpop.f32.mrf.mxu0
  %v541 = vadd.f32 0.0, %v540
  %v542 = vpop.f32.mrf.mxu0
  %v543 = vadd.f32 0.0, %v542
  %544 = vmatmul.bf16.gmra.mxu0 %v414
  %v545 = vpop.f32.mrf.mxu0
  %v546 = vadd.f32 0.0, %v545
  %v547 = vpop.f32.mrf.mxu0
  %548 = vmatmul.bf16.gmra.mxu0 %v417
  %v549 = vpop.f32.mrf.mxu0
  %v550 = vadd.f32 0.0, %v549
  %v551 = vpop.f32.mrf.mxu0
  %v552 = vadd.f32 0.0, %v551
  %553 = vmatmul.bf16.gmra.mxu0 %v420
  %v554 = vpop.f32.mrf.mxu0
  %v555 = vadd.f32 0.0, %v554
  %v556 = vpop.f32.mrf.mxu0
  %557 = vmatmul.bf16.gmra.mxu0 %v423
  %v558 = vpop.f32.mrf.mxu0
  %v559 = vadd.f32 0.0, %v558
  %v560 = vpop.f32.mrf.mxu0
  %v561 = vadd.f32 0.0, %v560
  %562 = vmatmul.bf16.gmra.mxu0 %v426
  %v563 = vpop.f32.mrf.mxu0
  %v564 = vadd.f32 0.0, %v563
  %v565 = vpop.f32.mrf.mxu0
  %566 = vmatmul.bf16.gmra.mxu0 %v429
  %v567 = vpop.f32.mrf.mxu0
  %v568 = vadd.f32 0.0, %v567
  %v569 = vpop.f32.mrf.mxu0
  %v570 = vadd.f32 0.0, %v569
  %571 = vmatmul.bf16.gmra.mxu0 %v432
  %v572 = vpop.f32.mrf.mxu0
  %v573 = vadd.f32 0.0, %v572
  %v574 = vpop.f32.mrf.mxu0
  %575 = vmatmul.bf16.gmra.mxu0 %v435
  %v576 = vpop.f32.mrf.mxu0
  %v577 = vadd.f32 0.0, %v576
  %v578 = vpop.f32.mrf.mxu0
  %v579 = vadd.f32 0.0, %v578
  %580 = vmatmul.bf16.gmra.mxu0 %v438
  %v581 = vpop.f32.mrf.mxu0
  %v582 = vadd.f32 0.0, %v581
  %v583 = vpop.f32.mrf.mxu0
  %584 = vmatmul.bf16.gmra.mxu0 %v441
  %v585 = vpop.f32.mrf.mxu0
  %v586 = vadd.f32 0.0, %v585
  %v587 = vpop.f32.mrf.mxu0
  %v588 = vadd.f32 0.0, %v587
  %589 = vmatmul.bf16.gmra.mxu0 %v444
  %v590 = vpop.f32.mrf.mxu0
  %v591 = vadd.f32 0.0, %v590
  %v592 = vpop.f32.mrf.mxu0
  %593 = vmatmul.bf16.gmra.mxu0 %v447
  %v594 = vpop.f32.mrf.mxu0
  %v595 = vadd.f32 0.0, %v594
  %v596 = vpop.f32.mrf.mxu0
  %v597 = vadd.f32 0.0, %v596
  %598 = vmatmul.bf16.gmra.mxu0 %v450
  %v599 = vpop.f32.mrf.mxu0
  %v600 = vadd.f32 0.0, %v599
  %v601 = vpop.f32.mrf.mxu0
  %602 = vmatmul.bf16.gmra.mxu0 %v453
  %v603 = vpop.f32.mrf.mxu0
  %v604 = vadd.f32 0.0, %v603
  %v605 = vpop.f32.mrf.mxu0
  %v606 = vadd.f32 0.0, %v605
  %607 = vmatmul.bf16.gmra.mxu0 %v456
  %v608 = vpop.f32.mrf.mxu0
  %v609 = vadd.f32 0.0, %v608
  %v610 = vpop.f32.mrf.mxu0
  %611 = vdwg.mxu0
  %612 = vmatpush.bf16.msra.mxu0 0
  %613 = vmatpush.bf16.msra.mxu0 0
  %614 = vmatpush.bf16.msra.mxu0 0
  %615 = vmatpush.bf16.msra.mxu0 0
  %616 = vmatpush.bf16.msra.mxu0 0
  %617 = vmatpush.bf16.msra.mxu0 %v351
  %618 = vmatpush.bf16.msra.mxu0 %v336
  %619 = vmatpush.bf16.msra.mxu0 %v321
  %620 = vmatmul.bf16.gmra.mxu0 %v411
  %v621 = vpop.f32.mrf.mxu0
  %v622 = vadd.f32 0.0, %v621
  %v623 = vpop.f32.mrf.mxu0
  %v624 = vadd.f32 0.0, %v623
  %625 = vmatmul.bf16.gmra.mxu0 %v414
  %v626 = vpop.f32.mrf.mxu0
  %v627 = vadd.f32 0.0, %v626
  %v628 = vpop.f32.mrf.mxu0
  %629 = vmatmul.bf16.gmra.mxu0 %v417
  %v630 = vpop.f32.mrf.mxu0
  %v631 = vadd.f32 0.0, %v630
  %v632 = vpop.f32.mrf.mxu0
  %v633 = vadd.f32 0.0, %v632
  %634 = vmatmul.bf16.gmra.mxu0 %v420
  %v635 = vpop.f32.mrf.mxu0
  %v636 = vadd.f32 0.0, %v635
  %v637 = vpop.f32.mrf.mxu0
  %638 = vmatmul.bf16.gmra.mxu0 %v423
  %v639 = vpop.f32.mrf.mxu0
  %v640 = vadd.f32 0.0, %v639
  %v641 = vpop.f32.mrf.mxu0
  %v642 = vadd.f32 0.0, %v641
  %643 = vmatmul.bf16.gmra.mxu0 %v426
  %v644 = vpop.f32.mrf.mxu0
  %v645 = vadd.f32 0.0, %v644
  %v646 = vpop.f32.mrf.mxu0
  %647 = vmatmul.bf16.gmra.mxu0 %v429
  %v648 = vpop.f32.mrf.mxu0
  %v649 = vadd.f32 0.0, %v648
  %v650 = vpop.f32.mrf.mxu0
  %v651 = vadd.f32 0.0, %v650
  %652 = vmatmul.bf16.gmra.mxu0 %v432
  %v653 = vpop.f32.mrf.mxu0
  %v654 = vadd.f32 0.0, %v653
  %v655 = vpop.f32.mrf.mxu0
  %656 = vmatmul.bf16.gmra.mxu0 %v435
  %v657 = vpop.f32.mrf.mxu0
  %v658 = vadd.f32 0.0, %v657
  %v659 = vpop.f32.mrf.mxu0
  %v660 = vadd.f32 0.0, %v659
  %661 = vmatmul.bf16.gmra.mxu0 %v438
  %v662 = vpop.f32.mrf.mxu0
  %v663 = vadd.f32 0.0, %v662
  %v664 = vpop.f32.mrf.mxu0
  %665 = vmatmul.bf16.gmra.mxu0 %v441
  %v666 = vpop.f32.mrf.mxu0
  %v667 = vadd.f32 0.0, %v666
  %v668 = vpop.f32.mrf.mxu0
  %v669 = vadd.f32 0.0, %v668
  %670 = vmatmul.bf16.gmra.mxu0 %v444
  %v671 = vpop.f32.mrf.mxu0
  %v672 = vadd.f32 0.0, %v671
  %v673 = vpop.f32.mrf.mxu0
  %674 = vmatmul.bf16.gmra.mxu0 %v447
  %v675 = vpop.f32.mrf.mxu0
  %v676 = vadd.f32 0.0, %v675
  %v677 = vpop.f32.mrf.mxu0
  %v678 = vadd.f32 0.0, %v677
  %679 = vmatmul.bf16.gmra.mxu0 %v450
  %v680 = vpop.f32.mrf.mxu0
  %v681 = vadd.f32 0.0, %v680
  %v682 = vpop.f32.mrf.mxu0
  %683 = vmatmul.bf16.gmra.mxu0 %v453
  %v684 = vpop.f32.mrf.mxu0
  %v685 = vadd.f32 0.0, %v684
  %v686 = vpop.f32.mrf.mxu0
  %v687 = vadd.f32 0.0, %v686
  %688 = vmatmul.bf16.gmra.mxu0 %v456
  %v689 = vpop.f32.mrf.mxu0
  %v690 = vadd.f32 0.0, %v689
  %v691 = vpop.f32.mrf.mxu0
  %692 = vdwg.mxu0
  %693 = vmatpush.bf16.msra.mxu0 0
  %694 = vmatpush.bf16.msra.mxu0 0
  %695 = vmatpush.bf16.msra.mxu0 0
  %696 = vmatpush.bf16.msra.mxu0 0
  %697 = vmatpush.bf16.msra.mxu0 0
  %698 = vmatpush.bf16.msra.mxu0 %v352
  %699 = vmatpush.bf16.msra.mxu0 %v337
  %700 = vmatpush.bf16.msra.mxu0 %v322
  %701 = vmatmul.bf16.gmra.mxu0 %v411
  %v702 = vpop.f32.mrf.mxu0
  %v703 = vadd.f32 0.0, %v702
  %v704 = vpop.f32.mrf.mxu0
  %v705 = vadd.f32 0.0, %v704
  %706 = vmatmul.bf16.gmra.mxu0 %v414
  %v707 = vpop.f32.mrf.mxu0
  %v708 = vadd.f32 0.0, %v707
  %v709 = vpop.f32.mrf.mxu0
  %710 = vmatmul.bf16.gmra.mxu0 %v417
  %v711 = vpop.f32.mrf.mxu0
  %v712 = vadd.f32 0.0, %v711
  %v713 = vpop.f32.mrf.mxu0
  %v714 = vadd.f32 0.0, %v713
  %715 = vmatmul.bf16.gmra.mxu0 %v420
  %v716 = vpop.f32.mrf.mxu0
  %v717 = vadd.f32 0.0, %v716
  %v718 = vpop.f32.mrf.mxu0
  %719 = vmatmul.bf16.gmra.mxu0 %v423
  %v720 = vpop.f32.mrf.mxu0
  %v721 = vadd.f32 0.0, %v720
  %v722 = vpop.f32.mrf.mxu0
  %v723 = vadd.f32 0.0, %v722
  %724 = vmatmul.bf16.gmra.mxu0 %v426
  %v725 = vpop.f32.mrf.mxu0
  %v726 = vadd.f32 0.0, %v725
  %v727 = vpop.f32.mrf.mxu0
  %728 = vmatmul.bf16.gmra.mxu0 %v429
  %v729 = vpop.f32.mrf.mxu0
  %v730 = vadd.f32 0.0, %v729
  %v731 = vpop.f32.mrf.mxu0
  %v732 = vadd.f32 0.0, %v731
  %733 = vmatmul.bf16.gmra.mxu0 %v432
  %v734 = vpop.f32.mrf.mxu0
  %v735 = vadd.f32 0.0, %v734
  %v736 = vpop.f32.mrf.mxu0
  %737 = vmatmul.bf16.gmra.mxu0 %v435
  %v738 = vpop.f32.mrf.mxu0
  %v739 = vadd.f32 0.0, %v738
  %v740 = vpop.f32.mrf.mxu0
  %v741 = vadd.f32 0.0, %v740
  %742 = vmatmul.bf16.gmra.mxu0 %v438
  %v743 = vpop.f32.mrf.mxu0
  %v744 = vadd.f32 0.0, %v743
  %v745 = vpop.f32.mrf.mxu0
  %746 = vmatmul.bf16.gmra.mxu0 %v441
  %v747 = vpop.f32.mrf.mxu0
  %v748 = vadd.f32 0.0, %v747
  %v749 = vpop.f32.mrf.mxu0
  %v750 = vadd.f32 0.0, %v749
  %751 = vmatmul.bf16.gmra.mxu0 %v444
  %v752 = vpop.f32.mrf.mxu0
  %v753 = vadd.f32 0.0, %v752
  %v754 = vpop.f32.mrf.mxu0
  %755 = vmatmul.bf16.gmra.mxu0 %v447
  %v756 = vpop.f32.mrf.mxu0
  %v757 = vadd.f32 0.0, %v756
  %v758 = vpop.f32.mrf.mxu0
  %v759 = vadd.f32 0.0, %v758
  %760 = vmatmul.bf16.gmra.mxu0 %v450
  %v761 = vpop.f32.mrf.mxu0
  %v762 = vadd.f32 0.0, %v761
  %v763 = vpop.f32.mrf.mxu0
  %764 = vmatmul.bf16.gmra.mxu0 %v453
  %v765 = vpop.f32.mrf.mxu0
  %v766 = vadd.f32 0.0, %v765
  %v767 = vpop.f32.mrf.mxu0
  %v768 = vadd.f32 0.0, %v767
  %769 = vmatmul.bf16.gmra.mxu0 %v456
  %v770 = vpop.f32.mrf.mxu0
  %v771 = vadd.f32 0.0, %v770
  %v772 = vpop.f32.mrf.mxu0
  %773 = vdwg.mxu0
  %774 = vmatpush.bf16.msra.mxu0 0
  %775 = vmatpush.bf16.msra.mxu0 0
  %776 = vmatpush.bf16.msra.mxu0 0
  %777 = vmatpush.bf16.msra.mxu0 0
  %778 = vmatpush.bf16.msra.mxu0 0
  %779 = vmatpush.bf16.msra.mxu0 %v353
  %780 = vmatpush.bf16.msra.mxu0 %v338
  %781 = vmatpush.bf16.msra.mxu0 %v323
  %782 = vmatmul.bf16.gmra.mxu0 %v411
  %v783 = vpop.f32.mrf.mxu0
  %v784 = vadd.f32 0.0, %v783
  %v785 = vpop.f32.mrf.mxu0
  %v786 = vadd.f32 0.0, %v785
  %787 = vmatmul.bf16.gmra.mxu0 %v414
  %v788 = vpop.f32.mrf.mxu0
  %v789 = vadd.f32 0.0, %v788
  %v790 = vpop.f32.mrf.mxu0
  %791 = vmatmul.bf16.gmra.mxu0 %v417
  %v792 = vpop.f32.mrf.mxu0
  %v793 = vadd.f32 0.0, %v792
  %v794 = vpop.f32.mrf.mxu0
  %v795 = vadd.f32 0.0, %v794
  %796 = vmatmul.bf16.gmra.mxu0 %v420
  %v797 = vpop.f32.mrf.mxu0
  %v798 = vadd.f32 0.0, %v797
  %v799 = vpop.f32.mrf.mxu0
  %800 = vmatmul.bf16.gmra.mxu0 %v423
  %v801 = vpop.f32.mrf.mxu0
  %v802 = vadd.f32 0.0, %v801
  %v803 = vpop.f32.mrf.mxu0
  %v804 = vadd.f32 0.0, %v803
  %805 = vmatmul.bf16.gmra.mxu0 %v426
  %v806 = vpop.f32.mrf.mxu0
  %v807 = vadd.f32 0.0, %v806
  %v808 = vpop.f32.mrf.mxu0
  %809 = vmatmul.bf16.gmra.mxu0 %v429
  %v810 = vpop.f32.mrf.mxu0
  %v811 = vadd.f32 0.0, %v810
  %v812 = vpop.f32.mrf.mxu0
  %v813 = vadd.f32 0.0, %v812
  %814 = vmatmul.bf16.gmra.mxu0 %v432
  %v815 = vpop.f32.mrf.mxu0
  %v816 = vadd.f32 0.0, %v815
  %v817 = vpop.f32.mrf.mxu0
  %818 = vmatmul.bf16.gmra.mxu0 %v435
  %v819 = vpop.f32.mrf.mxu0
  %v820 = vadd.f32 0.0, %v819
  %v821 = vpop.f32.mrf.mxu0
  %v822 = vadd.f32 0.0, %v821
  %823 = vmatmul.bf16.gmra.mxu0 %v438
  %v824 = vpop.f32.mrf.mxu0
  %v825 = vadd.f32 0.0, %v824
  %v826 = vpop.f32.mrf.mxu0
  %827 = vmatmul.bf16.gmra.mxu0 %v441
  %v828 = vpop.f32.mrf.mxu0
  %v829 = vadd.f32 0.0, %v828
  %v830 = vpop.f32.mrf.mxu0
  %v831 = vadd.f32 0.0, %v830
  %832 = vmatmul.bf16.gmra.mxu0 %v444
  %v833 = vpop.f32.mrf.mxu0
  %v834 = vadd.f32 0.0, %v833
  %v835 = vpop.f32.mrf.mxu0
  %836 = vmatmul.bf16.gmra.mxu0 %v447
  %v837 = vpop.f32.mrf.mxu0
  %v838 = vadd.f32 0.0, %v837
  %v839 = vpop.f32.mrf.mxu0
  %v840 = vadd.f32 0.0, %v839
  %841 = vmatmul.bf16.gmra.mxu0 %v450
  %v842 = vpop.f32.mrf.mxu0
  %v843 = vadd.f32 0.0, %v842
  %v844 = vpop.f32.mrf.mxu0
  %845 = vmatmul.bf16.gmra.mxu0 %v453
  %v846 = vpop.f32.mrf.mxu0
  %v847 = vadd.f32 0.0, %v846
  %v848 = vpop.f32.mrf.mxu0
  %v849 = vadd.f32 0.0, %v848
  %850 = vmatmul.bf16.gmra.mxu0 %v456
  %v851 = vpop.f32.mrf.mxu0
  %v852 = vadd.f32 0.0, %v851
  %v853 = vpop.f32.mrf.mxu0
  %854 = vdwg.mxu0
  %855 = vmatpush.bf16.msra.mxu0 0
  %856 = vmatpush.bf16.msra.mxu0 0
  %857 = vmatpush.bf16.msra.mxu0 0
  %858 = vmatpush.bf16.msra.mxu0 0
  %859 = vmatpush.bf16.msra.mxu0 0
  %860 = vmatpush.bf16.msra.mxu0 %v354
  %861 = vmatpush.bf16.msra.mxu0 %v339
  %862 = vmatpush.bf16.msra.mxu0 %v324
  %863 = vmatmul.bf16.gmra.mxu0 %v411
  %v864 = vpop.f32.mrf.mxu0
  %v865 = vadd.f32 0.0, %v864
  %v866 = vpop.f32.mrf.mxu0
  %v867 = vadd.f32 0.0, %v866
  %868 = vmatmul.bf16.gmra.mxu0 %v414
  %v869 = vpop.f32.mrf.mxu0
  %v870 = vadd.f32 0.0, %v869
  %v871 = vpop.f32.mrf.mxu0
  %872 = vmatmul.bf16.gmra.mxu0 %v417
  %v873 = vpop.f32.mrf.mxu0
  %v874 = vadd.f32 0.0, %v873
  %v875 = vpop.f32.mrf.mxu0
  %v876 = vadd.f32 0.0, %v875
  %877 = vmatmul.bf16.gmra.mxu0 %v420
  %v878 = vpop.f32.mrf.mxu0
  %v879 = vadd.f32 0.0, %v878
  %v880 = vpop.f32.mrf.mxu0
  %881 = vmatmul.bf16.gmra.mxu0 %v423
  %v882 = vpop.f32.mrf.mxu0
  %v883 = vadd.f32 0.0, %v882
  %v884 = vpop.f32.mrf.mxu0
  %v885 = vadd.f32 0.0, %v884
  %886 = vmatmul.bf16.gmra.mxu0 %v426
  %v887 = vpop.f32.mrf.mxu0
  %v888 = vadd.f32 0.0, %v887
  %v889 = vpop.f32.mrf.mxu0
  %890 = vmatmul.bf16.gmra.mxu0 %v429
  %v891 = vpop.f32.mrf.mxu0
  %v892 = vadd.f32 0.0, %v891
  %v893 = vpop.f32.mrf.mxu0
  %v894 = vadd.f32 0.0, %v893
  %895 = vmatmul.bf16.gmra.mxu0 %v432
  %v896 = vpop.f32.mrf.mxu0
  %v897 = vadd.f32 0.0, %v896
  %v898 = vpop.f32.mrf.mxu0
  %899 = vmatmul.bf16.gmra.mxu0 %v435
  %v900 = vpop.f32.mrf.mxu0
  %v901 = vadd.f32 0.0, %v900
  %v902 = vpop.f32.mrf.mxu0
  %v903 = vadd.f32 0.0, %v902
  %904 = vmatmul.bf16.gmra.mxu0 %v438
  %v905 = vpop.f32.mrf.mxu0
  %v906 = vadd.f32 0.0, %v905
  %v907 = vpop.f32.mrf.mxu0
  %908 = vmatmul.bf16.gmra.mxu0 %v441
  %v909 = vpop.f32.mrf.mxu0
  %v910 = vadd.f32 0.0, %v909
  %v911 = vpop.f32.mrf.mxu0
  %v912 = vadd.f32 0.0, %v911
  %913 = vmatmul.bf16.gmra.mxu0 %v444
  %v914 = vpop.f32.mrf.mxu0
  %v915 = vadd.f32 0.0, %v914
  %v916 = vpop.f32.mrf.mxu0
  %917 = vmatmul.bf16.gmra.mxu0 %v447
  %v918 = vpop.f32.mrf.mxu0
  %v919 = vadd.f32 0.0, %v918
  %v920 = vpop.f32.mrf.mxu0
  %v921 = vadd.f32 0.0, %v920
  %922 = vmatmul.bf16.gmra.mxu0 %v450
  %v923 = vpop.f32.mrf.mxu0
  %v924 = vadd.f32 0.0, %v923
  %v925 = vpop.f32.mrf.mxu0
  %926 = vmatmul.bf16.gmra.mxu0 %v453
  %v927 = vpop.f32.mrf.mxu0
  %v928 = vadd.f32 0.0, %v927
  %v929 = vpop.f32.mrf.mxu0
  %v930 = vadd.f32 0.0, %v929
  %931 = vmatmul.bf16.gmra.mxu0 %v456
  %v932 = vpop.f32.mrf.mxu0
  %v933 = vadd.f32 0.0, %v932
  %v934 = vpop.f32.mrf.mxu0
  %935 = vdwg.mxu0
  %936 = vmatpush.bf16.msra.mxu0 0
  %937 = vmatpush.bf16.msra.mxu0 0
  %938 = vmatpush.bf16.msra.mxu0 0
  %939 = vmatpush.bf16.msra.mxu0 0
  %940 = vmatpush.bf16.msra.mxu0 0
  %941 = vmatpush.bf16.msra.mxu0 %v355
  %942 = vmatpush.bf16.msra.mxu0 %v340
  %943 = vmatpush.bf16.msra.mxu0 %v325
  %944 = vmatmul.bf16.gmra.mxu0 %v411
  %v945 = vpop.f32.mrf.mxu0
  %v946 = vadd.f32 0.0, %v945
  %v947 = vpop.f32.mrf.mxu0
  %v948 = vadd.f32 0.0, %v947
  %949 = vmatmul.bf16.gmra.mxu0 %v414
  %v950 = vpop.f32.mrf.mxu0
  %v951 = vadd.f32 0.0, %v950
  %v952 = vpop.f32.mrf.mxu0
  %953 = vmatmul.bf16.gmra.mxu0 %v417
  %v954 = vpop.f32.mrf.mxu0
  %v955 = vadd.f32 0.0, %v954
  %v956 = vpop.f32.mrf.mxu0
  %v957 = vadd.f32 0.0, %v956
  %958 = vmatmul.bf16.gmra.mxu0 %v420
  %v959 = vpop.f32.mrf.mxu0
  %v960 = vadd.f32 0.0, %v959
  %v961 = vpop.f32.mrf.mxu0
  %962 = vmatmul.bf16.gmra.mxu0 %v423
  %v963 = vpop.f32.mrf.mxu0
  %v964 = vadd.f32 0.0, %v963
  %v965 = vpop.f32.mrf.mxu0
  %v966 = vadd.f32 0.0, %v965
  %967 = vmatmul.bf16.gmra.mxu0 %v426
  %v968 = vpop.f32.mrf.mxu0
  %v969 = vadd.f32 0.0, %v968
  %v970 = vpop.f32.mrf.mxu0
  %971 = vmatmul.bf16.gmra.mxu0 %v429
  %v972 = vpop.f32.mrf.mxu0
  %v973 = vadd.f32 0.0, %v972
  %v974 = vpop.f32.mrf.mxu0
  %v975 = vadd.f32 0.0, %v974
  %976 = vmatmul.bf16.gmra.mxu0 %v432
  %v977 = vpop.f32.mrf.mxu0
  %v978 = vadd.f32 0.0, %v977
  %v979 = vpop.f32.mrf.mxu0
  %980 = vmatmul.bf16.gmra.mxu0 %v435
  %v981 = vpop.f32.mrf.mxu0
  %v982 = vadd.f32 0.0, %v981
  %v983 = vpop.f32.mrf.mxu0
  %v984 = vadd.f32 0.0, %v983
  %985 = vmatmul.bf16.gmra.mxu0 %v438
  %v986 = vpop.f32.mrf.mxu0
  %v987 = vadd.f32 0.0, %v986
  %v988 = vpop.f32.mrf.mxu0
  %989 = vmatmul.bf16.gmra.mxu0 %v441
  %v990 = vpop.f32.mrf.mxu0
  %v991 = vadd.f32 0.0, %v990
  %v992 = vpop.f32.mrf.mxu0
  %v993 = vadd.f32 0.0, %v992
  %994 = vmatmul.bf16.gmra.mxu0 %v444
  %v995 = vpop.f32.mrf.mxu0
  %v996 = vadd.f32 0.0, %v995
  %v997 = vpop.f32.mrf.mxu0
  %998 = vmatmul.bf16.gmra.mxu0 %v447
  %v999 = vpop.f32.mrf.mxu0
  %v1000 = vadd.f32 0.0, %v999
  %v1001 = vpop.f32.mrf.mxu0
  %v1002 = vadd.f32 0.0, %v1001
  %1003 = vmatmul.bf16.gmra.mxu0 %v450
  %v1004 = vpop.f32.mrf.mxu0
  %v1005 = vadd.f32 0.0, %v1004
  %v1006 = vpop.f32.mrf.mxu0
  %1007 = vmatmul.bf16.gmra.mxu0 %v453
  %v1008 = vpop.f32.mrf.mxu0
  %v1009 = vadd.f32 0.0, %v1008
  %v1010 = vpop.f32.mrf.mxu0
  %v1011 = vadd.f32 0.0, %v1010
  %1012 = vmatmul.bf16.gmra.mxu0 %v456
  %v1013 = vpop.f32.mrf.mxu0
  %v1014 = vadd.f32 0.0, %v1013
  %v1015 = vpop.f32.mrf.mxu0
  %1016 = vdwg.mxu0
  %1017 = vmatpush.bf16.msra.mxu0 0
  %1018 = vmatpush.bf16.msra.mxu0 0
  %1019 = vmatpush.bf16.msra.mxu0 0
  %1020 = vmatpush.bf16.msra.mxu0 0
  %1021 = vmatpush.bf16.msra.mxu0 0
  %1022 = vmatpush.bf16.msra.mxu0 %v356
  %1023 = vmatpush.bf16.msra.mxu0 %v341
  %1024 = vmatpush.bf16.msra.mxu0 %v326
  %1025 = vmatmul.bf16.gmra.mxu0 %v411
  %v1026 = vpop.f32.mrf.mxu0
  %v1027 = vadd.f32 0.0, %v1026
  %v1028 = vpop.f32.mrf.mxu0
  %v1029 = vadd.f32 0.0, %v1028
  %1030 = vmatmul.bf16.gmra.mxu0 %v414
  %v1031 = vpop.f32.mrf.mxu0
  %v1032 = vadd.f32 0.0, %v1031
  %v1033 = vpop.f32.mrf.mxu0
  %1034 = vmatmul.bf16.gmra.mxu0 %v417
  %v1035 = vpop.f32.mrf.mxu0
  %v1036 = vadd.f32 0.0, %v1035
  %v1037 = vpop.f32.mrf.mxu0
  %v1038 = vadd.f32 0.0, %v1037
  %1039 = vmatmul.bf16.gmra.mxu0 %v420
  %v1040 = vpop.f32.mrf.mxu0
  %v1041 = vadd.f32 0.0, %v1040
  %v1042 = vpop.f32.mrf.mxu0
  %1043 = vmatmul.bf16.gmra.mxu0 %v423
  %v1044 = vpop.f32.mrf.mxu0
  %v1045 = vadd.f32 0.0, %v1044
  %v1046 = vpop.f32.mrf.mxu0
  %v1047 = vadd.f32 0.0, %v1046
  %1048 = vmatmul.bf16.gmra.mxu0 %v426
  %v1049 = vpop.f32.mrf.mxu0
  %v1050 = vadd.f32 0.0, %v1049
  %v1051 = vpop.f32.mrf.mxu0
  %1052 = vmatmul.bf16.gmra.mxu0 %v429
  %v1053 = vpop.f32.mrf.mxu0
  %v1054 = vadd.f32 0.0, %v1053
  %v1055 = vpop.f32.mrf.mxu0
  %v1056 = vadd.f32 0.0, %v1055
  %1057 = vmatmul.bf16.gmra.mxu0 %v432
  %v1058 = vpop.f32.mrf.mxu0
  %v1059 = vadd.f32 0.0, %v1058
  %v1060 = vpop.f32.mrf.mxu0
  %1061 = vmatmul.bf16.gmra.mxu0 %v435
  %v1062 = vpop.f32.mrf.mxu0
  %v1063 = vadd.f32 0.0, %v1062
  %v1064 = vpop.f32.mrf.mxu0
  %v1065 = vadd.f32 0.0, %v1064
  %1066 = vmatmul.bf16.gmra.mxu0 %v438
  %v1067 = vpop.f32.mrf.mxu0
  %v1068 = vadd.f32 0.0, %v1067
  %v1069 = vpop.f32.mrf.mxu0
  %1070 = vmatmul.bf16.gmra.mxu0 %v441
  %v1071 = vpop.f32.mrf.mxu0
  %v1072 = vadd.f32 0.0, %v1071
  %v1073 = vpop.f32.mrf.mxu0
  %v1074 = vadd.f32 0.0, %v1073
  %1075 = vmatmul.bf16.gmra.mxu0 %v444
  %v1076 = vpop.f32.mrf.mxu0
  %v1077 = vadd.f32 0.0, %v1076
  %v1078 = vpop.f32.mrf.mxu0
  %1079 = vmatmul.bf16.gmra.mxu0 %v447
  %v1080 = vpop.f32.mrf.mxu0
  %v1081 = vadd.f32 0.0, %v1080
  %v1082 = vpop.f32.mrf.mxu0
  %v1083 = vadd.f32 0.0, %v1082
  %1084 = vmatmul.bf16.gmra.mxu0 %v450
  %v1085 = vpop.f32.mrf.mxu0
  %v1086 = vadd.f32 0.0, %v1085
  %v1087 = vpop.f32.mrf.mxu0
  %1088 = vmatmul.bf16.gmra.mxu0 %v453
  %v1089 = vpop.f32.mrf.mxu0
  %v1090 = vadd.f32 0.0, %v1089
  %v1091 = vpop.f32.mrf.mxu0
  %v1092 = vadd.f32 0.0, %v1091
  %1093 = vmatmul.bf16.gmra.mxu0 %v456
  %v1094 = vpop.f32.mrf.mxu0
  %v1095 = vadd.f32 0.0, %v1094
  %v1096 = vpop.f32.mrf.mxu0
  %1097 = vdwg.mxu0
  %1098 = vmatpush.bf16.msra.mxu0 0
  %1099 = vmatpush.bf16.msra.mxu0 0
  %1100 = vmatpush.bf16.msra.mxu0 0
  %1101 = vmatpush.bf16.msra.mxu0 0
  %1102 = vmatpush.bf16.msra.mxu0 0
  %1103 = vmatpush.bf16.msra.mxu0 %v357
  %1104 = vmatpush.bf16.msra.mxu0 %v342
  %1105 = vmatpush.bf16.msra.mxu0 %v327
  %1106 = vmatmul.bf16.gmra.mxu0 %v411
  %v1107 = vpop.f32.mrf.mxu0
  %v1108 = vpop.f32.mrf.mxu0
  %v1109 = vadd.f32 0.0, %v1108
  %1110 = vmatmul.bf16.gmra.mxu0 %v414
  %v1111 = vpop.f32.mrf.mxu0
  %v1112 = vadd.f32 0.0, %v1111
  %v1113 = vpop.f32.mrf.mxu0
  %1114 = vmatmul.bf16.gmra.mxu0 %v417
  %v1115 = vpop.f32.mrf.mxu0
  %v1116 = vpop.f32.mrf.mxu0
  %v1117 = vadd.f32 0.0, %v1116
  %1118 = vmatmul.bf16.gmra.mxu0 %v420
  %v1119 = vpop.f32.mrf.mxu0
  %v1120 = vadd.f32 0.0, %v1119
  %v1121 = vpop.f32.mrf.mxu0
  %1122 = vmatmul.bf16.gmra.mxu0 %v423
  %v1123 = vpop.f32.mrf.mxu0
  %v1124 = vpop.f32.mrf.mxu0
  %v1125 = vadd.f32 0.0, %v1124
  %1126 = vmatmul.bf16.gmra.mxu0 %v426
  %v1127 = vpop.f32.mrf.mxu0
  %v1128 = vadd.f32 0.0, %v1127
  %v1129 = vpop.f32.mrf.mxu0
  %1130 = vmatmul.bf16.gmra.mxu0 %v429
  %v1131 = vpop.f32.mrf.mxu0
  %v1132 = vpop.f32.mrf.mxu0
  %v1133 = vadd.f32 0.0, %v1132
  %1134 = vmatmul.bf16.gmra.mxu0 %v432
  %v1135 = vpop.f32.mrf.mxu0
  %v1136 = vadd.f32 0.0, %v1135
  %v1137 = vpop.f32.mrf.mxu0
  %1138 = vmatmul.bf16.gmra.mxu0 %v435
  %v1139 = vpop.f32.mrf.mxu0
  %v1140 = vpop.f32.mrf.mxu0
  %v1141 = vadd.f32 0.0, %v1140
  %1142 = vmatmul.bf16.gmra.mxu0 %v438
  %v1143 = vpop.f32.mrf.mxu0
  %v1144 = vadd.f32 0.0, %v1143
  %v1145 = vpop.f32.mrf.mxu0
  %1146 = vmatmul.bf16.gmra.mxu0 %v441
  %v1147 = vpop.f32.mrf.mxu0
  %v1148 = vpop.f32.mrf.mxu0
  %v1149 = vadd.f32 0.0, %v1148
  %1150 = vmatmul.bf16.gmra.mxu0 %v444
  %v1151 = vpop.f32.mrf.mxu0
  %v1152 = vadd.f32 0.0, %v1151
  %v1153 = vpop.f32.mrf.mxu0
  %1154 = vmatmul.bf16.gmra.mxu0 %v447
  %v1155 = vpop.f32.mrf.mxu0
  %v1156 = vpop.f32.mrf.mxu0
  %v1157 = vadd.f32 0.0, %v1156
  %1158 = vmatmul.bf16.gmra.mxu0 %v450
  %v1159 = vpop.f32.mrf.mxu0
  %v1160 = vadd.f32 0.0, %v1159
  %v1161 = vpop.f32.mrf.mxu0
  %1162 = vmatmul.bf16.gmra.mxu0 %v453
  %v1163 = vpop.f32.mrf.mxu0
  %v1164 = vpop.f32.mrf.mxu0
  %v1165 = vadd.f32 0.0, %v1164
  %1166 = vmatmul.bf16.gmra.mxu0 %v456
  %v1167 = vpop.f32.mrf.mxu0
  %v1168 = vadd.f32 0.0, %v1167
  %v1169 = vpop.f32.mrf.mxu0
  %1170 = vdwg.mxu0
  %1171 = vmatpush.bf16.msra.mxu0 0
  %1172 = vmatpush.bf16.msra.mxu0 0
  %1173 = vmatpush.bf16.msra.mxu0 0
  %1174 = vmatpush.bf16.msra.mxu0 0
  %1175 = vmatpush.bf16.msra.mxu0 0
  %1176 = vmatpush.bf16.msra.mxu0 %v358
  %1177 = vmatpush.bf16.msra.mxu0 %v343
  %1178 = vmatpush.bf16.msra.mxu0 %v328
  %1179 = vmatmul.bf16.gmra.mxu0 %v411
  %v1180 = vpop.f32.mrf.mxu0
  %v1181 = vpop.f32.mrf.mxu0
  %v1182 = vadd.f32 0.0, %v1181
  %1183 = vmatmul.bf16.gmra.mxu0 %v414
  %v1184 = vpop.f32.mrf.mxu0
  %v1185 = vadd.f32 0.0, %v1184
  %v1186 = vpop.f32.mrf.mxu0
  %v1187 = vadd.f32 0.0, %v1186
  %1188 = vmatmul.bf16.gmra.mxu0 %v417
  %v1189 = vpop.f32.mrf.mxu0
  %v1190 = vpop.f32.mrf.mxu0
  %v1191 = vadd.f32 0.0, %v1190
  %1192 = vmatmul.bf16.gmra.mxu0 %v420
  %v1193 = vpop.f32.mrf.mxu0
  %v1194 = vadd.f32 0.0, %v1193
  %v1195 = vpop.f32.mrf.mxu0
  %v1196 = vadd.f32 0.0, %v1195
  %1197 = vmatmul.bf16.gmra.mxu0 %v423
  %v1198 = vpop.f32.mrf.mxu0
  %v1199 = vpop.f32.mrf.mxu0
  %v1200 = vadd.f32 0.0, %v1199
  %1201 = vmatmul.bf16.gmra.mxu0 %v426
  %v1202 = vpop.f32.mrf.mxu0
  %v1203 = vadd.f32 0.0, %v1202
  %v1204 = vpop.f32.mrf.mxu0
  %v1205 = vadd.f32 0.0, %v1204
  %1206 = vmatmul.bf16.gmra.mxu0 %v429
  %v1207 = vpop.f32.mrf.mxu0
  %v1208 = vpop.f32.mrf.mxu0
  %v1209 = vadd.f32 0.0, %v1208
  %1210 = vmatmul.bf16.gmra.mxu0 %v432
  %v1211 = vpop.f32.mrf.mxu0
  %v1212 = vadd.f32 0.0, %v1211
  %v1213 = vpop.f32.mrf.mxu0
  %v1214 = vadd.f32 0.0, %v1213
  %1215 = vmatmul.bf16.gmra.mxu0 %v435
  %v1216 = vpop.f32.mrf.mxu0
  %v1217 = vpop.f32.mrf.mxu0
  %v1218 = vadd.f32 0.0, %v1217
  %1219 = vmatmul.bf16.gmra.mxu0 %v438
  %v1220 = vpop.f32.mrf.mxu0
  %v1221 = vadd.f32 0.0, %v1220
  %v1222 = vpop.f32.mrf.mxu0
  %v1223 = vadd.f32 0.0, %v1222
  %1224 = vmatmul.bf16.gmra.mxu0 %v441
  %v1225 = vpop.f32.mrf.mxu0
  %v1226 = vpop.f32.mrf.mxu0
  %v1227 = vadd.f32 0.0, %v1226
  %1228 = vmatmul.bf16.gmra.mxu0 %v444
  %v1229 = vpop.f32.mrf.mxu0
  %v1230 = vadd.f32 0.0, %v1229
  %v1231 = vpop.f32.mrf.mxu0
  %v1232 = vadd.f32 0.0, %v1231
  %1233 = vmatmul.bf16.gmra.mxu0 %v447
  %v1234 = vpop.f32.mrf.mxu0
  %v1235 = vpop.f32.mrf.mxu0
  %v1236 = vadd.f32 0.0, %v1235
  %1237 = vmatmul.bf16.gmra.mxu0 %v450
  %v1238 = vpop.f32.mrf.mxu0
  %v1239 = vadd.f32 0.0, %v1238
  %v1240 = vpop.f32.mrf.mxu0
  %v1241 = vadd.f32 0.0, %v1240
  %1242 = vmatmul.bf16.gmra.mxu0 %v453
  %v1243 = vpop.f32.mrf.mxu0
  %v1244 = vpop.f32.mrf.mxu0
  %v1245 = vadd.f32 0.0, %v1244
  %1246 = vmatmul.bf16.gmra.mxu0 %v456
  %v1247 = vpop.f32.mrf.mxu0
  %v1248 = vadd.f32 0.0, %v1247
  %v1249 = vpop.f32.mrf.mxu0
  %v1250 = vadd.f32 0.0, %v1249
  %1251 = vdwg.mxu0
  %1252 = vmatpush.bf16.msra.mxu0 0
  %1253 = vmatpush.bf16.msra.mxu0 0
  %1254 = vmatpush.bf16.msra.mxu0 0
  %1255 = vmatpush.bf16.msra.mxu0 0
  %1256 = vmatpush.bf16.msra.mxu0 0
  %1257 = vmatpush.bf16.msra.mxu0 %v359
  %1258 = vmatpush.bf16.msra.mxu0 %v344
  %1259 = vmatpush.bf16.msra.mxu0 %v329
  %1260 = vmatmul.bf16.gmra.mxu0 %v411
  %v1261 = vpop.f32.mrf.mxu0
  %v1262 = vpop.f32.mrf.mxu0
  %v1263 = vadd.f32 0.0, %v1262
  %1264 = vmatmul.bf16.gmra.mxu0 %v414
  %v1265 = vpop.f32.mrf.mxu0
  %v1266 = vadd.f32 0.0, %v1265
  %v1267 = vpop.f32.mrf.mxu0
  %v1268 = vadd.f32 0.0, %v1267
  %1269 = vmatmul.bf16.gmra.mxu0 %v417
  %v1270 = vpop.f32.mrf.mxu0
  %v1271 = vpop.f32.mrf.mxu0
  %v1272 = vadd.f32 0.0, %v1271
  %1273 = vmatmul.bf16.gmra.mxu0 %v420
  %v1274 = vpop.f32.mrf.mxu0
  %v1275 = vadd.f32 0.0, %v1274
  %v1276 = vpop.f32.mrf.mxu0
  %v1277 = vadd.f32 0.0, %v1276
  %1278 = vmatmul.bf16.gmra.mxu0 %v423
  %v1279 = vpop.f32.mrf.mxu0
  %v1280 = vpop.f32.mrf.mxu0
  %v1281 = vadd.f32 0.0, %v1280
  %1282 = vmatmul.bf16.gmra.mxu0 %v426
  %v1283 = vpop.f32.mrf.mxu0
  %v1284 = vadd.f32 0.0, %v1283
  %v1285 = vpop.f32.mrf.mxu0
  %v1286 = vadd.f32 0.0, %v1285
  %1287 = vmatmul.bf16.gmra.mxu0 %v429
  %v1288 = vpop.f32.mrf.mxu0
  %v1289 = vpop.f32.mrf.mxu0
  %v1290 = vadd.f32 0.0, %v1289
  %1291 = vmatmul.bf16.gmra.mxu0 %v432
  %v1292 = vpop.f32.mrf.mxu0
  %v1293 = vadd.f32 0.0, %v1292
  %v1294 = vpop.f32.mrf.mxu0
  %v1295 = vadd.f32 0.0, %v1294
  %1296 = vmatmul.bf16.gmra.mxu0 %v435
  %v1297 = vpop.f32.mrf.mxu0
  %v1298 = vpop.f32.mrf.mxu0
  %v1299 = vadd.f32 0.0, %v1298
  %1300 = vmatmul.bf16.gmra.mxu0 %v438
  %v1301 = vpop.f32.mrf.mxu0
  %v1302 = vadd.f32 0.0, %v1301
  %v1303 = vpop.f32.mrf.mxu0
  %v1304 = vadd.f32 0.0, %v1303
  %1305 = vmatmul.bf16.gmra.mxu0 %v441
  %v1306 = vpop.f32.mrf.mxu0
  %v1307 = vpop.f32.mrf.mxu0
  %v1308 = vadd.f32 0.0, %v1307
  %1309 = vmatmul.bf16.gmra.mxu0 %v444
  %v1310 = vpop.f32.mrf.mxu0
  %v1311 = vadd.f32 0.0, %v1310
  %v1312 = vpop.f32.mrf.mxu0
  %v1313 = vadd.f32 0.0, %v1312
  %1314 = vmatmul.bf16.gmra.mxu0 %v447
  %v1315 = vpop.f32.mrf.mxu0
  %v1316 = vpop.f32.mrf.mxu0
  %v1317 = vadd.f32 0.0, %v1316
  %1318 = vmatmul.bf16.gmra.mxu0 %v450
  %v1319 = vpop.f32.mrf.mxu0
  %v1320 = vadd.f32 0.0, %v1319
  %v1321 = vpop.f32.mrf.mxu0
  %v1322 = vadd.f32 0.0, %v1321
  %1323 = vmatmul.bf16.gmra.mxu0 %v453
  %v1324 = vpop.f32.mrf.mxu0
  %v1325 = vpop.f32.mrf.mxu0
  %v1326 = vadd.f32 0.0, %v1325
  %1327 = vmatmul.bf16.gmra.mxu0 %v456
  %v1328 = vpop.f32.mrf.mxu0
  %v1329 = vadd.f32 0.0, %v1328
  %v1330 = vpop.f32.mrf.mxu0
  %v1331 = vadd.f32 0.0, %v1330
  %1332 = vdwg.mxu0
  %1333 = vmatpush.bf16.msra.mxu0 0
  %1334 = vmatpush.bf16.msra.mxu0 0
  %1335 = vmatpush.bf16.msra.mxu0 0
  %1336 = vmatpush.bf16.msra.mxu0 0
  %1337 = vmatpush.bf16.msra.mxu0 0
  %1338 = vmatpush.bf16.msra.mxu0 %v360
  %1339 = vmatpush.bf16.msra.mxu0 %v345
  %1340 = vmatpush.bf16.msra.mxu0 %v330
  %1341 = vmatmul.bf16.gmra.mxu0 %v411
  %v1342 = vpop.f32.mrf.mxu0
  %v1343 = vpop.f32.mrf.mxu0
  %v1344 = vadd.f32 0.0, %v1343
  %1345 = vmatmul.bf16.gmra.mxu0 %v414
  %v1346 = vpop.f32.mrf.mxu0
  %v1347 = vadd.f32 0.0, %v1346
  %v1348 = vpop.f32.mrf.mxu0
  %v1349 = vadd.f32 0.0, %v1348
  %1350 = vmatmul.bf16.gmra.mxu0 %v417
  %v1351 = vpop.f32.mrf.mxu0
  %v1352 = vpop.f32.mrf.mxu0
  %v1353 = vadd.f32 0.0, %v1352
  %1354 = vmatmul.bf16.gmra.mxu0 %v420
  %v1355 = vpop.f32.mrf.mxu0
  %v1356 = vadd.f32 0.0, %v1355
  %v1357 = vpop.f32.mrf.mxu0
  %v1358 = vadd.f32 0.0, %v1357
  %1359 = vmatmul.bf16.gmra.mxu0 %v423
  %v1360 = vpop.f32.mrf.mxu0
  %v1361 = vpop.f32.mrf.mxu0
  %v1362 = vadd.f32 0.0, %v1361
  %1363 = vmatmul.bf16.gmra.mxu0 %v426
  %v1364 = vpop.f32.mrf.mxu0
  %v1365 = vadd.f32 0.0, %v1364
  %v1366 = vpop.f32.mrf.mxu0
  %v1367 = vadd.f32 0.0, %v1366
  %1368 = vmatmul.bf16.gmra.mxu0 %v429
  %v1369 = vpop.f32.mrf.mxu0
  %v1370 = vpop.f32.mrf.mxu0
  %v1371 = vadd.f32 0.0, %v1370
  %1372 = vmatmul.bf16.gmra.mxu0 %v432
  %v1373 = vpop.f32.mrf.mxu0
  %v1374 = vadd.f32 0.0, %v1373
  %v1375 = vpop.f32.mrf.mxu0
  %v1376 = vadd.f32 0.0, %v1375
  %1377 = vmatmul.bf16.gmra.mxu0 %v435
  %v1378 = vpop.f32.mrf.mxu0
  %v1379 = vpop.f32.mrf.mxu0
  %v1380 = vadd.f32 0.0, %v1379
  %1381 = vmatmul.bf16.gmra.mxu0 %v438
  %v1382 = vpop.f32.mrf.mxu0
  %v1383 = vadd.f32 0.0, %v1382
  %v1384 = vpop.f32.mrf.mxu0
  %v1385 = vadd.f32 0.0, %v1384
  %1386 = vmatmul.bf16.gmra.mxu0 %v441
  %v1387 = vpop.f32.mrf.mxu0
  %v1388 = vpop.f32.mrf.mxu0
  %v1389 = vadd.f32 0.0, %v1388
  %1390 = vmatmul.bf16.gmra.mxu0 %v444
  %v1391 = vpop.f32.mrf.mxu0
  %v1392 = vadd.f32 0.0, %v1391
  %v1393 = vpop.f32.mrf.mxu0
  %v1394 = vadd.f32 0.0, %v1393
  %1395 = vmatmul.bf16.gmra.mxu0 %v447
  %v1396 = vpop.f32.mrf.mxu0
  %v1397 = vpop.f32.mrf.mxu0
  %v1398 = vadd.f32 0.0, %v1397
  %1399 = vmatmul.bf16.gmra.mxu0 %v450
  %v1400 = vpop.f32.mrf.mxu0
  %v1401 = vadd.f32 0.0, %v1400
  %v1402 = vpop.f32.mrf.mxu0
  %v1403 = vadd.f32 0.0, %v1402
  %1404 = vmatmul.bf16.gmra.mxu0 %v453
  %v1405 = vpop.f32.mrf.mxu0
  %v1406 = vpop.f32.mrf.mxu0
  %v1407 = vadd.f32 0.0, %v1406
  %1408 = vmatmul.bf16.gmra.mxu0 %v456
  %v1409 = vpop.f32.mrf.mxu0
  %v1410 = vadd.f32 0.0, %v1409
  %v1411 = vpop.f32.mrf.mxu0
  %v1412 = vadd.f32 0.0, %v1411
  %1413 = vdwg.mxu0
  %1414 = vmatpush.bf16.msra.mxu0 0
  %1415 = vmatpush.bf16.msra.mxu0 0
  %1416 = vmatpush.bf16.msra.mxu0 0
  %1417 = vmatpush.bf16.msra.mxu0 0
  %1418 = vmatpush.bf16.msra.mxu0 0
  %1419 = vmatpush.bf16.msra.mxu0 %v361
  %1420 = vmatpush.bf16.msra.mxu0 %v346
  %1421 = vmatpush.bf16.msra.mxu0 %v331
  %1422 = vmatmul.bf16.gmra.mxu0 %v411
  %v1423 = vpop.f32.mrf.mxu0
  %v1424 = vpop.f32.mrf.mxu0
  %v1425 = vadd.f32 0.0, %v1424
  %1426 = vmatmul.bf16.gmra.mxu0 %v414
  %v1427 = vpop.f32.mrf.mxu0
  %v1428 = vadd.f32 0.0, %v1427
  %v1429 = vpop.f32.mrf.mxu0
  %v1430 = vadd.f32 0.0, %v1429
  %1431 = vmatmul.bf16.gmra.mxu0 %v417
  %v1432 = vpop.f32.mrf.mxu0
  %v1433 = vpop.f32.mrf.mxu0
  %v1434 = vadd.f32 0.0, %v1433
  %1435 = vmatmul.bf16.gmra.mxu0 %v420
  %v1436 = vpop.f32.mrf.mxu0
  %v1437 = vadd.f32 0.0, %v1436
  %v1438 = vpop.f32.mrf.mxu0
  %v1439 = vadd.f32 0.0, %v1438
  %1440 = vmatmul.bf16.gmra.mxu0 %v423
  %v1441 = vpop.f32.mrf.mxu0
  %v1442 = vpop.f32.mrf.mxu0
  %v1443 = vadd.f32 0.0, %v1442
  %1444 = vmatmul.bf16.gmra.mxu0 %v426
  %v1445 = vpop.f32.mrf.mxu0
  %v1446 = vadd.f32 0.0, %v1445
  %v1447 = vpop.f32.mrf.mxu0
  %v1448 = vadd.f32 0.0, %v1447
  %1449 = vmatmul.bf16.gmra.mxu0 %v429
  %v1450 = vpop.f32.mrf.mxu0
  %v1451 = vpop.f32.mrf.mxu0
  %v1452 = vadd.f32 0.0, %v1451
  %1453 = vmatmul.bf16.gmra.mxu0 %v432
  %v1454 = vpop.f32.mrf.mxu0
  %v1455 = vadd.f32 0.0, %v1454
  %v1456 = vpop.f32.mrf.mxu0
  %v1457 = vadd.f32 0.0, %v1456
  %1458 = vmatmul.bf16.gmra.mxu0 %v435
  %v1459 = vpop.f32.mrf.mxu0
  %v1460 = vpop.f32.mrf.mxu0
  %v1461 = vadd.f32 0.0, %v1460
  %1462 = vmatmul.bf16.gmra.mxu0 %v438
  %v1463 = vpop.f32.mrf.mxu0
  %v1464 = vadd.f32 0.0, %v1463
  %v1465 = vpop.f32.mrf.mxu0
  %v1466 = vadd.f32 0.0, %v1465
  %1467 = vmatmul.bf16.gmra.mxu0 %v441
  %v1468 = vpop.f32.mrf.mxu0
  %v1469 = vpop.f32.mrf.mxu0
  %v1470 = vadd.f32 0.0, %v1469
  %1471 = vmatmul.bf16.gmra.mxu0 %v444
  %v1472 = vpop.f32.mrf.mxu0
  %v1473 = vadd.f32 0.0, %v1472
  %v1474 = vpop.f32.mrf.mxu0
  %v1475 = vadd.f32 0.0, %v1474
  %1476 = vmatmul.bf16.gmra.mxu0 %v447
  %v1477 = vpop.f32.mrf.mxu0
  %v1478 = vpop.f32.mrf.mxu0
  %v1479 = vadd.f32 0.0, %v1478
  %1480 = vmatmul.bf16.gmra.mxu0 %v450
  %v1481 = vpop.f32.mrf.mxu0
  %v1482 = vadd.f32 0.0, %v1481
  %v1483 = vpop.f32.mrf.mxu0
  %v1484 = vadd.f32 0.0, %v1483
  %1485 = vmatmul.bf16.gmra.mxu0 %v453
  %v1486 = vpop.f32.mrf.mxu0
  %v1487 = vpop.f32.mrf.mxu0
  %v1488 = vadd.f32 0.0, %v1487
  %1489 = vmatmul.bf16.gmra.mxu0 %v456
  %v1490 = vpop.f32.mrf.mxu0
  %v1491 = vadd.f32 0.0, %v1490
  %v1492 = vpop.f32.mrf.mxu0
  %v1493 = vadd.f32 0.0, %v1492
  %1494 = vdwg.mxu0
  %1495 = vmatpush.bf16.msra.mxu0 0
  %1496 = vmatpush.bf16.msra.mxu0 0
  %1497 = vmatpush.bf16.msra.mxu0 0
  %1498 = vmatpush.bf16.msra.mxu0 0
  %1499 = vmatpush.bf16.msra.mxu0 0
  %1500 = vmatpush.bf16.msra.mxu0 %v362
  %1501 = vmatpush.bf16.msra.mxu0 %v347
  %1502 = vmatpush.bf16.msra.mxu0 %v332
  %1503 = vmatmul.bf16.gmra.mxu0 %v411
  %v1504 = vpop.f32.mrf.mxu0
  %v1505 = vpop.f32.mrf.mxu0
  %v1506 = vadd.f32 0.0, %v1505
  %1507 = vmatmul.bf16.gmra.mxu0 %v414
  %v1508 = vpop.f32.mrf.mxu0
  %v1509 = vadd.f32 0.0, %v1508
  %v1510 = vpop.f32.mrf.mxu0
  %v1511 = vadd.f32 0.0, %v1510
  %1512 = vmatmul.bf16.gmra.mxu0 %v417
  %v1513 = vpop.f32.mrf.mxu0
  %v1514 = vpop.f32.mrf.mxu0
  %v1515 = vadd.f32 0.0, %v1514
  %1516 = vmatmul.bf16.gmra.mxu0 %v420
  %v1517 = vpop.f32.mrf.mxu0
  %v1518 = vadd.f32 0.0, %v1517
  %v1519 = vpop.f32.mrf.mxu0
  %v1520 = vadd.f32 0.0, %v1519
  %1521 = vmatmul.bf16.gmra.mxu0 %v423
  %v1522 = vpop.f32.mrf.mxu0
  %v1523 = vpop.f32.mrf.mxu0
  %v1524 = vadd.f32 0.0, %v1523
  %1525 = vmatmul.bf16.gmra.mxu0 %v426
  %v1526 = vpop.f32.mrf.mxu0
  %v1527 = vadd.f32 0.0, %v1526
  %v1528 = vpop.f32.mrf.mxu0
  %v1529 = vadd.f32 0.0, %v1528
  %1530 = vmatmul.bf16.gmra.mxu0 %v429
  %v1531 = vpop.f32.mrf.mxu0
  %v1532 = vpop.f32.mrf.mxu0
  %v1533 = vadd.f32 0.0, %v1532
  %1534 = vmatmul.bf16.gmra.mxu0 %v432
  %v1535 = vpop.f32.mrf.mxu0
  %v1536 = vadd.f32 0.0, %v1535
  %v1537 = vpop.f32.mrf.mxu0
  %v1538 = vadd.f32 0.0, %v1537
  %1539 = vmatmul.bf16.gmra.mxu0 %v435
  %v1540 = vpop.f32.mrf.mxu0
  %v1541 = vpop.f32.mrf.mxu0
  %v1542 = vadd.f32 0.0, %v1541
  %1543 = vmatmul.bf16.gmra.mxu0 %v438
  %v1544 = vpop.f32.mrf.mxu0
  %v1545 = vadd.f32 0.0, %v1544
  %v1546 = vpop.f32.mrf.mxu0
  %v1547 = vadd.f32 0.0, %v1546
  %1548 = vmatmul.bf16.gmra.mxu0 %v441
  %v1549 = vpop.f32.mrf.mxu0
  %v1550 = vpop.f32.mrf.mxu0
  %v1551 = vadd.f32 0.0, %v1550
  %1552 = vmatmul.bf16.gmra.mxu0 %v444
  %v1553 = vpop.f32.mrf.mxu0
  %v1554 = vadd.f32 0.0, %v1553
  %v1555 = vpop.f32.mrf.mxu0
  %v1556 = vadd.f32 0.0, %v1555
  %1557 = vmatmul.bf16.gmra.mxu0 %v447
  %v1558 = vpop.f32.mrf.mxu0
  %v1559 = vpop.f32.mrf.mxu0
  %v1560 = vadd.f32 0.0, %v1559
  %1561 = vmatmul.bf16.gmra.mxu0 %v450
  %v1562 = vpop.f32.mrf.mxu0
  %v1563 = vadd.f32 0.0, %v1562
  %v1564 = vpop.f32.mrf.mxu0
  %v1565 = vadd.f32 0.0, %v1564
  %1566 = vmatmul.bf16.gmra.mxu0 %v453
  %v1567 = vpop.f32.mrf.mxu0
  %v1568 = vpop.f32.mrf.mxu0
  %v1569 = vadd.f32 0.0, %v1568
  %1570 = vmatmul.bf16.gmra.mxu0 %v456
  %v1571 = vpop.f32.mrf.mxu0
  %v1572 = vadd.f32 0.0, %v1571
  %v1573 = vpop.f32.mrf.mxu0
  %v1574 = vadd.f32 0.0, %v1573
  %1575 = vdwg.mxu0
  %1576 = vmatpush.bf16.msra.mxu0 0
  %1577 = vmatpush.bf16.msra.mxu0 0
  %1578 = vmatpush.bf16.msra.mxu0 0
  %1579 = vmatpush.bf16.msra.mxu0 0
  %1580 = vmatpush.bf16.msra.mxu0 0
  %1581 = vmatpush.bf16.msra.mxu0 %v363
  %1582 = vmatpush.bf16.msra.mxu0 %v348
  %1583 = vmatpush.bf16.msra.mxu0 %v333
  %1584 = vmatmul.bf16.gmra.mxu0 %v411
  %v1585 = vpop.f32.mrf.mxu0
  %v1586 = vpop.f32.mrf.mxu0
  %v1587 = vadd.f32 0.0, %v1586
  %1588 = vmatmul.bf16.gmra.mxu0 %v414
  %v1589 = vpop.f32.mrf.mxu0
  %v1590 = vadd.f32 0.0, %v1589
  %v1591 = vpop.f32.mrf.mxu0
  %v1592 = vadd.f32 0.0, %v1591
  %1593 = vmatmul.bf16.gmra.mxu0 %v417
  %v1594 = vpop.f32.mrf.mxu0
  %v1595 = vpop.f32.mrf.mxu0
  %v1596 = vadd.f32 0.0, %v1595
  %1597 = vmatmul.bf16.gmra.mxu0 %v420
  %v1598 = vpop.f32.mrf.mxu0
  %v1599 = vadd.f32 0.0, %v1598
  %v1600 = vpop.f32.mrf.mxu0
  %v1601 = vadd.f32 0.0, %v1600
  %1602 = vmatmul.bf16.gmra.mxu0 %v423
  %v1603 = vpop.f32.mrf.mxu0
  %v1604 = vpop.f32.mrf.mxu0
  %v1605 = vadd.f32 0.0, %v1604
  %1606 = vmatmul.bf16.gmra.mxu0 %v426
  %v1607 = vpop.f32.mrf.mxu0
  %v1608 = vadd.f32 0.0, %v1607
  %v1609 = vpop.f32.mrf.mxu0
  %v1610 = vadd.f32 0.0, %v1609
  %1611 = vmatmul.bf16.gmra.mxu0 %v429
  %v1612 = vpop.f32.mrf.mxu0
  %v1613 = vpop.f32.mrf.mxu0
  %v1614 = vadd.f32 0.0, %v1613
  %1615 = vmatmul.bf16.gmra.mxu0 %v432
  %v1616 = vpop.f32.mrf.mxu0
  %v1617 = vadd.f32 0.0, %v1616
  %v1618 = vpop.f32.mrf.mxu0
  %v1619 = vadd.f32 0.0, %v1618
  %1620 = vmatmul.bf16.gmra.mxu0 %v435
  %v1621 = vpop.f32.mrf.mxu0
  %v1622 = vpop.f32.mrf.mxu0
  %v1623 = vadd.f32 0.0, %v1622
  %1624 = vmatmul.bf16.gmra.mxu0 %v438
  %v1625 = vpop.f32.mrf.mxu0
  %v1626 = vadd.f32 0.0, %v1625
  %v1627 = vpop.f32.mrf.mxu0
  %v1628 = vadd.f32 0.0, %v1627
  %1629 = vmatmul.bf16.gmra.mxu0 %v441
  %v1630 = vpop.f32.mrf.mxu0
  %v1631 = vpop.f32.mrf.mxu0
  %v1632 = vadd.f32 0.0, %v1631
  %1633 = vmatmul.bf16.gmra.mxu0 %v444
  %v1634 = vpop.f32.mrf.mxu0
  %v1635 = vadd.f32 0.0, %v1634
  %v1636 = vpop.f32.mrf.mxu0
  %v1637 = vadd.f32 0.0, %v1636
  %1638 = vmatmul.bf16.gmra.mxu0 %v447
  %v1639 = vpop.f32.mrf.mxu0
  %v1640 = vpop.f32.mrf.mxu0
  %v1641 = vadd.f32 0.0, %v1640
  %1642 = vmatmul.bf16.gmra.mxu0 %v450
  %v1643 = vpop.f32.mrf.mxu0
  %v1644 = vadd.f32 0.0, %v1643
  %v1645 = vpop.f32.mrf.mxu0
  %v1646 = vadd.f32 0.0, %v1645
  %1647 = vmatmul.bf16.gmra.mxu0 %v453
  %v1648 = vpop.f32.mrf.mxu0
  %v1649 = vpop.f32.mrf.mxu0
  %v1650 = vadd.f32 0.0, %v1649
  %1651 = vmatmul.bf16.gmra.mxu0 %v456
  %v1652 = vpop.f32.mrf.mxu0
  %v1653 = vadd.f32 0.0, %v1652
  %v1654 = vpop.f32.mrf.mxu0
  %v1655 = vadd.f32 0.0, %v1654
  %1656 = vdwg.mxu0
  %vm1681 = vcmask 1046528
  %v1682 = vrot.slane %v541, 1
  %v1683 = vrot.slane %v543, 1
  %v1684 = vsel %vm1681, %v1682, %v1683
  %v1685 = vrot.slane %v546, 1
  %v1686 = vsel %vm1681, %v1683, %v1685
  %v1687 = vrot.slane %v550, 1
  %v1688 = vrot.slane %v552, 1
  %v1689 = vsel %vm1681, %v1687, %v1688
  %v1690 = vrot.slane %v555, 1
  %v1691 = vsel %vm1681, %v1688, %v1690
  %v1692 = vrot.slane %v559, 1
  %v1693 = vrot.slane %v561, 1
  %v1694 = vsel %vm1681, %v1692, %v1693
  %v1695 = vrot.slane %v564, 1
  %v1696 = vsel %vm1681, %v1693, %v1695
  %v1697 = vrot.slane %v568, 1
  %v1698 = vrot.slane %v570, 1
  %v1699 = vsel %vm1681, %v1697, %v1698
  %v1700 = vrot.slane %v573, 1
  %v1701 = vsel %vm1681, %v1698, %v1700
  %v1702 = vrot.slane %v577, 1
  %v1703 = vrot.slane %v579, 1
  %v1704 = vsel %vm1681, %v1702, %v1703
  %v1705 = vrot.slane %v582, 1
  %v1706 = vsel %vm1681, %v1703, %v1705
  %v1707 = vrot.slane %v586, 1
  %v1708 = vrot.slane %v588, 1
  %v1709 = vsel %vm1681, %v1707, %v1708
  %v1710 = vrot.slane %v591, 1
  %v1711 = vsel %vm1681, %v1708, %v1710
  %v1712 = vrot.slane %v595, 1
  %v1713 = vrot.slane %v597, 1
  %v1714 = vsel %vm1681, %v1712, %v1713
  %v1715 = vrot.slane %v600, 1
  %v1716 = vsel %vm1681, %v1713, %v1715
  %v1717 = vrot.slane %v604, 1
  %v1718 = vrot.slane %v606, 1
  %v1719 = vsel %vm1681, %v1717, %v1718
  %v1720 = vrot.slane %v609, 1
  %v1721 = vsel %vm1681, %v1718, %v1720
  %v1738 = vadd.f32 %v468, %v1684
  %v1739 = vadd.f32 %v470, %v1686
  %v1740 = vadd.f32 %v476, %v1689
  %v1741 = vadd.f32 %v478, %v1691
  %v1742 = vadd.f32 %v484, %v1694
  %v1743 = vadd.f32 %v486, %v1696
  %v1744 = vadd.f32 %v492, %v1699
  %v1745 = vadd.f32 %v494, %v1701
  %v1746 = vadd.f32 %v500, %v1704
  %v1747 = vadd.f32 %v502, %v1706
  %v1748 = vadd.f32 %v508, %v1709
  %v1749 = vadd.f32 %v510, %v1711
  %v1750 = vadd.f32 %v516, %v1714
  %v1751 = vadd.f32 %v518, %v1716
  %v1752 = vadd.f32 %v524, %v1719
  %v1753 = vadd.f32 %v526, %v1721
  %v1778 = vrot.slane %v703, 1
  %v1779 = vrot.slane %v705, 1
  %v1780 = vsel %vm1681, %v1778, %v1779
  %v1781 = vrot.slane %v708, 1
  %v1782 = vsel %vm1681, %v1779, %v1781
  %v1783 = vrot.slane %v712, 1
  %v1784 = vrot.slane %v714, 1
  %v1785 = vsel %vm1681, %v1783, %v1784
  %v1786 = vrot.slane %v717, 1
  %v1787 = vsel %vm1681, %v1784, %v1786
  %v1788 = vrot.slane %v721, 1
  %v1789 = vrot.slane %v723, 1
  %v1790 = vsel %vm1681, %v1788, %v1789
  %v1791 = vrot.slane %v726, 1
  %v1792 = vsel %vm1681, %v1789, %v1791
  %v1793 = vrot.slane %v730, 1
  %v1794 = vrot.slane %v732, 1
  %v1795 = vsel %vm1681, %v1793, %v1794
  %v1796 = vrot.slane %v735, 1
  %v1797 = vsel %vm1681, %v1794, %v1796
  %v1798 = vrot.slane %v739, 1
  %v1799 = vrot.slane %v741, 1
  %v1800 = vsel %vm1681, %v1798, %v1799
  %v1801 = vrot.slane %v744, 1
  %v1802 = vsel %vm1681, %v1799, %v1801
  %v1803 = vrot.slane %v748, 1
  %v1804 = vrot.slane %v750, 1
  %v1805 = vsel %vm1681, %v1803, %v1804
  %v1806 = vrot.slane %v753, 1
  %v1807 = vsel %vm1681, %v1804, %v1806
  %v1808 = vrot.slane %v757, 1
  %v1809 = vrot.slane %v759, 1
  %v1810 = vsel %vm1681, %v1808, %v1809
  %v1811 = vrot.slane %v762, 1
  %v1812 = vsel %vm1681, %v1809, %v1811
  %v1813 = vrot.slane %v766, 1
  %v1814 = vrot.slane %v768, 1
  %v1815 = vsel %vm1681, %v1813, %v1814
  %v1816 = vrot.slane %v771, 1
  %v1817 = vsel %vm1681, %v1814, %v1816
  %v1842 = vadd.f32 %v622, %v1780
  %v1843 = vadd.f32 %v624, %v1782
  %v1844 = vadd.f32 %v627, %v1781
  %v1845 = vadd.f32 %v631, %v1785
  %v1846 = vadd.f32 %v633, %v1787
  %v1847 = vadd.f32 %v636, %v1786
  %v1848 = vadd.f32 %v640, %v1790
  %v1849 = vadd.f32 %v642, %v1792
  %v1850 = vadd.f32 %v645, %v1791
  %v1851 = vadd.f32 %v649, %v1795
  %v1852 = vadd.f32 %v651, %v1797
  %v1853 = vadd.f32 %v654, %v1796
  %v1854 = vadd.f32 %v658, %v1800
  %v1855 = vadd.f32 %v660, %v1802
  %v1856 = vadd.f32 %v663, %v1801
  %v1857 = vadd.f32 %v667, %v1805
  %v1858 = vadd.f32 %v669, %v1807
  %v1859 = vadd.f32 %v672, %v1806
  %v1860 = vadd.f32 %v676, %v1810
  %v1861 = vadd.f32 %v678, %v1812
  %v1862 = vadd.f32 %v681, %v1811
  %v1863 = vadd.f32 %v685, %v1815
  %v1864 = vadd.f32 %v687, %v1817
  %v1865 = vadd.f32 %v690, %v1816
  %v1890 = vrot.slane %v865, 1
  %v1891 = vrot.slane %v867, 1
  %v1892 = vsel %vm1681, %v1890, %v1891
  %v1893 = vrot.slane %v870, 1
  %v1894 = vsel %vm1681, %v1891, %v1893
  %v1895 = vrot.slane %v874, 1
  %v1896 = vrot.slane %v876, 1
  %v1897 = vsel %vm1681, %v1895, %v1896
  %v1898 = vrot.slane %v879, 1
  %v1899 = vsel %vm1681, %v1896, %v1898
  %v1900 = vrot.slane %v883, 1
  %v1901 = vrot.slane %v885, 1
  %v1902 = vsel %vm1681, %v1900, %v1901
  %v1903 = vrot.slane %v888, 1
  %v1904 = vsel %vm1681, %v1901, %v1903
  %v1905 = vrot.slane %v892, 1
  %v1906 = vrot.slane %v894, 1
  %v1907 = vsel %vm1681, %v1905, %v1906
  %v1908 = vrot.slane %v897, 1
  %v1909 = vsel %vm1681, %v1906, %v1908
  %v1910 = vrot.slane %v901, 1
  %v1911 = vrot.slane %v903, 1
  %v1912 = vsel %vm1681, %v1910, %v1911
  %v1913 = vrot.slane %v906, 1
  %v1914 = vsel %vm1681, %v1911, %v1913
  %v1915 = vrot.slane %v910, 1
  %v1916 = vrot.slane %v912, 1
  %v1917 = vsel %vm1681, %v1915, %v1916
  %v1918 = vrot.slane %v915, 1
  %v1919 = vsel %vm1681, %v1916, %v1918
  %v1920 = vrot.slane %v919, 1
  %v1921 = vrot.slane %v921, 1
  %v1922 = vsel %vm1681, %v1920, %v1921
  %v1923 = vrot.slane %v924, 1
  %v1924 = vsel %vm1681, %v1921, %v1923
  %v1925 = vrot.slane %v928, 1
  %v1926 = vrot.slane %v930, 1
  %v1927 = vsel %vm1681, %v1925, %v1926
  %v1928 = vrot.slane %v933, 1
  %v1929 = vsel %vm1681, %v1926, %v1928
  %v1954 = vadd.f32 %v784, %v1892
  %v1955 = vadd.f32 %v786, %v1894
  %v1956 = vadd.f32 %v789, %v1893
  %v1957 = vadd.f32 %v793, %v1897
  %v1958 = vadd.f32 %v795, %v1899
  %v1959 = vadd.f32 %v798, %v1898
  %v1960 = vadd.f32 %v802, %v1902
  %v1961 = vadd.f32 %v804, %v1904
  %v1962 = vadd.f32 %v807, %v1903
  %v1963 = vadd.f32 %v811, %v1907
  %v1964 = vadd.f32 %v813, %v1909
  %v1965 = vadd.f32 %v816, %v1908
  %v1966 = vadd.f32 %v820, %v1912
  %v1967 = vadd.f32 %v822, %v1914
  %v1968 = vadd.f32 %v825, %v1913
  %v1969 = vadd.f32 %v829, %v1917
  %v1970 = vadd.f32 %v831, %v1919
  %v1971 = vadd.f32 %v834, %v1918
  %v1972 = vadd.f32 %v838, %v1922
  %v1973 = vadd.f32 %v840, %v1924
  %v1974 = vadd.f32 %v843, %v1923
  %v1975 = vadd.f32 %v847, %v1927
  %v1976 = vadd.f32 %v849, %v1929
  %v1977 = vadd.f32 %v852, %v1928
  %v2002 = vrot.slane %v1027, 1
  %v2003 = vrot.slane %v1029, 1
  %v2004 = vsel %vm1681, %v2002, %v2003
  %v2005 = vrot.slane %v1032, 1
  %v2006 = vsel %vm1681, %v2003, %v2005
  %v2007 = vrot.slane %v1036, 1
  %v2008 = vrot.slane %v1038, 1
  %v2009 = vsel %vm1681, %v2007, %v2008
  %v2010 = vrot.slane %v1041, 1
  %v2011 = vsel %vm1681, %v2008, %v2010
  %v2012 = vrot.slane %v1045, 1
  %v2013 = vrot.slane %v1047, 1
  %v2014 = vsel %vm1681, %v2012, %v2013
  %v2015 = vrot.slane %v1050, 1
  %v2016 = vsel %vm1681, %v2013, %v2015
  %v2017 = vrot.slane %v1054, 1
  %v2018 = vrot.slane %v1056, 1
  %v2019 = vsel %vm1681, %v2017, %v2018
  %v2020 = vrot.slane %v1059, 1
  %v2021 = vsel %vm1681, %v2018, %v2020
  %v2022 = vrot.slane %v1063, 1
  %v2023 = vrot.slane %v1065, 1
  %v2024 = vsel %vm1681, %v2022, %v2023
  %v2025 = vrot.slane %v1068, 1
  %v2026 = vsel %vm1681, %v2023, %v2025
  %v2027 = vrot.slane %v1072, 1
  %v2028 = vrot.slane %v1074, 1
  %v2029 = vsel %vm1681, %v2027, %v2028
  %v2030 = vrot.slane %v1077, 1
  %v2031 = vsel %vm1681, %v2028, %v2030
  %v2032 = vrot.slane %v1081, 1
  %v2033 = vrot.slane %v1083, 1
  %v2034 = vsel %vm1681, %v2032, %v2033
  %v2035 = vrot.slane %v1086, 1
  %v2036 = vsel %vm1681, %v2033, %v2035
  %v2037 = vrot.slane %v1090, 1
  %v2038 = vrot.slane %v1092, 1
  %v2039 = vsel %vm1681, %v2037, %v2038
  %v2040 = vrot.slane %v1095, 1
  %v2041 = vsel %vm1681, %v2038, %v2040
  %v2066 = vadd.f32 %v946, %v2004
  %v2067 = vadd.f32 %v948, %v2006
  %v2068 = vadd.f32 %v951, %v2005
  %v2069 = vadd.f32 %v955, %v2009
  %v2070 = vadd.f32 %v957, %v2011
  %v2071 = vadd.f32 %v960, %v2010
  %v2072 = vadd.f32 %v964, %v2014
  %v2073 = vadd.f32 %v966, %v2016
  %v2074 = vadd.f32 %v969, %v2015
  %v2075 = vadd.f32 %v973, %v2019
  %v2076 = vadd.f32 %v975, %v2021
  %v2077 = vadd.f32 %v978, %v2020
  %v2078 = vadd.f32 %v982, %v2024
  %v2079 = vadd.f32 %v984, %v2026
  %v2080 = vadd.f32 %v987, %v2025
  %v2081 = vadd.f32 %v991, %v2029
  %v2082 = vadd.f32 %v993, %v2031
  %v2083 = vadd.f32 %v996, %v2030
  %v2084 = vadd.f32 %v1000, %v2034
  %v2085 = vadd.f32 %v1002, %v2036
  %v2086 = vadd.f32 %v1005, %v2035
  %v2087 = vadd.f32 %v1009, %v2039
  %v2088 = vadd.f32 %v1011, %v2041
  %v2089 = vadd.f32 %v1014, %v2040
  %v2114 = vrot.slane %v1182, 1
  %v2115 = vrot.slane %v1185, 1
  %v2116 = vsel %vm1681, %v2114, %v2115
  %v2117 = vrot.slane %v1187, 1
  %v2118 = vsel %vm1681, %v2115, %v2117
  %v2119 = vrot.slane %v1191, 1
  %v2120 = vrot.slane %v1194, 1
  %v2121 = vsel %vm1681, %v2119, %v2120
  %v2122 = vrot.slane %v1196, 1
  %v2123 = vsel %vm1681, %v2120, %v2122
  %v2124 = vrot.slane %v1200, 1
  %v2125 = vrot.slane %v1203, 1
  %v2126 = vsel %vm1681, %v2124, %v2125
  %v2127 = vrot.slane %v1205, 1
  %v2128 = vsel %vm1681, %v2125, %v2127
  %v2129 = vrot.slane %v1209, 1
  %v2130 = vrot.slane %v1212, 1
  %v2131 = vsel %vm1681, %v2129, %v2130
  %v2132 = vrot.slane %v1214, 1
  %v2133 = vsel %vm1681, %v2130, %v2132
  %v2134 = vrot.slane %v1218, 1
  %v2135 = vrot.slane %v1221, 1
  %v2136 = vsel %vm1681, %v2134, %v2135
  %v2137 = vrot.slane %v1223, 1
  %v2138 = vsel %vm1681, %v2135, %v2137
  %v2139 = vrot.slane %v1227, 1
  %v2140 = vrot.slane %v1230, 1
  %v2141 = vsel %vm1681, %v2139, %v2140
  %v2142 = vrot.slane %v1232, 1
  %v2143 = vsel %vm1681, %v2140, %v2142
  %v2144 = vrot.slane %v1236, 1
  %v2145 = vrot.slane %v1239, 1
  %v2146 = vsel %vm1681, %v2144, %v2145
  %v2147 = vrot.slane %v1241, 1
  %v2148 = vsel %vm1681, %v2145, %v2147
  %v2149 = vrot.slane %v1245, 1
  %v2150 = vrot.slane %v1248, 1
  %v2151 = vsel %vm1681, %v2149, %v2150
  %v2152 = vrot.slane %v1250, 1
  %v2153 = vsel %vm1681, %v2150, %v2152
  %v2170 = vadd.f32 %v1109, %v2116
  %v2171 = vadd.f32 %v1112, %v2118
  %v2172 = vadd.f32 %v1117, %v2121
  %v2173 = vadd.f32 %v1120, %v2123
  %v2174 = vadd.f32 %v1125, %v2126
  %v2175 = vadd.f32 %v1128, %v2128
  %v2176 = vadd.f32 %v1133, %v2131
  %v2177 = vadd.f32 %v1136, %v2133
  %v2178 = vadd.f32 %v1141, %v2136
  %v2179 = vadd.f32 %v1144, %v2138
  %v2180 = vadd.f32 %v1149, %v2141
  %v2181 = vadd.f32 %v1152, %v2143
  %v2182 = vadd.f32 %v1157, %v2146
  %v2183 = vadd.f32 %v1160, %v2148
  %v2184 = vadd.f32 %v1165, %v2151
  %v2185 = vadd.f32 %v1168, %v2153
  %v2210 = vrot.slane %v1344, 1
  %v2211 = vrot.slane %v1347, 1
  %v2212 = vsel %vm1681, %v2210, %v2211
  %v2213 = vrot.slane %v1349, 1
  %v2214 = vsel %vm1681, %v2211, %v2213
  %v2215 = vrot.slane %v1353, 1
  %v2216 = vrot.slane %v1356, 1
  %v2217 = vsel %vm1681, %v2215, %v2216
  %v2218 = vrot.slane %v1358, 1
  %v2219 = vsel %vm1681, %v2216, %v2218
  %v2220 = vrot.slane %v1362, 1
  %v2221 = vrot.slane %v1365, 1
  %v2222 = vsel %vm1681, %v2220, %v2221
  %v2223 = vrot.slane %v1367, 1
  %v2224 = vsel %vm1681, %v2221, %v2223
  %v2225 = vrot.slane %v1371, 1
  %v2226 = vrot.slane %v1374, 1
  %v2227 = vsel %vm1681, %v2225, %v2226
  %v2228 = vrot.slane %v1376, 1
  %v2229 = vsel %vm1681, %v2226, %v2228
  %v2230 = vrot.slane %v1380, 1
  %v2231 = vrot.slane %v1383, 1
  %v2232 = vsel %vm1681, %v2230, %v2231
  %v2233 = vrot.slane %v1385, 1
  %v2234 = vsel %vm1681, %v2231, %v2233
  %v2235 = vrot.slane %v1389, 1
  %v2236 = vrot.slane %v1392, 1
  %v2237 = vsel %vm1681, %v2235, %v2236
  %v2238 = vrot.slane %v1394, 1
  %v2239 = vsel %vm1681, %v2236, %v2238
  %v2240 = vrot.slane %v1398, 1
  %v2241 = vrot.slane %v1401, 1
  %v2242 = vsel %vm1681, %v2240, %v2241
  %v2243 = vrot.slane %v1403, 1
  %v2244 = vsel %vm1681, %v2241, %v2243
  %v2245 = vrot.slane %v1407, 1
  %v2246 = vrot.slane %v1410, 1
  %v2247 = vsel %vm1681, %v2245, %v2246
  %v2248 = vrot.slane %v1412, 1
  %v2249 = vsel %vm1681, %v2246, %v2248
  %v2274 = vadd.f32 %v1263, %v2212
  %v2275 = vadd.f32 %v1266, %v2214
  %v2276 = vadd.f32 %v1268, %v2213
  %v2277 = vadd.f32 %v1272, %v2217
  %v2278 = vadd.f32 %v1275, %v2219
  %v2279 = vadd.f32 %v1277, %v2218
  %v2280 = vadd.f32 %v1281, %v2222
  %v2281 = vadd.f32 %v1284, %v2224
  %v2282 = vadd.f32 %v1286, %v2223
  %v2283 = vadd.f32 %v1290, %v2227
  %v2284 = vadd.f32 %v1293, %v2229
  %v2285 = vadd.f32 %v1295, %v2228
  %v2286 = vadd.f32 %v1299, %v2232
  %v2287 = vadd.f32 %v1302, %v2234
  %v2288 = vadd.f32 %v1304, %v2233
  %v2289 = vadd.f32 %v1308, %v2237
  %v2290 = vadd.f32 %v1311, %v2239
  %v2291 = vadd.f32 %v1313, %v2238
  %v2292 = vadd.f32 %v1317, %v2242
  %v2293 = vadd.f32 %v1320, %v2244
  %v2294 = vadd.f32 %v1322, %v2243
  %v2295 = vadd.f32 %v1326, %v2247
  %v2296 = vadd.f32 %v1329, %v2249
  %v2297 = vadd.f32 %v1331, %v2248
  %v2322 = vrot.slane %v1506, 1
  %v2323 = vrot.slane %v1509, 1
  %v2324 = vsel %vm1681, %v2322, %v2323
  %v2325 = vrot.slane %v1511, 1
  %v2326 = vsel %vm1681, %v2323, %v2325
  %v2327 = vrot.slane %v1515, 1
  %v2328 = vrot.slane %v1518, 1
  %v2329 = vsel %vm1681, %v2327, %v2328
  %v2330 = vrot.slane %v1520, 1
  %v2331 = vsel %vm1681, %v2328, %v2330
  %v2332 = vrot.slane %v1524, 1
  %v2333 = vrot.slane %v1527, 1
  %v2334 = vsel %vm1681, %v2332, %v2333
  %v2335 = vrot.slane %v1529, 1
  %v2336 = vsel %vm1681, %v2333, %v2335
  %v2337 = vrot.slane %v1533, 1
  %v2338 = vrot.slane %v1536, 1
  %v2339 = vsel %vm1681, %v2337, %v2338
  %v2340 = vrot.slane %v1538, 1
  %v2341 = vsel %vm1681, %v2338, %v2340
  %v2342 = vrot.slane %v1542, 1
  %v2343 = vrot.slane %v1545, 1
  %v2344 = vsel %vm1681, %v2342, %v2343
  %v2345 = vrot.slane %v1547, 1
  %v2346 = vsel %vm1681, %v2343, %v2345
  %v2347 = vrot.slane %v1551, 1
  %v2348 = vrot.slane %v1554, 1
  %v2349 = vsel %vm1681, %v2347, %v2348
  %v2350 = vrot.slane %v1556, 1
  %v2351 = vsel %vm1681, %v2348, %v2350
  %v2352 = vrot.slane %v1560, 1
  %v2353 = vrot.slane %v1563, 1
  %v2354 = vsel %vm1681, %v2352, %v2353
  %v2355 = vrot.slane %v1565, 1
  %v2356 = vsel %vm1681, %v2353, %v2355
  %v2357 = vrot.slane %v1569, 1
  %v2358 = vrot.slane %v1572, 1
  %v2359 = vsel %vm1681, %v2357, %v2358
  %v2360 = vrot.slane %v1574, 1
  %v2361 = vsel %vm1681, %v2358, %v2360
  %v2386 = vadd.f32 %v1425, %v2324
  %v2387 = vadd.f32 %v1428, %v2326
  %v2388 = vadd.f32 %v1430, %v2325
  %v2389 = vadd.f32 %v1434, %v2329
  %v2390 = vadd.f32 %v1437, %v2331
  %v2391 = vadd.f32 %v1439, %v2330
  %v2392 = vadd.f32 %v1443, %v2334
  %v2393 = vadd.f32 %v1446, %v2336
  %v2394 = vadd.f32 %v1448, %v2335
  %v2395 = vadd.f32 %v1452, %v2339
  %v2396 = vadd.f32 %v1455, %v2341
  %v2397 = vadd.f32 %v1457, %v2340
  %v2398 = vadd.f32 %v1461, %v2344
  %v2399 = vadd.f32 %v1464, %v2346
  %v2400 = vadd.f32 %v1466, %v2345
  %v2401 = vadd.f32 %v1470, %v2349
  %v2402 = vadd.f32 %v1473, %v2351
  %v2403 = vadd.f32 %v1475, %v2350
  %v2404 = vadd.f32 %v1479, %v2354
  %v2405 = vadd.f32 %v1482, %v2356
  %v2406 = vadd.f32 %v1484, %v2355
  %v2407 = vadd.f32 %v1488, %v2359
  %v2408 = vadd.f32 %v1491, %v2361
  %v2409 = vadd.f32 %v1493, %v2360
  %vm2434 = vcmask 1045504
  %v2435 = vrot.slane %v1842, 2
  %v2436 = vrot.slane %v1843, 2
  %v2437 = vsel %vm2434, %v2435, %v2436
  %v2438 = vrot.slane %v1844, 2
  %v2439 = vsel %vm2434, %v2436, %v2438
  %v2440 = vrot.slane %v1845, 2
  %v2441 = vrot.slane %v1846, 2
  %v2442 = vsel %vm2434, %v2440, %v2441
  %v2443 = vrot.slane %v1847, 2
  %v2444 = vsel %vm2434, %v2441, %v2443
  %v2445 = vrot.slane %v1848, 2
  %v2446 = vrot.slane %v1849, 2
  %v2447 = vsel %vm2434, %v2445, %v2446
  %v2448 = vrot.slane %v1850, 2
  %v2449 = vsel %vm2434, %v2446, %v2448
  %v2450 = vrot.slane %v1851, 2
  %v2451 = vrot.slane %v1852, 2
  %v2452 = vsel %vm2434, %v2450, %v2451
  %v2453 = vrot.slane %v1853, 2
  %v2454 = vsel %vm2434, %v2451, %v2453
  %v2455 = vrot.slane %v1854, 2
  %v2456 = vrot.slane %v1855, 2
  %v2457 = vsel %vm2434, %v2455, %v2456
  %v2458 = vrot.slane %v1856, 2
  %v2459 = vsel %vm2434, %v2456, %v2458
  %v2460 = vrot.slane %v1857, 2
  %v2461 = vrot.slane %v1858, 2
  %v2462 = vsel %vm2434, %v2460, %v2461
  %v2463 = vrot.slane %v1859, 2
  %v2464 = vsel %vm2434, %v2461, %v2463
  %v2465 = vrot.slane %v1860, 2
  %v2466 = vrot.slane %v1861, 2
  %v2467 = vsel %vm2434, %v2465, %v2466
  %v2468 = vrot.slane %v1862, 2
  %v2469 = vsel %vm2434, %v2466, %v2468
  %v2470 = vrot.slane %v1863, 2
  %v2471 = vrot.slane %v1864, 2
  %v2472 = vsel %vm2434, %v2470, %v2471
  %v2473 = vrot.slane %v1865, 2
  %v2474 = vsel %vm2434, %v2471, %v2473
  %v2491 = vadd.f32 %v1738, %v2437
  %v2492 = vadd.f32 %v1739, %v2439
  %v2493 = vadd.f32 %v1740, %v2442
  %v2494 = vadd.f32 %v1741, %v2444
  %v2495 = vadd.f32 %v1742, %v2447
  %v2496 = vadd.f32 %v1743, %v2449
  %v2497 = vadd.f32 %v1744, %v2452
  %v2498 = vadd.f32 %v1745, %v2454
  %v2499 = vadd.f32 %v1746, %v2457
  %v2500 = vadd.f32 %v1747, %v2459
  %v2501 = vadd.f32 %v1748, %v2462
  %v2502 = vadd.f32 %v1749, %v2464
  %v2503 = vadd.f32 %v1750, %v2467
  %v2504 = vadd.f32 %v1751, %v2469
  %v2505 = vadd.f32 %v1752, %v2472
  %v2506 = vadd.f32 %v1753, %v2474
  %v2531 = vrot.slane %v2066, 2
  %v2532 = vrot.slane %v2067, 2
  %v2533 = vsel %vm2434, %v2531, %v2532
  %v2534 = vrot.slane %v2068, 2
  %v2535 = vsel %vm2434, %v2532, %v2534
  %v2536 = vrot.slane %v2069, 2
  %v2537 = vrot.slane %v2070, 2
  %v2538 = vsel %vm2434, %v2536, %v2537
  %v2539 = vrot.slane %v2071, 2
  %v2540 = vsel %vm2434, %v2537, %v2539
  %v2541 = vrot.slane %v2072, 2
  %v2542 = vrot.slane %v2073, 2
  %v2543 = vsel %vm2434, %v2541, %v2542
  %v2544 = vrot.slane %v2074, 2
  %v2545 = vsel %vm2434, %v2542, %v2544
  %v2546 = vrot.slane %v2075, 2
  %v2547 = vrot.slane %v2076, 2
  %v2548 = vsel %vm2434, %v2546, %v2547
  %v2549 = vrot.slane %v2077, 2
  %v2550 = vsel %vm2434, %v2547, %v2549
  %v2551 = vrot.slane %v2078, 2
  %v2552 = vrot.slane %v2079, 2
  %v2553 = vsel %vm2434, %v2551, %v2552
  %v2554 = vrot.slane %v2080, 2
  %v2555 = vsel %vm2434, %v2552, %v2554
  %v2556 = vrot.slane %v2081, 2
  %v2557 = vrot.slane %v2082, 2
  %v2558 = vsel %vm2434, %v2556, %v2557
  %v2559 = vrot.slane %v2083, 2
  %v2560 = vsel %vm2434, %v2557, %v2559
  %v2561 = vrot.slane %v2084, 2
  %v2562 = vrot.slane %v2085, 2
  %v2563 = vsel %vm2434, %v2561, %v2562
  %v2564 = vrot.slane %v2086, 2
  %v2565 = vsel %vm2434, %v2562, %v2564
  %v2566 = vrot.slane %v2087, 2
  %v2567 = vrot.slane %v2088, 2
  %v2568 = vsel %vm2434, %v2566, %v2567
  %v2569 = vrot.slane %v2089, 2
  %v2570 = vsel %vm2434, %v2567, %v2569
  %v2595 = vadd.f32 %v1954, %v2533
  %v2596 = vadd.f32 %v1955, %v2535
  %v2597 = vadd.f32 %v1956, %v2534
  %v2598 = vadd.f32 %v1957, %v2538
  %v2599 = vadd.f32 %v1958, %v2540
  %v2600 = vadd.f32 %v1959, %v2539
  %v2601 = vadd.f32 %v1960, %v2543
  %v2602 = vadd.f32 %v1961, %v2545
  %v2603 = vadd.f32 %v1962, %v2544
  %v2604 = vadd.f32 %v1963, %v2548
  %v2605 = vadd.f32 %v1964, %v2550
  %v2606 = vadd.f32 %v1965, %v2549
  %v2607 = vadd.f32 %v1966, %v2553
  %v2608 = vadd.f32 %v1967, %v2555
  %v2609 = vadd.f32 %v1968, %v2554
  %v2610 = vadd.f32 %v1969, %v2558
  %v2611 = vadd.f32 %v1970, %v2560
  %v2612 = vadd.f32 %v1971, %v2559
  %v2613 = vadd.f32 %v1972, %v2563
  %v2614 = vadd.f32 %v1973, %v2565
  %v2615 = vadd.f32 %v1974, %v2564
  %v2616 = vadd.f32 %v1975, %v2568
  %v2617 = vadd.f32 %v1976, %v2570
  %v2618 = vadd.f32 %v1977, %v2569
  %v2643 = vrot.slane %v2274, 2
  %v2644 = vrot.slane %v2275, 2
  %v2645 = vsel %vm2434, %v2643, %v2644
  %v2646 = vrot.slane %v2276, 2
  %v2647 = vsel %vm2434, %v2644, %v2646
  %v2648 = vrot.slane %v2277, 2
  %v2649 = vrot.slane %v2278, 2
  %v2650 = vsel %vm2434, %v2648, %v2649
  %v2651 = vrot.slane %v2279, 2
  %v2652 = vsel %vm2434, %v2649, %v2651
  %v2653 = vrot.slane %v2280, 2
  %v2654 = vrot.slane %v2281, 2
  %v2655 = vsel %vm2434, %v2653, %v2654
  %v2656 = vrot.slane %v2282, 2
  %v2657 = vsel %vm2434, %v2654, %v2656
  %v2658 = vrot.slane %v2283, 2
  %v2659 = vrot.slane %v2284, 2
  %v2660 = vsel %vm2434, %v2658, %v2659
  %v2661 = vrot.slane %v2285, 2
  %v2662 = vsel %vm2434, %v2659, %v2661
  %v2663 = vrot.slane %v2286, 2
  %v2664 = vrot.slane %v2287, 2
  %v2665 = vsel %vm2434, %v2663, %v2664
  %v2666 = vrot.slane %v2288, 2
  %v2667 = vsel %vm2434, %v2664, %v2666
  %v2668 = vrot.slane %v2289, 2
  %v2669 = vrot.slane %v2290, 2
  %v2670 = vsel %vm2434, %v2668, %v2669
  %v2671 = vrot.slane %v2291, 2
  %v2672 = vsel %vm2434, %v2669, %v2671
  %v2673 = vrot.slane %v2292, 2
  %v2674 = vrot.slane %v2293, 2
  %v2675 = vsel %vm2434, %v2673, %v2674
  %v2676 = vrot.slane %v2294, 2
  %v2677 = vsel %vm2434, %v2674, %v2676
  %v2678 = vrot.slane %v2295, 2
  %v2679 = vrot.slane %v2296, 2
  %v2680 = vsel %vm2434, %v2678, %v2679
  %v2681 = vrot.slane %v2297, 2
  %v2682 = vsel %vm2434, %v2679, %v2681
  %v2699 = vadd.f32 %v2170, %v2645
  %v2700 = vadd.f32 %v2171, %v2647
  %v2701 = vadd.f32 %v2172, %v2650
  %v2702 = vadd.f32 %v2173, %v2652
  %v2703 = vadd.f32 %v2174, %v2655
  %v2704 = vadd.f32 %v2175, %v2657
  %v2705 = vadd.f32 %v2176, %v2660
  %v2706 = vadd.f32 %v2177, %v2662
  %v2707 = vadd.f32 %v2178, %v2665
  %v2708 = vadd.f32 %v2179, %v2667
  %v2709 = vadd.f32 %v2180, %v2670
  %v2710 = vadd.f32 %v2181, %v2672
  %v2711 = vadd.f32 %v2182, %v2675
  %v2712 = vadd.f32 %v2183, %v2677
  %v2713 = vadd.f32 %v2184, %v2680
  %v2714 = vadd.f32 %v2185, %v2682
  %v2739 = vrot.slane %v1587, 2
  %v2740 = vrot.slane %v1590, 2
  %v2741 = vsel %vm2434, %v2739, %v2740
  %v2742 = vrot.slane %v1592, 2
  %v2743 = vsel %vm2434, %v2740, %v2742
  %v2744 = vrot.slane %v1596, 2
  %v2745 = vrot.slane %v1599, 2
  %v2746 = vsel %vm2434, %v2744, %v2745
  %v2747 = vrot.slane %v1601, 2
  %v2748 = vsel %vm2434, %v2745, %v2747
  %v2749 = vrot.slane %v1605, 2
  %v2750 = vrot.slane %v1608, 2
  %v2751 = vsel %vm2434, %v2749, %v2750
  %v2752 = vrot.slane %v1610, 2
  %v2753 = vsel %vm2434, %v2750, %v2752
  %v2754 = vrot.slane %v1614, 2
  %v2755 = vrot.slane %v1617, 2
  %v2756 = vsel %vm2434, %v2754, %v2755
  %v2757 = vrot.slane %v1619, 2
  %v2758 = vsel %vm2434, %v2755, %v2757
  %v2759 = vrot.slane %v1623, 2
  %v2760 = vrot.slane %v1626, 2
  %v2761 = vsel %vm2434, %v2759, %v2760
  %v2762 = vrot.slane %v1628, 2
  %v2763 = vsel %vm2434, %v2760, %v2762
  %v2764 = vrot.slane %v1632, 2
  %v2765 = vrot.slane %v1635, 2
  %v2766 = vsel %vm2434, %v2764, %v2765
  %v2767 = vrot.slane %v1637, 2
  %v2768 = vsel %vm2434, %v2765, %v2767
  %v2769 = vrot.slane %v1641, 2
  %v2770 = vrot.slane %v1644, 2
  %v2771 = vsel %vm2434, %v2769, %v2770
  %v2772 = vrot.slane %v1646, 2
  %v2773 = vsel %vm2434, %v2770, %v2772
  %v2774 = vrot.slane %v1650, 2
  %v2775 = vrot.slane %v1653, 2
  %v2776 = vsel %vm2434, %v2774, %v2775
  %v2777 = vrot.slane %v1655, 2
  %v2778 = vsel %vm2434, %v2775, %v2777
  %v2803 = vadd.f32 %v2386, %v2741
  %v2804 = vadd.f32 %v2387, %v2743
  %v2805 = vadd.f32 %v2388, %v2742
  %v2806 = vadd.f32 %v2389, %v2746
  %v2807 = vadd.f32 %v2390, %v2748
  %v2808 = vadd.f32 %v2391, %v2747
  %v2809 = vadd.f32 %v2392, %v2751
  %v2810 = vadd.f32 %v2393, %v2753
  %v2811 = vadd.f32 %v2394, %v2752
  %v2812 = vadd.f32 %v2395, %v2756
  %v2813 = vadd.f32 %v2396, %v2758
  %v2814 = vadd.f32 %v2397, %v2757
  %v2815 = vadd.f32 %v2398, %v2761
  %v2816 = vadd.f32 %v2399, %v2763
  %v2817 = vadd.f32 %v2400, %v2762
  %v2818 = vadd.f32 %v2401, %v2766
  %v2819 = vadd.f32 %v2402, %v2768
  %v2820 = vadd.f32 %v2403, %v2767
  %v2821 = vadd.f32 %v2404, %v2771
  %v2822 = vadd.f32 %v2405, %v2773
  %v2823 = vadd.f32 %v2406, %v2772
  %v2824 = vadd.f32 %v2407, %v2776
  %v2825 = vadd.f32 %v2408, %v2778
  %v2826 = vadd.f32 %v2409, %v2777
  %vm2851 = vcmask 1043456
  %v2852 = vrot.slane %v2595, 4
  %v2853 = vrot.slane %v2596, 4
  %v2854 = vsel %vm2851, %v2852, %v2853
  %v2855 = vrot.slane %v2597, 4
  %v2856 = vsel %vm2851, %v2853, %v2855
  %v2857 = vrot.slane %v2598, 4
  %v2858 = vrot.slane %v2599, 4
  %v2859 = vsel %vm2851, %v2857, %v2858
  %v2860 = vrot.slane %v2600, 4
  %v2861 = vsel %vm2851, %v2858, %v2860
  %v2862 = vrot.slane %v2601, 4
  %v2863 = vrot.slane %v2602, 4
  %v2864 = vsel %vm2851, %v2862, %v2863
  %v2865 = vrot.slane %v2603, 4
  %v2866 = vsel %vm2851, %v2863, %v2865
  %v2867 = vrot.slane %v2604, 4
  %v2868 = vrot.slane %v2605, 4
  %v2869 = vsel %vm2851, %v2867, %v2868
  %v2870 = vrot.slane %v2606, 4
  %v2871 = vsel %vm2851, %v2868, %v2870
  %v2872 = vrot.slane %v2607, 4
  %v2873 = vrot.slane %v2608, 4
  %v2874 = vsel %vm2851, %v2872, %v2873
  %v2875 = vrot.slane %v2609, 4
  %v2876 = vsel %vm2851, %v2873, %v2875
  %v2877 = vrot.slane %v2610, 4
  %v2878 = vrot.slane %v2611, 4
  %v2879 = vsel %vm2851, %v2877, %v2878
  %v2880 = vrot.slane %v2612, 4
  %v2881 = vsel %vm2851, %v2878, %v2880
  %v2882 = vrot.slane %v2613, 4
  %v2883 = vrot.slane %v2614, 4
  %v2884 = vsel %vm2851, %v2882, %v2883
  %v2885 = vrot.slane %v2615, 4
  %v2886 = vsel %vm2851, %v2883, %v2885
  %v2887 = vrot.slane %v2616, 4
  %v2888 = vrot.slane %v2617, 4
  %v2889 = vsel %vm2851, %v2887, %v2888
  %v2890 = vrot.slane %v2618, 4
  %v2891 = vsel %vm2851, %v2888, %v2890
  %v2908 = vadd.f32 %v2491, %v2854
  %v2909 = vadd.f32 %v2492, %v2856
  %v2910 = vadd.f32 %v2493, %v2859
  %v2911 = vadd.f32 %v2494, %v2861
  %v2912 = vadd.f32 %v2495, %v2864
  %v2913 = vadd.f32 %v2496, %v2866
  %v2914 = vadd.f32 %v2497, %v2869
  %v2915 = vadd.f32 %v2498, %v2871
  %v2916 = vadd.f32 %v2499, %v2874
  %v2917 = vadd.f32 %v2500, %v2876
  %v2918 = vadd.f32 %v2501, %v2879
  %v2919 = vadd.f32 %v2502, %v2881
  %v2920 = vadd.f32 %v2503, %v2884
  %v2921 = vadd.f32 %v2504, %v2886
  %v2922 = vadd.f32 %v2505, %v2889
  %v2923 = vadd.f32 %v2506, %v2891
  %v2948 = vrot.slane %v2803, 4
  %v2949 = vrot.slane %v2804, 4
  %v2950 = vsel %vm2851, %v2948, %v2949
  %v2951 = vrot.slane %v2805, 4
  %v2952 = vsel %vm2851, %v2949, %v2951
  %v2953 = vrot.slane %v2806, 4
  %v2954 = vrot.slane %v2807, 4
  %v2955 = vsel %vm2851, %v2953, %v2954
  %v2956 = vrot.slane %v2808, 4
  %v2957 = vsel %vm2851, %v2954, %v2956
  %v2958 = vrot.slane %v2809, 4
  %v2959 = vrot.slane %v2810, 4
  %v2960 = vsel %vm2851, %v2958, %v2959
  %v2961 = vrot.slane %v2811, 4
  %v2962 = vsel %vm2851, %v2959, %v2961
  %v2963 = vrot.slane %v2812, 4
  %v2964 = vrot.slane %v2813, 4
  %v2965 = vsel %vm2851, %v2963, %v2964
  %v2966 = vrot.slane %v2814, 4
  %v2967 = vsel %vm2851, %v2964, %v2966
  %v2968 = vrot.slane %v2815, 4
  %v2969 = vrot.slane %v2816, 4
  %v2970 = vsel %vm2851, %v2968, %v2969
  %v2971 = vrot.slane %v2817, 4
  %v2972 = vsel %vm2851, %v2969, %v2971
  %v2973 = vrot.slane %v2818, 4
  %v2974 = vrot.slane %v2819, 4
  %v2975 = vsel %vm2851, %v2973, %v2974
  %v2976 = vrot.slane %v2820, 4
  %v2977 = vsel %vm2851, %v2974, %v2976
  %v2978 = vrot.slane %v2821, 4
  %v2979 = vrot.slane %v2822, 4
  %v2980 = vsel %vm2851, %v2978, %v2979
  %v2981 = vrot.slane %v2823, 4
  %v2982 = vsel %vm2851, %v2979, %v2981
  %v2983 = vrot.slane %v2824, 4
  %v2984 = vrot.slane %v2825, 4
  %v2985 = vsel %vm2851, %v2983, %v2984
  %v2986 = vrot.slane %v2826, 4
  %v2987 = vsel %vm2851, %v2984, %v2986
  %v3004 = vadd.f32 %v2699, %v2950
  %v3005 = vadd.f32 %v2700, %v2952
  %v3006 = vadd.f32 %v2701, %v2955
  %v3007 = vadd.f32 %v2702, %v2957
  %v3008 = vadd.f32 %v2703, %v2960
  %v3009 = vadd.f32 %v2704, %v2962
  %v3010 = vadd.f32 %v2705, %v2965
  %v3011 = vadd.f32 %v2706, %v2967
  %v3012 = vadd.f32 %v2707, %v2970
  %v3013 = vadd.f32 %v2708, %v2972
  %v3014 = vadd.f32 %v2709, %v2975
  %v3015 = vadd.f32 %v2710, %v2977
  %v3016 = vadd.f32 %v2711, %v2980
  %v3017 = vadd.f32 %v2712, %v2982
  %v3018 = vadd.f32 %v2713, %v2985
  %v3019 = vadd.f32 %v2714, %v2987
  %v3020 = vadd.f32 %v2908, %v3004
  %v3021 = vadd.f32 %v2909, %v3005
  %v3022 = vadd.f32 %v2910, %v3006
  %v3023 = vadd.f32 %v2911, %v3007
  %v3024 = vadd.f32 %v2912, %v3008
  %v3025 = vadd.f32 %v2913, %v3009
  %v3026 = vadd.f32 %v2914, %v3010
  %v3027 = vadd.f32 %v2915, %v3011
  %v3028 = vadd.f32 %v2916, %v3012
  %v3029 = vadd.f32 %v2917, %v3013
  %v3030 = vadd.f32 %v2918, %v3014
  %v3031 = vadd.f32 %v2919, %v3015
  %v3032 = vadd.f32 %v2920, %v3016
  %v3033 = vadd.f32 %v2921, %v3017
  %v3034 = vadd.f32 %v2922, %v3018
  %v3035 = vadd.f32 %v2923, %v3019
  %v3036 = vmax.f32 %v3020, 0.0
  %v3037 = vmax.f32 %v3021, 0.0
  %v3038 = vmax.f32 %v3022, 0.0
  %v3039 = vmax.f32 %v3023, 0.0
  %v3040 = vmax.f32 %v3024, 0.0
  %v3041 = vmax.f32 %v3025, 0.0
  %v3042 = vmax.f32 %v3026, 0.0
  %v3043 = vmax.f32 %v3027, 0.0
  %v3044 = vmax.f32 %v3028, 0.0
  %v3045 = vmax.f32 %v3029, 0.0
  %v3046 = vmax.f32 %v3030, 0.0
  %v3047 = vmax.f32 %v3031, 0.0
  %v3048 = vmax.f32 %v3032, 0.0
  %v3049 = vmax.f32 %v3033, 0.0
  %v3050 = vmax.f32 %v3034, 0.0
  %v3051 = vmax.f32 %v3035, 0.0
  %3052 = vst [vmem:[#allocation2] sm:$0xf] 0
  %3053 = vst [vmem:[#allocation2 + $0x4] sm:$0xf] 0
  %3054 = vst [vmem:[#allocation2 + $0x18] sm:$0xf] 0
  %3055 = vst [vmem:[#allocation2 + $0x1c] sm:$0xf] 0
  %3056 = vst [vmem:[#allocation2 + $0x30] sm:$0xf] 0
  %3057 = vst [vmem:[#allocation2 + $0x34] sm:$0xf] 0
  %3058 = vst [vmem:[#allocation2 + $0x48] sm:$0xf] 0
  %3059 = vst [vmem:[#allocation2 + $0x4c] sm:$0xf] 0
  %3060 = vst [vmem:[#allocation2 + $0x60] sm:$0xf] 0
  %3061 = vst [vmem:[#allocation2 + $0x64] sm:$0xf] 0
  %3062 = vst [vmem:[#allocation2 + $0x78] sm:$0xf] 0
  %3063 = vst [vmem:[#allocation2 + $0x7c] sm:$0xf] 0
  %3064 = vst [vmem:[#allocation2 + $0x90] sm:$0xf] 0
  %3065 = vst [vmem:[#allocation2 + $0x94] sm:$0xf] 0
  %3066 = vst [vmem:[#allocation2 + $0xa8] sm:$0xf] 0
  %3067 = vst [vmem:[#allocation2 + $0xac] sm:$0xf] 0
  %3068 = vst [vmem:[#allocation2 + $0x10] sm:$0xf] 0
  %3069 = vst [vmem:[#allocation2 + $0x14] sm:$0xf] 0
  %3070 = vst [vmem:[#allocation2 + $0x28] sm:$0xf] 0
  %3071 = vst [vmem:[#allocation2 + $0x2c] sm:$0xf] 0
  %3072 = vst [vmem:[#allocation2 + $0x40] sm:$0xf] 0
  %3073 = vst [vmem:[#allocation2 + $0x44] sm:$0xf] 0
  %3074 = vst [vmem:[#allocation2 + $0x58] sm:$0xf] 0
  %3075 = vst [vmem:[#allocation2 + $0x5c] sm:$0xf] 0
  %3076 = vst [vmem:[#allocation2 + $0x70] sm:$0xf] 0
  %3077 = vst [vmem:[#allocation2 + $0x74] sm:$0xf] 0
  %3078 = vst [vmem:[#allocation2 + $0x88] sm:$0xf] 0
  %3079 = vst [vmem:[#allocation2 + $0x8c] sm:$0xf] 0
  %3080 = vst [vmem:[#allocation2 + $0xa0] sm:$0xf] 0
  %3081 = vst [vmem:[#allocation2 + $0xa4] sm:$0xf] 0
  %3082 = vst [vmem:[#allocation2 + $0xb8] sm:$0xf] 0
  %3083 = vst [vmem:[#allocation2 + $0xbc] sm:$0xf] 0
  %v3084 = vpack.c.bf16 %v3036, %v3036
  %v3085 = vpack.c.bf16 %v3037, %v3037
  %v3086 = vpack.c.bf16 %v3038, %v3038
  %v3087 = vpack.c.bf16 %v3039, %v3039
  %v3088 = vpack.c.bf16 %v3040, %v3040
  %v3089 = vpack.c.bf16 %v3041, %v3041
  %v3090 = vpack.c.bf16 %v3042, %v3042
  %v3091 = vpack.c.bf16 %v3043, %v3043
  %v3092 = vpack.c.bf16 %v3044, %v3044
  %v3093 = vpack.c.bf16 %v3045, %v3045
  %v3094 = vpack.c.bf16 %v3046, %v3046
  %v3095 = vpack.c.bf16 %v3047, %v3047
  %v3096 = vpack.c.bf16 %v3048, %v3048
  %v3097 = vpack.c.bf16 %v3049, %v3049
  %v3098 = vpack.c.bf16 %v3050, %v3050
  %v3099 = vpack.c.bf16 %v3051, %v3051
  %3100 = vst [vmem:[#allocation2 + $0x8] sm:$0xf] %v3084
  %3101 = vst [vmem:[#allocation2 + $0xc] sm:$0xf] %v3085
  %3102 = vst [vmem:[#allocation2 + $0x20] sm:$0xf] %v3086
  %3103 = vst [vmem:[#allocation2 + $0x24] sm:$0xf] %v3087
  %3104 = vst [vmem:[#allocation2 + $0x38] sm:$0xf] %v3088
  %3105 = vst [vmem:[#allocation2 + $0x3c] sm:$0xf] %v3089
  %3106 = vst [vmem:[#allocation2 + $0x50] sm:$0xf] %v3090
  %3107 = vst [vmem:[#allocation2 + $0x54] sm:$0xf] %v3091
  %3108 = vst [vmem:[#allocation2 + $0x68] sm:$0xf] %v3092
  %3109 = vst [vmem:[#allocation2 + $0x6c] sm:$0xf] %v3093
  %3110 = vst [vmem:[#allocation2 + $0x80] sm:$0xf] %v3094
  %3111 = vst [vmem:[#allocation2 + $0x84] sm:$0xf] %v3095
  %3112 = vst [vmem:[#allocation2 + $0x98] sm:$0xf] %v3096
  %3113 = vst [vmem:[#allocation2 + $0x9c] sm:$0xf] %v3097
  %3114 = vst [vmem:[#allocation2 + $0xb0] sm:$0xf] %v3098
  %3115 = vst [vmem:[#allocation2 + $0xb4] sm:$0xf] %v3099
  %v3116 = vld [vmem:[#allocation2] sm:$0xf]
  %v3117 = vld [vmem:[#allocation2 + $0x4] sm:$0xf]
  %v3118 = vld [vmem:[#allocation2 + $0x8] sm:$0xf]
  %v3119 = vld [vmem:[#allocation2 + $0xc] sm:$0xf]
  %v3120 = vld [vmem:[#allocation2 + $0x10] sm:$0xf]
  %v3121 = vld [vmem:[#allocation2 + $0x14] sm:$0xf]
  %v3122 = vld [vmem:[#allocation2 + $0x18] sm:$0xf]
  %v3123 = vld [vmem:[#allocation2 + $0x1c] sm:$0xf]
  %v3124 = vld [vmem:[#allocation2 + $0x20] sm:$0xf]
  %v3125 = vld [vmem:[#allocation2 + $0x24] sm:$0xf]
  %v3126 = vld [vmem:[#allocation2 + $0x28] sm:$0xf]
  %v3127 = vld [vmem:[#allocation2 + $0x2c] sm:$0xf]
  %v3128 = vld [vmem:[#allocation2 + $0x30] sm:$0xf]
  %v3129 = vld [vmem:[#allocation2 + $0x34] sm:$0xf]
  %v3130 = vld [vmem:[#allocation2 + $0x38] sm:$0xf]
  %v3131 = vld [vmem:[#allocation2 + $0x3c] sm:$0xf]
  %v3132 = vld [vmem:[#allocation2 + $0x40] sm:$0xf]
  %v3133 = vld [vmem:[#allocation2 + $0x44] sm:$0xf]
  %v3134 = vld [vmem:[#allocation2 + $0x48] sm:$0xf]
  %v3135 = vld [vmem:[#allocation2 + $0x4c] sm:$0xf]
  %v3136 = vld [vmem:[#allocation2 + $0x50] sm:$0xf]
  %v3137 = vld [vmem:[#allocation2 + $0x54] sm:$0xf]
  %v3138 = vld [vmem:[#allocation2 + $0x58] sm:$0xf]
  %v3139 = vld [vmem:[#allocation2 + $0x5c] sm:$0xf]
  %v3140 = vld [vmem:[#allocation2 + $0x60] sm:$0xf]
  %v3141 = vld [vmem:[#allocation2 + $0x64] sm:$0xf]
  %v3142 = vld [vmem:[#allocation2 + $0x68] sm:$0xf]
  %v3143 = vld [vmem:[#allocation2 + $0x6c] sm:$0xf]
  %v3144 = vld [vmem:[#allocation2 + $0x70] sm:$0xf]
  %v3145 = vld [vmem:[#allocation2 + $0x74] sm:$0xf]
  %v3146 = vld [vmem:[#allocation2 + $0x78] sm:$0xf]
  %v3147 = vld [vmem:[#allocation2 + $0x7c] sm:$0xf]
  %v3148 = vld [vmem:[#allocation2 + $0x80] sm:$0xf]
  %v3149 = vld [vmem:[#allocation2 + $0x84] sm:$0xf]
  %v3150 = vld [vmem:[#allocation2 + $0x88] sm:$0xf]
  %v3151 = vld [vmem:[#allocation2 + $0x8c] sm:$0xf]
  %v3152 = vld [vmem:[#allocation2 + $0x90] sm:$0xf]
  %v3153 = vld [vmem:[#allocation2 + $0x94] sm:$0xf]
  %v3154 = vld [vmem:[#allocation2 + $0x98] sm:$0xf]
  %v3155 = vld [vmem:[#allocation2 + $0x9c] sm:$0xf]
  %v3156 = vld [vmem:[#allocation2 + $0xa0] sm:$0xf]
  %v3157 = vld [vmem:[#allocation2 + $0xa4] sm:$0xf]
  %v3158 = vld [vmem:[#allocation2 + $0xa8] sm:$0xf]
  %v3159 = vld [vmem:[#allocation2 + $0xac] sm:$0xf]
  %v3160 = vld [vmem:[#allocation2 + $0xb0] sm:$0xf]
  %v3161 = vld [vmem:[#allocation2 + $0xb4] sm:$0xf]
  %v3162 = vld [vmem:[#allocation2 + $0xb8] sm:$0xf]
  %v3163 = vld [vmem:[#allocation2 + $0xbc] sm:$0xf]
  %v3164 = vld [vmem:[%s2] sm:$0xff]
  %v3165 = vld [vmem:[%s2 + $0x8] sm:$0xff]
  %v3166 = vld [vmem:[%s2 + $0x10] sm:$0xf]
  %v3167 = vld [vmem:[%s2 + $0x14] sm:$0xff]
  %v3168 = vld [vmem:[%s2 + $0x1c] sm:$0xff]
  %v3169 = vld [vmem:[%s2 + $0x24] sm:$0xf]
  %v3170 = vld [vmem:[%s2 + $0x28] sm:$0xff]
  %v3171 = vld [vmem:[%s2 + $0x30] sm:$0xff]
  %v3172 = vld [vmem:[%s2 + $0x38] sm:$0xf]
  %v3173 = vld [vmem:[%s2 + $0x3c] sm:$0xff]
  %v3174 = vld [vmem:[%s2 + $0x44] sm:$0xff]
  %v3175 = vld [vmem:[%s2 + $0x4c] sm:$0xf]
  %v3176 = vld [vmem:[%s2 + $0x50] sm:$0xff]
  %v3177 = vld [vmem:[%s2 + $0x58] sm:$0xff]
  %v3178 = vld [vmem:[%s2 + $0x60] sm:$0xf]
  %v3179 = vld [vmem:[%s2 + $0x64] sm:$0xff]
  %v3180 = vld [vmem:[%s2 + $0x6c] sm:$0xff]
  %v3181 = vld [vmem:[%s2 + $0x74] sm:$0xf]
  %v3182 = vld [vmem:[%s2 + $0x78] sm:$0xff]
  %v3183 = vld [vmem:[%s2 + $0x80] sm:$0xff]
  %v3184 = vld [vmem:[%s2 + $0x88] sm:$0xf]
  %v3185 = vld [vmem:[%s2 + $0x8c] sm:$0xff]
  %v3186 = vld [vmem:[%s2 + $0x94] sm:$0xff]
  %v3187 = vld [vmem:[%s2 + $0x9c] sm:$0xf]
  %v3188 = vld [vmem:[%s2 + $0xa0] sm:$0xff]
  %v3189 = vld [vmem:[%s2 + $0xa8] sm:$0xff]
  %v3190 = vld [vmem:[%s2 + $0xb0] sm:$0xf]
  %v3191 = vld [vmem:[%s2 + $0xb4] sm:$0xff]
  %v3192 = vld [vmem:[%s2 + $0xbc] sm:$0xff]
  %v3193 = vld [vmem:[%s2 + $0xc4] sm:$0xf]
  %v3194 = vld [vmem:[%s2 + $0xc8] sm:$0xff]
  %v3195 = vld [vmem:[%s2 + $0xd0] sm:$0xff]
  %v3196 = vld [vmem:[%s2 + $0xd8] sm:$0xf]
  %v3197 = vld [vmem:[%s2 + $0xdc] sm:$0xff]
  %v3198 = vld [vmem:[%s2 + $0xe4] sm:$0xff]
  %v3199 = vld [vmem:[%s2 + $0xec] sm:$0xf]
  %v3200 = vld [vmem:[%s2 + $0xf0] sm:$0xff]
  %v3201 = vld [vmem:[%s2 + $0xf8] sm:$0xff]
  %v3202 = vld [vmem:[%s2 + $0x100] sm:$0xf]
  %v3203 = vld [vmem:[%s2 + $0x104] sm:$0xff]
  %v3204 = vld [vmem:[%s2 + $0x10c] sm:$0xff]
  %v3205 = vld [vmem:[%s2 + $0x114] sm:$0xf]
  %v3206 = vld [vmem:[%s2 + $0x118] sm:$0xff]
  %v3207 = vld [vmem:[%s2 + $0x120] sm:$0xff]
  %v3208 = vld [vmem:[%s2 + $0x128] sm:$0xf]
  %v3209 = vld [vmem:[%s2 + $0x12c] sm:$0xff]
  %v3210 = vld [vmem:[%s2 + $0x134] sm:$0xff]
  %v3211 = vld [vmem:[%s2 + $0x13c] sm:$0xf]
  %v3260 = vunpack.c.l.b16 %v3116
  %v3261 = vunpack.c.l.b16 %v3117
  %v3262 = vunpack.c.l.b16 %v3118
  %v3263 = vunpack.c.l.b16 %v3119
  %v3264 = vunpack.c.l.b16 %v3120
  %v3265 = vunpack.c.l.b16 %v3121
  %v3266 = vunpack.c.l.b16 %v3122
  %v3267 = vunpack.c.l.b16 %v3123
  %v3268 = vunpack.c.l.b16 %v3124
  %v3269 = vunpack.c.l.b16 %v3125
  %v3270 = vunpack.c.l.b16 %v3126
  %v3271 = vunpack.c.l.b16 %v3127
  %v3272 = vunpack.c.l.b16 %v3128
  %v3273 = vunpack.c.l.b16 %v3129
  %v3274 = vunpack.c.l.b16 %v3130
  %v3275 = vunpack.c.l.b16 %v3131
  %v3276 = vunpack.c.l.b16 %v3132
  %v3277 = vunpack.c.l.b16 %v3133
  %v3278 = vunpack.c.l.b16 %v3134
  %v3279 = vunpack.c.l.b16 %v3135
  %v3280 = vunpack.c.l.b16 %v3136
  %v3281 = vunpack.c.l.b16 %v3137
  %v3282 = vunpack.c.l.b16 %v3138
  %v3283 = vunpack.c.l.b16 %v3139
  %v3284 = vunpack.c.l.b16 %v3140
  %v3285 = vunpack.c.l.b16 %v3141
  %v3286 = vunpack.c.l.b16 %v3142
  %v3287 = vunpack.c.l.b16 %v3143
  %v3288 = vunpack.c.l.b16 %v3144
  %v3289 = vunpack.c.l.b16 %v3145
  %v3290 = vunpack.c.l.b16 %v3146
  %v3291 = vunpack.c.l.b16 %v3147
  %v3292 = vunpack.c.l.b16 %v3148
  %v3293 = vunpack.c.l.b16 %v3149
  %v3294 = vunpack.c.l.b16 %v3150
  %v3295 = vunpack.c.l.b16 %v3151
  %v3296 = vunpack.c.l.b16 %v3152
  %v3297 = vunpack.c.l.b16 %v3153
  %v3298 = vunpack.c.l.b16 %v3154
  %v3299 = vunpack.c.l.b16 %v3155
  %v3300 = vunpack.c.l.b16 %v3156
  %v3301 = vunpack.c.l.b16 %v3157
  %v3302 = vunpack.c.l.b16 %v3158
  %v3303 = vunpack.c.l.b16 %v3159
  %v3304 = vunpack.c.l.b16 %v3160
  %v3305 = vunpack.c.l.b16 %v3161
  %v3306 = vunpack.c.l.b16 %v3162
  %v3307 = vunpack.c.l.b16 %v3163
  %v3308 = vpack.c.b16 %v3261, %v3260
  %v3309 = vpack.c.b16 %v3263, %v3262
  %v3310 = vpack.c.b16 %v3265, %v3264
  %v3311 = vpack.c.b16 %v3267, %v3266
  %v3312 = vpack.c.b16 %v3269, %v3268
  %v3313 = vpack.c.b16 %v3271, %v3270
  %v3314 = vpack.c.b16 %v3273, %v3272
  %v3315 = vpack.c.b16 %v3275, %v3274
  %v3316 = vpack.c.b16 %v3277, %v3276
  %v3317 = vpack.c.b16 %v3279, %v3278
  %v3318 = vpack.c.b16 %v3281, %v3280
  %v3319 = vpack.c.b16 %v3283, %v3282
  %v3320 = vpack.c.b16 %v3285, %v3284
  %v3321 = vpack.c.b16 %v3287, %v3286
  %v3322 = vpack.c.b16 %v3289, %v3288
  %v3323 = vpack.c.b16 %v3291, %v3290
  %v3324 = vpack.c.b16 %v3293, %v3292
  %v3325 = vpack.c.b16 %v3295, %v3294
  %v3326 = vpack.c.b16 %v3297, %v3296
  %v3327 = vpack.c.b16 %v3299, %v3298
  %v3328 = vpack.c.b16 %v3301, %v3300
  %v3329 = vpack.c.b16 %v3303, %v3302
  %v3330 = vpack.c.b16 %v3305, %v3304
  %v3331 = vpack.c.b16 %v3307, %v3306
  %v3404 = vunpack.c.l.b16 %v3164
  %v3405 = vunpack.c.h.b16 %v3164
  %v3406 = vunpack.c.l.b16 %v3165
  %v3407 = vunpack.c.h.b16 %v3165
  %v3408 = vunpack.c.l.b16 %v3166
  %v3409 = vunpack.c.l.b16 %v3167
  %v3410 = vunpack.c.h.b16 %v3167
  %v3411 = vunpack.c.l.b16 %v3168
  %v3412 = vunpack.c.h.b16 %v3168
  %v3413 = vunpack.c.l.b16 %v3169
  %v3414 = vunpack.c.l.b16 %v3170
  %v3415 = vunpack.c.h.b16 %v3170
  %v3416 = vunpack.c.l.b16 %v3171
  %v3417 = vunpack.c.h.b16 %v3171
  %v3418 = vunpack.c.l.b16 %v3172
  %v3419 = vunpack.c.l.b16 %v3173
  %v3420 = vunpack.c.h.b16 %v3173
  %v3421 = vunpack.c.l.b16 %v3174
  %v3422 = vunpack.c.h.b16 %v3174
  %v3423 = vunpack.c.l.b16 %v3175
  %v3424 = vunpack.c.l.b16 %v3176
  %v3425 = vunpack.c.h.b16 %v3176
  %v3426 = vunpack.c.l.b16 %v3177
  %v3427 = vunpack.c.h.b16 %v3177
  %v3428 = vunpack.c.l.b16 %v3178
  %v3429 = vunpack.c.l.b16 %v3179
  %v3430 = vunpack.c.h.b16 %v3179
  %v3431 = vunpack.c.l.b16 %v3180
  %v3432 = vunpack.c.h.b16 %v3180
  %v3433 = vunpack.c.l.b16 %v3181
  %v3434 = vunpack.c.l.b16 %v3182
  %v3435 = vunpack.c.h.b16 %v3182
  %v3436 = vunpack.c.l.b16 %v3183
  %v3437 = vunpack.c.h.b16 %v3183
  %v3438 = vunpack.c.l.b16 %v3184
  %v3439 = vunpack.c.l.b16 %v3185
  %v3440 = vunpack.c.h.b16 %v3185
  %v3441 = vunpack.c.l.b16 %v3186
  %v3442 = vunpack.c.h.b16 %v3186
  %v3443 = vunpack.c.l.b16 %v3187
  %v3444 = vunpack.c.l.b16 %v3188
  %v3445 = vunpack.c.h.b16 %v3188
  %v3446 = vunpack.c.l.b16 %v3189
  %v3447 = vunpack.c.h.b16 %v3189
  %v3448 = vunpack.c.l.b16 %v3190
  %v3449 = vunpack.c.l.b16 %v3191
  %v3450 = vunpack.c.h.b16 %v3191
  %v3451 = vunpack.c.l.b16 %v3192
  %v3452 = vunpack.c.h.b16 %v3192
  %v3453 = vunpack.c.l.b16 %v3193
  %v3454 = vunpack.c.l.b16 %v3194
  %v3455 = vunpack.c.h.b16 %v3194
  %v3456 = vunpack.c.l.b16 %v3195
  %v3457 = vunpack.c.h.b16 %v3195
  %v3458 = vunpack.c.l.b16 %v3196
  %v3459 = vunpack.c.l.b16 %v3197
  %v3460 = vunpack.c.h.b16 %v3197
  %v3461 = vunpack.c.l.b16 %v3198
  %v3462 = vunpack.c.h.b16 %v3198
  %v3463 = vunpack.c.l.b16 %v3199
  %v3464 = vunpack.c.l.b16 %v3200
  %v3465 = vunpack.c.h.b16 %v3200
  %v3466 = vunpack.c.l.b16 %v3201
  %v3467 = vunpack.c.h.b16 %v3201
  %v3468 = vunpack.c.l.b16 %v3202
  %v3469 = vunpack.c.l.b16 %v3203
  %v3470 = vunpack.c.h.b16 %v3203
  %v3471 = vunpack.c.l.b16 %v3204
  %v3472 = vunpack.c.h.b16 %v3204
  %v3473 = vunpack.c.l.b16 %v3205
  %v3474 = vunpack.c.l.b16 %v3206
  %v3475 = vunpack.c.h.b16 %v3206
  %v3476 = vunpack.c.l.b16 %v3207
  %v3477 = vunpack.c.h.b16 %v3207
  %v3478 = vunpack.c.l.b16 %v3208
  %v3479 = vunpack.c.l.b16 %v3209
  %v3480 = vunpack.c.h.b16 %v3209
  %v3481 = vunpack.c.l.b16 %v3210
  %v3482 = vunpack.c.h.b16 %v3210
  %v3483 = vunpack.c.l.b16 %v3211
  %v3484 = vpack.c.b16 %v3409, %v3404
  %v3485 = vpack.c.b16 %v3410, %v3405
  %v3486 = vpack.c.b16 %v3411, %v3406
  %v3487 = vpack.c.b16 %v3412, %v3407
  %v3488 = vpack.c.b16 %v3413, %v3408
  %v3489 = vpack.c.b16 %v3419, %v3414
  %v3490 = vpack.c.b16 %v3420, %v3415
  %v3491 = vpack.c.b16 %v3421, %v3416
  %v3492 = vpack.c.b16 %v3422, %v3417
  %v3493 = vpack.c.b16 %v3423, %v3418
  %v3494 = vpack.c.b16 %v3429, %v3424
  %v3495 = vpack.c.b16 %v3430, %v3425
  %v3496 = vpack.c.b16 %v3431, %v3426
  %v3497 = vpack.c.b16 %v3432, %v3427
  %v3498 = vpack.c.b16 %v3433, %v3428
  %v3499 = vpack.c.b16 %v3439, %v3434
  %v3500 = vpack.c.b16 %v3440, %v3435
  %v3501 = vpack.c.b16 %v3441, %v3436
  %v3502 = vpack.c.b16 %v3442, %v3437
  %v3503 = vpack.c.b16 %v3443, %v3438
  %v3504 = vpack.c.b16 %v3449, %v3444
  %v3505 = vpack.c.b16 %v3450, %v3445
  %v3506 = vpack.c.b16 %v3451, %v3446
  %v3507 = vpack.c.b16 %v3452, %v3447
  %v3508 = vpack.c.b16 %v3453, %v3448
  %v3509 = vpack.c.b16 %v3459, %v3454
  %v3510 = vpack.c.b16 %v3460, %v3455
  %v3511 = vpack.c.b16 %v3461, %v3456
  %v3512 = vpack.c.b16 %v3462, %v3457
  %v3513 = vpack.c.b16 %v3463, %v3458
  %v3514 = vpack.c.b16 %v3469, %v3464
  %v3515 = vpack.c.b16 %v3470, %v3465
  %v3516 = vpack.c.b16 %v3471, %v3466
  %v3517 = vpack.c.b16 %v3472, %v3467
  %v3518 = vpack.c.b16 %v3473, %v3468
  %v3519 = vpack.c.b16 %v3479, %v3474
  %v3520 = vpack.c.b16 %v3480, %v3475
  %v3521 = vpack.c.b16 %v3481, %v3476
  %v3522 = vpack.c.b16 %v3482, %v3477
  %v3523 = vpack.c.b16 %v3483, %v3478
  %3564 = vmatpush.bf16.msra.mxu0 %v3519
  %3565 = vmatpush.bf16.msra.mxu0 %v3514
  %3566 = vmatpush.bf16.msra.mxu0 %v3509
  %3567 = vmatpush.bf16.msra.mxu0 %v3504
  %3568 = vmatpush.bf16.msra.mxu0 %v3499
  %3569 = vmatpush.bf16.msra.mxu0 %v3494
  %3570 = vmatpush.bf16.msra.mxu0 %v3489
  %3571 = vmatpush.bf16.msra.mxu0 %v3484
  %3572 = vmatmul.bf16.gmra.mxu0 %v3308
  %v3573 = vpop.f32.mrf.mxu0
  %v3574 = vpop.f32.mrf.mxu0
  %v3575 = vadd.f32 0.0, %v3574
  %3576 = vmatmul.bf16.gmra.mxu0 %v3309
  %v3577 = vpop.f32.mrf.mxu0
  %v3578 = vadd.f32 0.0, %v3577
  %v3579 = vpop.f32.mrf.mxu0
  %v3580 = vadd.f32 0.0, %v3579
  %3581 = vmatmul.bf16.gmra.mxu0 %v3310
  %v3582 = vpop.f32.mrf.mxu0
  %v3583 = vpop.f32.mrf.mxu0
  %3584 = vmatmul.bf16.gmra.mxu0 %v3311
  %v3585 = vpop.f32.mrf.mxu0
  %v3586 = vpop.f32.mrf.mxu0
  %v3587 = vadd.f32 0.0, %v3586
  %3588 = vmatmul.bf16.gmra.mxu0 %v3312
  %v3589 = vpop.f32.mrf.mxu0
  %v3590 = vadd.f32 0.0, %v3589
  %v3591 = vpop.f32.mrf.mxu0
  %v3592 = vadd.f32 0.0, %v3591
  %3593 = vmatmul.bf16.gmra.mxu0 %v3313
  %v3594 = vpop.f32.mrf.mxu0
  %v3595 = vpop.f32.mrf.mxu0
  %3596 = vmatmul.bf16.gmra.mxu0 %v3314
  %v3597 = vpop.f32.mrf.mxu0
  %v3598 = vpop.f32.mrf.mxu0
  %v3599 = vadd.f32 0.0, %v3598
  %3600 = vmatmul.bf16.gmra.mxu0 %v3315
  %v3601 = vpop.f32.mrf.mxu0
  %v3602 = vadd.f32 0.0, %v3601
  %v3603 = vpop.f32.mrf.mxu0
  %v3604 = vadd.f32 0.0, %v3603
  %3605 = vmatmul.bf16.gmra.mxu0 %v3316
  %v3606 = vpop.f32.mrf.mxu0
  %v3607 = vpop.f32.mrf.mxu0
  %3608 = vmatmul.bf16.gmra.mxu0 %v3317
  %v3609 = vpop.f32.mrf.mxu0
  %v3610 = vpop.f32.mrf.mxu0
  %v3611 = vadd.f32 0.0, %v3610
  %3612 = vmatmul.bf16.gmra.mxu0 %v3318
  %v3613 = vpop.f32.mrf.mxu0
  %v3614 = vadd.f32 0.0, %v3613
  %v3615 = vpop.f32.mrf.mxu0
  %v3616 = vadd.f32 0.0, %v3615
  %3617 = vmatmul.bf16.gmra.mxu0 %v3319
  %v3618 = vpop.f32.mrf.mxu0
  %v3619 = vpop.f32.mrf.mxu0
  %3620 = vmatmul.bf16.gmra.mxu0 %v3320
  %v3621 = vpop.f32.mrf.mxu0
  %v3622 = vpop.f32.mrf.mxu0
  %v3623 = vadd.f32 0.0, %v3622
  %3624 = vmatmul.bf16.gmra.mxu0 %v3321
  %v3625 = vpop.f32.mrf.mxu0
  %v3626 = vadd.f32 0.0, %v3625
  %v3627 = vpop.f32.mrf.mxu0
  %v3628 = vadd.f32 0.0, %v3627
  %3629 = vmatmul.bf16.gmra.mxu0 %v3322
  %v3630 = vpop.f32.mrf.mxu0
  %v3631 = vpop.f32.mrf.mxu0
  %3632 = vmatmul.bf16.gmra.mxu0 %v3323
  %v3633 = vpop.f32.mrf.mxu0
  %v3634 = vpop.f32.mrf.mxu0
  %v3635 = vadd.f32 0.0, %v3634
  %3636 = vmatmul.bf16.gmra.mxu0 %v3324
  %v3637 = vpop.f32.mrf.mxu0
  %v3638 = vadd.f32 0.0, %v3637
  %v3639 = vpop.f32.mrf.mxu0
  %v3640 = vadd.f32 0.0, %v3639
  %3641 = vmatmul.bf16.gmra.mxu0 %v3325
  %v3642 = vpop.f32.mrf.mxu0
  %v3643 = vpop.f32.mrf.mxu0
  %3644 = vmatmul.bf16.gmra.mxu0 %v3326
  %v3645 = vpop.f32.mrf.mxu0
  %v3646 = vpop.f32.mrf.mxu0
  %v3647 = vadd.f32 0.0, %v3646
  %3648 = vmatmul.bf16.gmra.mxu0 %v3327
  %v3649 = vpop.f32.mrf.mxu0
  %v3650 = vadd.f32 0.0, %v3649
  %v3651 = vpop.f32.mrf.mxu0
  %v3652 = vadd.f32 0.0, %v3651
  %3653 = vmatmul.bf16.gmra.mxu0 %v3328
  %v3654 = vpop.f32.mrf.mxu0
  %v3655 = vpop.f32.mrf.mxu0
  %3656 = vmatmul.bf16.gmra.mxu0 %v3329
  %v3657 = vpop.f32.mrf.mxu0
  %v3658 = vpop.f32.mrf.mxu0
  %v3659 = vadd.f32 0.0, %v3658
  %3660 = vmatmul.bf16.gmra.mxu0 %v3330
  %v3661 = vpop.f32.mrf.mxu0
  %v3662 = vadd.f32 0.0, %v3661
  %v3663 = vpop.f32.mrf.mxu0
  %v3664 = vadd.f32 0.0, %v3663
  %3665 = vmatmul.bf16.gmra.mxu0 %v3331
  %v3666 = vpop.f32.mrf.mxu0
  %v3667 = vpop.f32.mrf.mxu0
  %3668 = vdwg.mxu0
  %3669 = vmatpush.bf16.msra.mxu0 %v3520
  %3670 = vmatpush.bf16.msra.mxu0 %v3515
  %3671 = vmatpush.bf16.msra.mxu0 %v3510
  %3672 = vmatpush.bf16.msra.mxu0 %v3505
  %3673 = vmatpush.bf16.msra.mxu0 %v3500
  %3674 = vmatpush.bf16.msra.mxu0 %v3495
  %3675 = vmatpush.bf16.msra.mxu0 %v3490
  %3676 = vmatpush.bf16.msra.mxu0 %v3485
  %3677 = vmatmul.bf16.gmra.mxu0 %v3308
  %v3678 = vpop.f32.mrf.mxu0
  %v3679 = vpop.f32.mrf.mxu0
  %v3680 = vadd.f32 0.0, %v3679
  %3681 = vmatmul.bf16.gmra.mxu0 %v3309
  %v3682 = vpop.f32.mrf.mxu0
  %v3683 = vadd.f32 0.0, %v3682
  %v3684 = vpop.f32.mrf.mxu0
  %v3685 = vadd.f32 0.0, %v3684
  %3686 = vmatmul.bf16.gmra.mxu0 %v3310
  %v3687 = vpop.f32.mrf.mxu0
  %v3688 = vpop.f32.mrf.mxu0
  %3689 = vmatmul.bf16.gmra.mxu0 %v3311
  %v3690 = vpop.f32.mrf.mxu0
  %v3691 = vpop.f32.mrf.mxu0
  %v3692 = vadd.f32 0.0, %v3691
  %3693 = vmatmul.bf16.gmra.mxu0 %v3312
  %v3694 = vpop.f32.mrf.mxu0
  %v3695 = vadd.f32 0.0, %v3694
  %v3696 = vpop.f32.mrf.mxu0
  %v3697 = vadd.f32 0.0, %v3696
  %3698 = vmatmul.bf16.gmra.mxu0 %v3313
  %v3699 = vpop.f32.mrf.mxu0
  %v3700 = vpop.f32.mrf.mxu0
  %3701 = vmatmul.bf16.gmra.mxu0 %v3314
  %v3702 = vpop.f32.mrf.mxu0
  %v3703 = vpop.f32.mrf.mxu0
  %v3704 = vadd.f32 0.0, %v3703
  %3705 = vmatmul.bf16.gmra.mxu0 %v3315
  %v3706 = vpop.f32.mrf.mxu0
  %v3707 = vadd.f32 0.0, %v3706
  %v3708 = vpop.f32.mrf.mxu0
  %v3709 = vadd.f32 0.0, %v3708
  %3710 = vmatmul.bf16.gmra.mxu0 %v3316
  %v3711 = vpop.f32.mrf.mxu0
  %v3712 = vpop.f32.mrf.mxu0
  %3713 = vmatmul.bf16.gmra.mxu0 %v3317
  %v3714 = vpop.f32.mrf.mxu0
  %v3715 = vpop.f32.mrf.mxu0
  %v3716 = vadd.f32 0.0, %v3715
  %3717 = vmatmul.bf16.gmra.mxu0 %v3318
  %v3718 = vpop.f32.mrf.mxu0
  %v3719 = vadd.f32 0.0, %v3718
  %v3720 = vpop.f32.mrf.mxu0
  %v3721 = vadd.f32 0.0, %v3720
  %3722 = vmatmul.bf16.gmra.mxu0 %v3319
  %v3723 = vpop.f32.mrf.mxu0
  %v3724 = vpop.f32.mrf.mxu0
  %3725 = vmatmul.bf16.gmra.mxu0 %v3320
  %v3726 = vpop.f32.mrf.mxu0
  %v3727 = vpop.f32.mrf.mxu0
  %v3728 = vadd.f32 0.0, %v3727
  %3729 = vmatmul.bf16.gmra.mxu0 %v3321
  %v3730 = vpop.f32.mrf.mxu0
  %v3731 = vadd.f32 0.0, %v3730
  %v3732 = vpop.f32.mrf.mxu0
  %v3733 = vadd.f32 0.0, %v3732
  %3734 = vmatmul.bf16.gmra.mxu0 %v3322
  %v3735 = vpop.f32.mrf.mxu0
  %v3736 = vpop.f32.mrf.mxu0
  %3737 = vmatmul.bf16.gmra.mxu0 %v3323
  %v3738 = vpop.f32.mrf.mxu0
  %v3739 = vpop.f32.mrf.mxu0
  %v3740 = vadd.f32 0.0, %v3739
  %3741 = vmatmul.bf16.gmra.mxu0 %v3324
  %v3742 = vpop.f32.mrf.mxu0
  %v3743 = vadd.f32 0.0, %v3742
  %v3744 = vpop.f32.mrf.mxu0
  %v3745 = vadd.f32 0.0, %v3744
  %3746 = vmatmul.bf16.gmra.mxu0 %v3325
  %v3747 = vpop.f32.mrf.mxu0
  %v3748 = vpop.f32.mrf.mxu0
  %3749 = vmatmul.bf16.gmra.mxu0 %v3326
  %v3750 = vpop.f32.mrf.mxu0
  %v3751 = vpop.f32.mrf.mxu0
  %v3752 = vadd.f32 0.0, %v3751
  %3753 = vmatmul.bf16.gmra.mxu0 %v3327
  %v3754 = vpop.f32.mrf.mxu0
  %v3755 = vadd.f32 0.0, %v3754
  %v3756 = vpop.f32.mrf.mxu0
  %v3757 = vadd.f32 0.0, %v3756
  %3758 = vmatmul.bf16.gmra.mxu0 %v3328
  %v3759 = vpop.f32.mrf.mxu0
  %v3760 = vpop.f32.mrf.mxu0
  %3761 = vmatmul.bf16.gmra.mxu0 %v3329
  %v3762 = vpop.f32.mrf.mxu0
  %v3763 = vpop.f32.mrf.mxu0
  %v3764 = vadd.f32 0.0, %v3763
  %3765 = vmatmul.bf16.gmra.mxu0 %v3330
  %v3766 = vpop.f32.mrf.mxu0
  %v3767 = vadd.f32 0.0, %v3766
  %v3768 = vpop.f32.mrf.mxu0
  %v3769 = vadd.f32 0.0, %v3768
  %3770 = vmatmul.bf16.gmra.mxu0 %v3331
  %v3771 = vpop.f32.mrf.mxu0
  %v3772 = vpop.f32.mrf.mxu0
  %3773 = vdwg.mxu0
  %3774 = vmatpush.bf16.msra.mxu0 %v3521
  %3775 = vmatpush.bf16.msra.mxu0 %v3516
  %3776 = vmatpush.bf16.msra.mxu0 %v3511
  %3777 = vmatpush.bf16.msra.mxu0 %v3506
  %3778 = vmatpush.bf16.msra.mxu0 %v3501
  %3779 = vmatpush.bf16.msra.mxu0 %v3496
  %3780 = vmatpush.bf16.msra.mxu0 %v3491
  %3781 = vmatpush.bf16.msra.mxu0 %v3486
  %3782 = vmatmul.bf16.gmra.mxu0 %v3308
  %v3783 = vpop.f32.mrf.mxu0
  %v3784 = vpop.f32.mrf.mxu0
  %3785 = vmatmul.bf16.gmra.mxu0 %v3309
  %v3786 = vpop.f32.mrf.mxu0
  %v3787 = vadd.f32 0.0, %v3786
  %v3788 = vpop.f32.mrf.mxu0
  %v3789 = vadd.f32 0.0, %v3788
  %3790 = vmatmul.bf16.gmra.mxu0 %v3310
  %v3791 = vpop.f32.mrf.mxu0
  %v3792 = vpop.f32.mrf.mxu0
  %3793 = vmatmul.bf16.gmra.mxu0 %v3311
  %v3794 = vpop.f32.mrf.mxu0
  %v3795 = vpop.f32.mrf.mxu0
  %3796 = vmatmul.bf16.gmra.mxu0 %v3312
  %v3797 = vpop.f32.mrf.mxu0
  %v3798 = vadd.f32 0.0, %v3797
  %v3799 = vpop.f32.mrf.mxu0
  %v3800 = vadd.f32 0.0, %v3799
  %3801 = vmatmul.bf16.gmra.mxu0 %v3313
  %v3802 = vpop.f32.mrf.mxu0
  %v3803 = vpop.f32.mrf.mxu0
  %3804 = vmatmul.bf16.gmra.mxu0 %v3314
  %v3805 = vpop.f32.mrf.mxu0
  %v3806 = vpop.f32.mrf.mxu0
  %3807 = vmatmul.bf16.gmra.mxu0 %v3315
  %v3808 = vpop.f32.mrf.mxu0
  %v3809 = vadd.f32 0.0, %v3808
  %v3810 = vpop.f32.mrf.mxu0
  %v3811 = vadd.f32 0.0, %v3810
  %3812 = vmatmul.bf16.gmra.mxu0 %v3316
  %v3813 = vpop.f32.mrf.mxu0
  %v3814 = vpop.f32.mrf.mxu0
  %3815 = vmatmul.bf16.gmra.mxu0 %v3317
  %v3816 = vpop.f32.mrf.mxu0
  %v3817 = vpop.f32.mrf.mxu0
  %3818 = vmatmul.bf16.gmra.mxu0 %v3318
  %v3819 = vpop.f32.mrf.mxu0
  %v3820 = vadd.f32 0.0, %v3819
  %v3821 = vpop.f32.mrf.mxu0
  %v3822 = vadd.f32 0.0, %v3821
  %3823 = vmatmul.bf16.gmra.mxu0 %v3319
  %v3824 = vpop.f32.mrf.mxu0
  %v3825 = vpop.f32.mrf.mxu0
  %3826 = vmatmul.bf16.gmra.mxu0 %v3320
  %v3827 = vpop.f32.mrf.mxu0
  %v3828 = vpop.f32.mrf.mxu0
  %3829 = vmatmul.bf16.gmra.mxu0 %v3321
  %v3830 = vpop.f32.mrf.mxu0
  %v3831 = vadd.f32 0.0, %v3830
  %v3832 = vpop.f32.mrf.mxu0
  %v3833 = vadd.f32 0.0, %v3832
  %3834 = vmatmul.bf16.gmra.mxu0 %v3322
  %v3835 = vpop.f32.mrf.mxu0
  %v3836 = vpop.f32.mrf.mxu0
  %3837 = vmatmul.bf16.gmra.mxu0 %v3323
  %v3838 = vpop.f32.mrf.mxu0
  %v3839 = vpop.f32.mrf.mxu0
  %3840 = vmatmul.bf16.gmra.mxu0 %v3324
  %v3841 = vpop.f32.mrf.mxu0
  %v3842 = vadd.f32 0.0, %v3841
  %v3843 = vpop.f32.mrf.mxu0
  %v3844 = vadd.f32 0.0, %v3843
  %3845 = vmatmul.bf16.gmra.mxu0 %v3325
  %v3846 = vpop.f32.mrf.mxu0
  %v3847 = vpop.f32.mrf.mxu0
  %3848 = vmatmul.bf16.gmra.mxu0 %v3326
  %v3849 = vpop.f32.mrf.mxu0
  %v3850 = vpop.f32.mrf.mxu0
  %3851 = vmatmul.bf16.gmra.mxu0 %v3327
  %v3852 = vpop.f32.mrf.mxu0
  %v3853 = vadd.f32 0.0, %v3852
  %v3854 = vpop.f32.mrf.mxu0
  %v3855 = vadd.f32 0.0, %v3854
  %3856 = vmatmul.bf16.gmra.mxu0 %v3328
  %v3857 = vpop.f32.mrf.mxu0
  %v3858 = vpop.f32.mrf.mxu0
  %3859 = vmatmul.bf16.gmra.mxu0 %v3329
  %v3860 = vpop.f32.mrf.mxu0
  %v3861 = vpop.f32.mrf.mxu0
  %3862 = vmatmul.bf16.gmra.mxu0 %v3330
  %v3863 = vpop.f32.mrf.mxu0
  %v3864 = vadd.f32 0.0, %v3863
  %v3865 = vpop.f32.mrf.mxu0
  %v3866 = vadd.f32 0.0, %v3865
  %3867 = vmatmul.bf16.gmra.mxu0 %v3331
  %v3868 = vpop.f32.mrf.mxu0
  %v3869 = vpop.f32.mrf.mxu0
  %3870 = vdwg.mxu0
  %3871 = vmatpush.bf16.msra.mxu0 %v3522
  %3872 = vmatpush.bf16.msra.mxu0 %v3517
  %3873 = vmatpush.bf16.msra.mxu0 %v3512
  %3874 = vmatpush.bf16.msra.mxu0 %v3507
  %3875 = vmatpush.bf16.msra.mxu0 %v3502
  %3876 = vmatpush.bf16.msra.mxu0 %v3497
  %3877 = vmatpush.bf16.msra.mxu0 %v3492
  %3878 = vmatpush.bf16.msra.mxu0 %v3487
  %3879 = vmatmul.bf16.gmra.mxu0 %v3308
  %v3880 = vpop.f32.mrf.mxu0
  %v3881 = vpop.f32.mrf.mxu0
  %3882 = vmatmul.bf16.gmra.mxu0 %v3309
  %v3883 = vpop.f32.mrf.mxu0
  %v3884 = vadd.f32 0.0, %v3883
  %v3885 = vpop.f32.mrf.mxu0
  %v3886 = vadd.f32 0.0, %v3885
  %3887 = vmatmul.bf16.gmra.mxu0 %v3310
  %v3888 = vpop.f32.mrf.mxu0
  %v3889 = vadd.f32 0.0, %v3888
  %v3890 = vpop.f32.mrf.mxu0
  %3891 = vmatmul.bf16.gmra.mxu0 %v3311
  %v3892 = vpop.f32.mrf.mxu0
  %v3893 = vpop.f32.mrf.mxu0
  %3894 = vmatmul.bf16.gmra.mxu0 %v3312
  %v3895 = vpop.f32.mrf.mxu0
  %v3896 = vadd.f32 0.0, %v3895
  %v3897 = vpop.f32.mrf.mxu0
  %v3898 = vadd.f32 0.0, %v3897
  %3899 = vmatmul.bf16.gmra.mxu0 %v3313
  %v3900 = vpop.f32.mrf.mxu0
  %v3901 = vadd.f32 0.0, %v3900
  %v3902 = vpop.f32.mrf.mxu0
  %3903 = vmatmul.bf16.gmra.mxu0 %v3314
  %v3904 = vpop.f32.mrf.mxu0
  %v3905 = vpop.f32.mrf.mxu0
  %3906 = vmatmul.bf16.gmra.mxu0 %v3315
  %v3907 = vpop.f32.mrf.mxu0
  %v3908 = vadd.f32 0.0, %v3907
  %v3909 = vpop.f32.mrf.mxu0
  %v3910 = vadd.f32 0.0, %v3909
  %3911 = vmatmul.bf16.gmra.mxu0 %v3316
  %v3912 = vpop.f32.mrf.mxu0
  %v3913 = vadd.f32 0.0, %v3912
  %v3914 = vpop.f32.mrf.mxu0
  %3915 = vmatmul.bf16.gmra.mxu0 %v3317
  %v3916 = vpop.f32.mrf.mxu0
  %v3917 = vpop.f32.mrf.mxu0
  %3918 = vmatmul.bf16.gmra.mxu0 %v3318
  %v3919 = vpop.f32.mrf.mxu0
  %v3920 = vadd.f32 0.0, %v3919
  %v3921 = vpop.f32.mrf.mxu0
  %v3922 = vadd.f32 0.0, %v3921
  %3923 = vmatmul.bf16.gmra.mxu0 %v3319
  %v3924 = vpop.f32.mrf.mxu0
  %v3925 = vadd.f32 0.0, %v3924
  %v3926 = vpop.f32.mrf.mxu0
  %3927 = vmatmul.bf16.gmra.mxu0 %v3320
  %v3928 = vpop.f32.mrf.mxu0
  %v3929 = vpop.f32.mrf.mxu0
  %3930 = vmatmul.bf16.gmra.mxu0 %v3321
  %v3931 = vpop.f32.mrf.mxu0
  %v3932 = vadd.f32 0.0, %v3931
  %v3933 = vpop.f32.mrf.mxu0
  %v3934 = vadd.f32 0.0, %v3933
  %3935 = vmatmul.bf16.gmra.mxu0 %v3322
  %v3936 = vpop.f32.mrf.mxu0
  %v3937 = vadd.f32 0.0, %v3936
  %v3938 = vpop.f32.mrf.mxu0
  %3939 = vmatmul.bf16.gmra.mxu0 %v3323
  %v3940 = vpop.f32.mrf.mxu0
  %v3941 = vpop.f32.mrf.mxu0
  %3942 = vmatmul.bf16.gmra.mxu0 %v3324
  %v3943 = vpop.f32.mrf.mxu0
  %v3944 = vadd.f32 0.0, %v3943
  %v3945 = vpop.f32.mrf.mxu0
  %v3946 = vadd.f32 0.0, %v3945
  %3947 = vmatmul.bf16.gmra.mxu0 %v3325
  %v3948 = vpop.f32.mrf.mxu0
  %v3949 = vadd.f32 0.0, %v3948
  %v3950 = vpop.f32.mrf.mxu0
  %3951 = vmatmul.bf16.gmra.mxu0 %v3326
  %v3952 = vpop.f32.mrf.mxu0
  %v3953 = vpop.f32.mrf.mxu0
  %3954 = vmatmul.bf16.gmra.mxu0 %v3327
  %v3955 = vpop.f32.mrf.mxu0
  %v3956 = vadd.f32 0.0, %v3955
  %v3957 = vpop.f32.mrf.mxu0
  %v3958 = vadd.f32 0.0, %v3957
  %3959 = vmatmul.bf16.gmra.mxu0 %v3328
  %v3960 = vpop.f32.mrf.mxu0
  %v3961 = vadd.f32 0.0, %v3960
  %v3962 = vpop.f32.mrf.mxu0
  %3963 = vmatmul.bf16.gmra.mxu0 %v3329
  %v3964 = vpop.f32.mrf.mxu0
  %v3965 = vpop.f32.mrf.mxu0
  %3966 = vmatmul.bf16.gmra.mxu0 %v3330
  %v3967 = vpop.f32.mrf.mxu0
  %v3968 = vadd.f32 0.0, %v3967
  %v3969 = vpop.f32.mrf.mxu0
  %v3970 = vadd.f32 0.0, %v3969
  %3971 = vmatmul.bf16.gmra.mxu0 %v3331
  %v3972 = vpop.f32.mrf.mxu0
  %v3973 = vadd.f32 0.0, %v3972
  %v3974 = vpop.f32.mrf.mxu0
  %3975 = vdwg.mxu0
  %3976 = vmatpush.bf16.msra.mxu0 %v3523
  %3977 = vmatpush.bf16.msra.mxu0 %v3518
  %3978 = vmatpush.bf16.msra.mxu0 %v3513
  %3979 = vmatpush.bf16.msra.mxu0 %v3508
  %3980 = vmatpush.bf16.msra.mxu0 %v3503
  %3981 = vmatpush.bf16.msra.mxu0 %v3498
  %3982 = vmatpush.bf16.msra.mxu0 %v3493
  %3983 = vmatpush.bf16.msra.mxu0 %v3488
  %3984 = vmatmul.bf16.gmra.mxu0 %v3308
  %v3985 = vpop.f32.mrf.mxu0
  %v3986 = vpop.f32.mrf.mxu0
  %3987 = vmatmul.bf16.gmra.mxu0 %v3309
  %v3988 = vpop.f32.mrf.mxu0
  %v3989 = vadd.f32 0.0, %v3988
  %v3990 = vpop.f32.mrf.mxu0
  %v3991 = vadd.f32 0.0, %v3990
  %3992 = vmatmul.bf16.gmra.mxu0 %v3310
  %v3993 = vpop.f32.mrf.mxu0
  %v3994 = vadd.f32 0.0, %v3993
  %v3995 = vpop.f32.mrf.mxu0
  %3996 = vmatmul.bf16.gmra.mxu0 %v3311
  %v3997 = vpop.f32.mrf.mxu0
  %v3998 = vpop.f32.mrf.mxu0
  %3999 = vmatmul.bf16.gmra.mxu0 %v3312
  %v4000 = vpop.f32.mrf.mxu0
  %v4001 = vadd.f32 0.0, %v4000
  %v4002 = vpop.f32.mrf.mxu0
  %v4003 = vadd.f32 0.0, %v4002
  %4004 = vmatmul.bf16.gmra.mxu0 %v3313
  %v4005 = vpop.f32.mrf.mxu0
  %v4006 = vadd.f32 0.0, %v4005
  %v4007 = vpop.f32.mrf.mxu0
  %4008 = vmatmul.bf16.gmra.mxu0 %v3314
  %v4009 = vpop.f32.mrf.mxu0
  %v4010 = vpop.f32.mrf.mxu0
  %4011 = vmatmul.bf16.gmra.mxu0 %v3315
  %v4012 = vpop.f32.mrf.mxu0
  %v4013 = vadd.f32 0.0, %v4012
  %v4014 = vpop.f32.mrf.mxu0
  %v4015 = vadd.f32 0.0, %v4014
  %4016 = vmatmul.bf16.gmra.mxu0 %v3316
  %v4017 = vpop.f32.mrf.mxu0
  %v4018 = vadd.f32 0.0, %v4017
  %v4019 = vpop.f32.mrf.mxu0
  %4020 = vmatmul.bf16.gmra.mxu0 %v3317
  %v4021 = vpop.f32.mrf.mxu0
  %v4022 = vpop.f32.mrf.mxu0
  %4023 = vmatmul.bf16.gmra.mxu0 %v3318
  %v4024 = vpop.f32.mrf.mxu0
  %v4025 = vadd.f32 0.0, %v4024
  %v4026 = vpop.f32.mrf.mxu0
  %v4027 = vadd.f32 0.0, %v4026
  %4028 = vmatmul.bf16.gmra.mxu0 %v3319
  %v4029 = vpop.f32.mrf.mxu0
  %v4030 = vadd.f32 0.0, %v4029
  %v4031 = vpop.f32.mrf.mxu0
  %4032 = vmatmul.bf16.gmra.mxu0 %v3320
  %v4033 = vpop.f32.mrf.mxu0
  %v4034 = vpop.f32.mrf.mxu0
  %4035 = vmatmul.bf16.gmra.mxu0 %v3321
  %v4036 = vpop.f32.mrf.mxu0
  %v4037 = vadd.f32 0.0, %v4036
  %v4038 = vpop.f32.mrf.mxu0
  %v4039 = vadd.f32 0.0, %v4038
  %4040 = vmatmul.bf16.gmra.mxu0 %v3322
  %v4041 = vpop.f32.mrf.mxu0
  %v4042 = vadd.f32 0.0, %v4041
  %v4043 = vpop.f32.mrf.mxu0
  %4044 = vmatmul.bf16.gmra.mxu0 %v3323
  %v4045 = vpop.f32.mrf.mxu0
  %v4046 = vpop.f32.mrf.mxu0
  %4047 = vmatmul.bf16.gmra.mxu0 %v3324
  %v4048 = vpop.f32.mrf.mxu0
  %v4049 = vadd.f32 0.0, %v4048
  %v4050 = vpop.f32.mrf.mxu0
  %v4051 = vadd.f32 0.0, %v4050
  %4052 = vmatmul.bf16.gmra.mxu0 %v3325
  %v4053 = vpop.f32.mrf.mxu0
  %v4054 = vadd.f32 0.0, %v4053
  %v4055 = vpop.f32.mrf.mxu0
  %4056 = vmatmul.bf16.gmra.mxu0 %v3326
  %v4057 = vpop.f32.mrf.mxu0
  %v4058 = vpop.f32.mrf.mxu0
  %4059 = vmatmul.bf16.gmra.mxu0 %v3327
  %v4060 = vpop.f32.mrf.mxu0
  %v4061 = vadd.f32 0.0, %v4060
  %v4062 = vpop.f32.mrf.mxu0
  %v4063 = vadd.f32 0.0, %v4062
  %4064 = vmatmul.bf16.gmra.mxu0 %v3328
  %v4065 = vpop.f32.mrf.mxu0
  %v4066 = vadd.f32 0.0, %v4065
  %v4067 = vpop.f32.mrf.mxu0
  %4068 = vmatmul.bf16.gmra.mxu0 %v3329
  %v4069 = vpop.f32.mrf.mxu0
  %v4070 = vpop.f32.mrf.mxu0
  %4071 = vmatmul.bf16.gmra.mxu0 %v3330
  %v4072 = vpop.f32.mrf.mxu0
  %v4073 = vadd.f32 0.0, %v4072
  %v4074 = vpop.f32.mrf.mxu0
  %v4075 = vadd.f32 0.0, %v4074
  %4076 = vmatmul.bf16.gmra.mxu0 %v3331
  %v4077 = vpop.f32.mrf.mxu0
  %v4078 = vadd.f32 0.0, %v4077
  %v4079 = vpop.f32.mrf.mxu0
  %4080 = vdwg.mxu0
  %v4105 = vrot.slane %v3680, 2
  %v4106 = vrot.slane %v3683, 2
  %v4107 = vsel %vm2434, %v4105, %v4106
  %v4108 = vrot.slane %v3685, 2
  %v4109 = vsel %vm2434, %v4106, %v4108
  %v4110 = vrot.slane %v3692, 2
  %v4111 = vrot.slane %v3695, 2
  %v4112 = vsel %vm2434, %v4110, %v4111
  %v4113 = vrot.slane %v3697, 2
  %v4114 = vsel %vm2434, %v4111, %v4113
  %v4115 = vrot.slane %v3704, 2
  %v4116 = vrot.slane %v3707, 2
  %v4117 = vsel %vm2434, %v4115, %v4116
  %v4118 = vrot.slane %v3709, 2
  %v4119 = vsel %vm2434, %v4116, %v4118
  %v4120 = vrot.slane %v3716, 2
  %v4121 = vrot.slane %v3719, 2
  %v4122 = vsel %vm2434, %v4120, %v4121
  %v4123 = vrot.slane %v3721, 2
  %v4124 = vsel %vm2434, %v4121, %v4123
  %v4125 = vrot.slane %v3728, 2
  %v4126 = vrot.slane %v3731, 2
  %v4127 = vsel %vm2434, %v4125, %v4126
  %v4128 = vrot.slane %v3733, 2
  %v4129 = vsel %vm2434, %v4126, %v4128
  %v4130 = vrot.slane %v3740, 2
  %v4131 = vrot.slane %v3743, 2
  %v4132 = vsel %vm2434, %v4130, %v4131
  %v4133 = vrot.slane %v3745, 2
  %v4134 = vsel %vm2434, %v4131, %v4133
  %v4135 = vrot.slane %v3752, 2
  %v4136 = vrot.slane %v3755, 2
  %v4137 = vsel %vm2434, %v4135, %v4136
  %v4138 = vrot.slane %v3757, 2
  %v4139 = vsel %vm2434, %v4136, %v4138
  %v4140 = vrot.slane %v3764, 2
  %v4141 = vrot.slane %v3767, 2
  %v4142 = vsel %vm2434, %v4140, %v4141
  %v4143 = vrot.slane %v3769, 2
  %v4144 = vsel %vm2434, %v4141, %v4143
  %v4169 = vadd.f32 %v3575, %v4107
  %v4170 = vadd.f32 %v3578, %v4109
  %v4171 = vadd.f32 %v3580, %v4108
  %v4172 = vadd.f32 %v3587, %v4112
  %v4173 = vadd.f32 %v3590, %v4114
  %v4174 = vadd.f32 %v3592, %v4113
  %v4175 = vadd.f32 %v3599, %v4117
  %v4176 = vadd.f32 %v3602, %v4119
  %v4177 = vadd.f32 %v3604, %v4118
  %v4178 = vadd.f32 %v3611, %v4122
  %v4179 = vadd.f32 %v3614, %v4124
  %v4180 = vadd.f32 %v3616, %v4123
  %v4181 = vadd.f32 %v3623, %v4127
  %v4182 = vadd.f32 %v3626, %v4129
  %v4183 = vadd.f32 %v3628, %v4128
  %v4184 = vadd.f32 %v3635, %v4132
  %v4185 = vadd.f32 %v3638, %v4134
  %v4186 = vadd.f32 %v3640, %v4133
  %v4187 = vadd.f32 %v3647, %v4137
  %v4188 = vadd.f32 %v3650, %v4139
  %v4189 = vadd.f32 %v3652, %v4138
  %v4190 = vadd.f32 %v3659, %v4142
  %v4191 = vadd.f32 %v3662, %v4144
  %v4192 = vadd.f32 %v3664, %v4143
  %v4217 = vrot.slane %v3884, 2
  %v4218 = vrot.slane %v3886, 2
  %v4219 = vsel %vm2434, %v4217, %v4218
  %v4220 = vrot.slane %v3889, 2
  %v4221 = vsel %vm2434, %v4218, %v4220
  %v4222 = vrot.slane %v3896, 2
  %v4223 = vrot.slane %v3898, 2
  %v4224 = vsel %vm2434, %v4222, %v4223
  %v4225 = vrot.slane %v3901, 2
  %v4226 = vsel %vm2434, %v4223, %v4225
  %v4227 = vrot.slane %v3908, 2
  %v4228 = vrot.slane %v3910, 2
  %v4229 = vsel %vm2434, %v4227, %v4228
  %v4230 = vrot.slane %v3913, 2
  %v4231 = vsel %vm2434, %v4228, %v4230
  %v4232 = vrot.slane %v3920, 2
  %v4233 = vrot.slane %v3922, 2
  %v4234 = vsel %vm2434, %v4232, %v4233
  %v4235 = vrot.slane %v3925, 2
  %v4236 = vsel %vm2434, %v4233, %v4235
  %v4237 = vrot.slane %v3932, 2
  %v4238 = vrot.slane %v3934, 2
  %v4239 = vsel %vm2434, %v4237, %v4238
  %v4240 = vrot.slane %v3937, 2
  %v4241 = vsel %vm2434, %v4238, %v4240
  %v4242 = vrot.slane %v3944, 2
  %v4243 = vrot.slane %v3946, 2
  %v4244 = vsel %vm2434, %v4242, %v4243
  %v4245 = vrot.slane %v3949, 2
  %v4246 = vsel %vm2434, %v4243, %v4245
  %v4247 = vrot.slane %v3956, 2
  %v4248 = vrot.slane %v3958, 2
  %v4249 = vsel %vm2434, %v4247, %v4248
  %v4250 = vrot.slane %v3961, 2
  %v4251 = vsel %vm2434, %v4248, %v4250
  %v4252 = vrot.slane %v3968, 2
  %v4253 = vrot.slane %v3970, 2
  %v4254 = vsel %vm2434, %v4252, %v4253
  %v4255 = vrot.slane %v3973, 2
  %v4256 = vsel %vm2434, %v4253, %v4255
  %v4273 = vadd.f32 %v3787, %v4219
  %v4274 = vadd.f32 %v3789, %v4221
  %v4275 = vadd.f32 %v3798, %v4224
  %v4276 = vadd.f32 %v3800, %v4226
  %v4277 = vadd.f32 %v3809, %v4229
  %v4278 = vadd.f32 %v3811, %v4231
  %v4279 = vadd.f32 %v3820, %v4234
  %v4280 = vadd.f32 %v3822, %v4236
  %v4281 = vadd.f32 %v3831, %v4239
  %v4282 = vadd.f32 %v3833, %v4241
  %v4283 = vadd.f32 %v3842, %v4244
  %v4284 = vadd.f32 %v3844, %v4246
  %v4285 = vadd.f32 %v3853, %v4249
  %v4286 = vadd.f32 %v3855, %v4251
  %v4287 = vadd.f32 %v3864, %v4254
  %v4288 = vadd.f32 %v3866, %v4256
  %v4305 = vrot.slane %v4273, 4
  %v4306 = vrot.slane %v4274, 4
  %v4307 = vsel %vm2851, %v4305, %v4306
  %v4308 = vrot.slane %v4275, 4
  %v4309 = vrot.slane %v4276, 4
  %v4310 = vsel %vm2851, %v4308, %v4309
  %v4311 = vrot.slane %v4277, 4
  %v4312 = vrot.slane %v4278, 4
  %v4313 = vsel %vm2851, %v4311, %v4312
  %v4314 = vrot.slane %v4279, 4
  %v4315 = vrot.slane %v4280, 4
  %v4316 = vsel %vm2851, %v4314, %v4315
  %v4317 = vrot.slane %v4281, 4
  %v4318 = vrot.slane %v4282, 4
  %v4319 = vsel %vm2851, %v4317, %v4318
  %v4320 = vrot.slane %v4283, 4
  %v4321 = vrot.slane %v4284, 4
  %v4322 = vsel %vm2851, %v4320, %v4321
  %v4323 = vrot.slane %v4285, 4
  %v4324 = vrot.slane %v4286, 4
  %v4325 = vsel %vm2851, %v4323, %v4324
  %v4326 = vrot.slane %v4287, 4
  %v4327 = vrot.slane %v4288, 4
  %v4328 = vsel %vm2851, %v4326, %v4327
  %v4353 = vadd.f32 %v4169, %v4305
  %v4354 = vadd.f32 %v4170, %v4307
  %v4355 = vadd.f32 %v4171, %v4306
  %v4356 = vadd.f32 %v4172, %v4308
  %v4357 = vadd.f32 %v4173, %v4310
  %v4358 = vadd.f32 %v4174, %v4309
  %v4359 = vadd.f32 %v4175, %v4311
  %v4360 = vadd.f32 %v4176, %v4313
  %v4361 = vadd.f32 %v4177, %v4312
  %v4362 = vadd.f32 %v4178, %v4314
  %v4363 = vadd.f32 %v4179, %v4316
  %v4364 = vadd.f32 %v4180, %v4315
  %v4365 = vadd.f32 %v4181, %v4317
  %v4366 = vadd.f32 %v4182, %v4319
  %v4367 = vadd.f32 %v4183, %v4318
  %v4368 = vadd.f32 %v4184, %v4320
  %v4369 = vadd.f32 %v4185, %v4322
  %v4370 = vadd.f32 %v4186, %v4321
  %v4371 = vadd.f32 %v4187, %v4323
  %v4372 = vadd.f32 %v4188, %v4325
  %v4373 = vadd.f32 %v4189, %v4324
  %v4374 = vadd.f32 %v4190, %v4326
  %v4375 = vadd.f32 %v4191, %v4328
  %v4376 = vadd.f32 %v4192, %v4327
  %v4377 = vadd.f32 %v4353, %v3989
  %v4378 = vadd.f32 %v4354, %v3991
  %v4379 = vadd.f32 %v4355, %v3994
  %v4380 = vadd.f32 %v4356, %v4001
  %v4381 = vadd.f32 %v4357, %v4003
  %v4382 = vadd.f32 %v4358, %v4006
  %v4383 = vadd.f32 %v4359, %v4013
  %v4384 = vadd.f32 %v4360, %v4015
  %v4385 = vadd.f32 %v4361, %v4018
  %v4386 = vadd.f32 %v4362, %v4025
  %v4387 = vadd.f32 %v4363, %v4027
  %v4388 = vadd.f32 %v4364, %v4030
  %v4389 = vadd.f32 %v4365, %v4037
  %v4390 = vadd.f32 %v4366, %v4039
  %v4391 = vadd.f32 %v4367, %v4042
  %v4392 = vadd.f32 %v4368, %v4049
  %v4393 = vadd.f32 %v4369, %v4051
  %v4394 = vadd.f32 %v4370, %v4054
  %v4395 = vadd.f32 %v4371, %v4061
  %v4396 = vadd.f32 %v4372, %v4063
  %v4397 = vadd.f32 %v4373, %v4066
  %v4398 = vadd.f32 %v4374, %v4073
  %v4399 = vadd.f32 %v4375, %v4075
  %v4400 = vadd.f32 %v4376, %v4078
  %v4401 = vmax.f32 %v4377, 0.0
  %v4402 = vmax.f32 %v4378, 0.0
  %v4403 = vmax.f32 %v4379, 0.0
  %v4404 = vmax.f32 %v4380, 0.0
  %v4405 = vmax.f32 %v4381, 0.0
  %v4406 = vmax.f32 %v4382, 0.0
  %v4407 = vmax.f32 %v4383, 0.0
  %v4408 = vmax.f32 %v4384, 0.0
  %v4409 = vmax.f32 %v4385, 0.0
  %v4410 = vmax.f32 %v4386, 0.0
  %v4411 = vmax.f32 %v4387, 0.0
  %v4412 = vmax.f32 %v4388, 0.0
  %v4413 = vmax.f32 %v4389, 0.0
  %v4414 = vmax.f32 %v4390, 0.0
  %v4415 = vmax.f32 %v4391, 0.0
  %v4416 = vmax.f32 %v4392, 0.0
  %v4417 = vmax.f32 %v4393, 0.0
  %v4418 = vmax.f32 %v4394, 0.0
  %v4419 = vmax.f32 %v4395, 0.0
  %v4420 = vmax.f32 %v4396, 0.0
  %v4421 = vmax.f32 %v4397, 0.0
  %v4422 = vmax.f32 %v4398, 0.0
  %v4423 = vmax.f32 %v4399, 0.0
  %v4424 = vmax.f32 %v4400, 0.0
  %vm4425 = vcmask 1047556
  %v4426 = vsel %vm4425, %v4401, -inf
  %v4427 = vmax.f32 %v4426, %v4402
  %v4428 = vsel %vm2851, %v4403, -inf
  %v4429 = vmax.f32 %v4427, %v4428
  %v4430 = vrot.slane %v4429, 4
  %v4431 = vmax.f32 %v4429, %v4430
  %v4432 = vrot.slane %v4431, 2
  %v4433 = vmax.f32 %v4431, %v4432
  %v4434 = vrot.slane %v4433, 1
  %v4435 = vmax.f32 %v4433, %v4434
  %v4436 = vsel %vm4425, %v4404, -inf
  %v4437 = vmax.f32 %v4436, %v4405
  %v4438 = vsel %vm2851, %v4406, -inf
  %v4439 = vmax.f32 %v4437, %v4438
  %v4440 = vrot.slane %v4439, 4
  %v4441 = vmax.f32 %v4439, %v4440
  %v4442 = vrot.slane %v4441, 2
  %v4443 = vmax.f32 %v4441, %v4442
  %v4444 = vrot.slane %v4443, 1
  %v4445 = vmax.f32 %v4443, %v4444
  %v4446 = vsel %vm4425, %v4407, -inf
  %v4447 = vmax.f32 %v4446, %v4408
  %v4448 = vsel %vm2851, %v4409, -inf
  %v4449 = vmax.f32 %v4447, %v4448
  %v4450 = vrot.slane %v4449, 4
  %v4451 = vmax.f32 %v4449, %v4450
  %v4452 = vrot.slane %v4451, 2
  %v4453 = vmax.f32 %v4451, %v4452
  %v4454 = vrot.slane %v4453, 1
  %v4455 = vmax.f32 %v4453, %v4454
  %v4456 = vsel %vm4425, %v4410, -inf
  %v4457 = vmax.f32 %v4456, %v4411
  %v4458 = vsel %vm2851, %v4412, -inf
  %v4459 = vmax.f32 %v4457, %v4458
  %v4460 = vrot.slane %v4459, 4
  %v4461 = vmax.f32 %v4459, %v4460
  %v4462 = vrot.slane %v4461, 2
  %v4463 = vmax.f32 %v4461, %v4462
  %v4464 = vrot.slane %v4463, 1
  %v4465 = vmax.f32 %v4463, %v4464
  %v4466 = vsel %vm4425, %v4413, -inf
  %v4467 = vmax.f32 %v4466, %v4414
  %v4468 = vsel %vm2851, %v4415, -inf
  %v4469 = vmax.f32 %v4467, %v4468
  %v4470 = vrot.slane %v4469, 4
  %v4471 = vmax.f32 %v4469, %v4470
  %v4472 = vrot.slane %v4471, 2
  %v4473 = vmax.f32 %v4471, %v4472
  %v4474 = vrot.slane %v4473, 1
  %v4475 = vmax.f32 %v4473, %v4474
  %v4476 = vsel %vm4425, %v4416, -inf
  %v4477 = vmax.f32 %v4476, %v4417
  %v4478 = vsel %vm2851, %v4418, -inf
  %v4479 = vmax.f32 %v4477, %v4478
  %v4480 = vrot.slane %v4479, 4
  %v4481 = vmax.f32 %v4479, %v4480
  %v4482 = vrot.slane %v4481, 2
  %v4483 = vmax.f32 %v4481, %v4482
  %v4484 = vrot.slane %v4483, 1
  %v4485 = vmax.f32 %v4483, %v4484
  %v4486 = vsel %vm4425, %v4419, -inf
  %v4487 = vmax.f32 %v4486, %v4420
  %v4488 = vsel %vm2851, %v4421, -inf
  %v4489 = vmax.f32 %v4487, %v4488
  %v4490 = vrot.slane %v4489, 4
  %v4491 = vmax.f32 %v4489, %v4490
  %v4492 = vrot.slane %v4491, 2
  %v4493 = vmax.f32 %v4491, %v4492
  %v4494 = vrot.slane %v4493, 1
  %v4495 = vmax.f32 %v4493, %v4494
  %v4496 = vsel %vm4425, %v4422, -inf
  %v4497 = vmax.f32 %v4496, %v4423
  %v4498 = vsel %vm2851, %v4424, -inf
  %v4499 = vmax.f32 %v4497, %v4498
  %v4500 = vrot.slane %v4499, 4
  %v4501 = vmax.f32 %v4499, %v4500
  %v4502 = vrot.slane %v4501, 2
  %v4503 = vmax.f32 %v4501, %v4502
  %v4504 = vrot.slane %v4503, 1
  %v4505 = vmax.f32 %v4503, %v4504
  %v4506 = vld [vmem:[%s3] sm:$0xff]
  %v4507 = vld [vmem:[%s3 + $0x8] sm:$0xff]
  %v4508 = vld [vmem:[%s3 + $0x10] sm:$0xff]
  %v4509 = vld [vmem:[%s3 + $0x18] sm:$0xff]
  %v4510 = vld [vmem:[%s3 + $0x20] sm:$0xff]
  %v4511 = vld [vmem:[%s3 + $0x28] sm:$0xff]
  %v4512 = vld [vmem:[%s3 + $0x30] sm:$0xff]
  %v4513 = vld [vmem:[%s3 + $0x38] sm:$0xff]
  %v4514 = vld [vmem:[%s3 + $0x40] sm:$0xff]
  %v4515 = vld [vmem:[%s3 + $0x48] sm:$0xff]
  %v4516 = vld [vmem:[%s3 + $0x50] sm:$0xff]
  %v4517 = vld [vmem:[%s3 + $0x58] sm:$0xff]
  %v4518 = vld [vmem:[%s3 + $0x60] sm:$0xff]
  %v4519 = vld [vmem:[%s3 + $0x68] sm:$0xff]
  %v4520 = vld [vmem:[%s3 + $0x70] sm:$0xff]
  %v4521 = vld [vmem:[%s3 + $0x78] sm:$0xff]
  %v4522 = vld [vmem:[%s4] sm:$0x1]
  %v4524 = vperm.slane %v4522, 0
  %vm4534 = vcmask 1041409
  %v4535 = vsel %vm4534, %v4445, %v4435
  %vm4536 = vcmask 1042434
  %v4537 = vsel %vm4536, %v4455, %v4535
  %vm4538 = vcmask 1043459
  %v4539 = vsel %vm4538, %v4465, %v4537
  %vm4540 = vcmask 1044484
  %v4541 = vsel %vm4540, %v4475, %v4539
  %vm4542 = vcmask 1045509
  %v4543 = vsel %vm4542, %v4485, %v4541
  %vm4544 = vcmask 1046534
  %v4545 = vsel %vm4544, %v4495, %v4543
  %vm4546 = vcmask 1047559
  %v4547 = vsel %vm4546, %v4505, %v4545
  %4549 = vmatpush.msra.mxu0 %v4521
  %4550 = vmatpush.msra.mxu0 %v4520
  %4551 = vmatpush.msra.mxu0 %v4519
  %4552 = vmatpush.msra.mxu0 %v4518
  %4553 = vmatpush.msra.mxu0 %v4517
  %4554 = vmatpush.msra.mxu0 %v4516
  %4555 = vmatpush.msra.mxu0 %v4515
  %4556 = vmatpush.msra.mxu0 %v4514
  %4557 = vmatpush.msra.mxu0 %v4513
  %4558 = vmatpush.msra.mxu0 %v4512
  %4559 = vmatpush.msra.mxu0 %v4511
  %4560 = vmatpush.msra.mxu0 %v4510
  %4561 = vmatpush.msra.mxu0 %v4509
  %4562 = vmatpush.msra.mxu0 %v4508
  %4563 = vmatpush.msra.mxu0 %v4507
  %4564 = vmatpush.msra.mxu0 %v4506
  %4565 = vmatmul.f32.gmra.mxu0 %v4547
  %v4566 = vpop.f32.mrf.mxu0
  %v4567 = vadd.f32 %v4524, %v4566
  %4568 = vdwg.mxu0
  %4569 = vst [vmem:[%s5] sm:$0xff] %v4567
  // Predicated region
  $region22: #{net_forward.1} parent=0 // pred_check
    _
  $region23: #{net_forward.1} parent=0 // pred_check_branch
    %4571 = sbr.rel (0) target = $region25
  $region24: #{net_forward.1} parent=0 // pred_region
    _
  $region25: #{net_forward.1} parent=0 // pred_fallthru
    _
  // Predicated region
  $region26: #{net_forward.1} parent=0 // pred_check
    _
  $region27: #{net_forward.1} parent=0 // pred_check_branch
    %4573 = sbr.rel (0) target = $region29
  $region28: #{net_forward.1} parent=0 // pred_region
    _
  $region29: #{net_forward.1} parent=0 // pred_fallthru
    _

</llo_original>
